<compile_context>
chip_gen: v7x
topology: tpu7x:2x2x1
jax: 0.10.0
libtpu: 0.0.40
codegen_flags: <defaults>
</compile_context>

<pallas_src>
import functools

import jax
import jax.numpy as jnp
from jax.experimental import pallas as pl
from jax.experimental.pallas import tpu as pltpu


def rnnrbm_kernel(vis_ref, w_ref, wT_ref, wuu_ref, wuv_ref, wuh_ref, wvu_ref,
                  bv_ref, bh_ref, bu_ref, u0_ref, noise_h_ref, noise_v_ref,
                  cost_ref, mae_ref,
                  u_seq_ref,
                  *, num_gibbs):
    T, V = vis_ref.shape
    H = w_ref.shape[1]
    n_steps = T - 1

    # ---------- phase 1: serial RNN recurrence -------------------------------
    # u_0 = u0 ; u_i = tanh(visible[i] @ wvu + u_{i-1} @ wuu + bu), i=1..T-2.
    # Timestep t = i+1 uses u_i as u_{t-1}.
    wuu = wuu_ref[...]                                    # (RH, RH)
    bu = bu_ref[...]                                      # (1, RH)

    # Hoisted off the latency chain: batched visible @ wvu + bu for all steps.
    if n_steps > 1:
        v_mid = vis_ref[1:n_steps, :]                     # (n_steps-1, V)
        vu_all = v_mid[:, 0:1] * wvu_ref[0:1, :]          # VPU broadcast-FMAs
        for k in range(1, V):
            vu_all = vu_all + v_mid[:, k:k + 1] * wvu_ref[k:k + 1, :]
        vu_all = vu_all + bu                              # (n_steps-1, RH)

    u = u0_ref[...]                                       # (1, RH)
    u_seq_ref[0:1, :] = u
    for i in range(1, n_steps):                           # short static unroll
        u = jnp.tanh(jnp.dot(u, wuu, preferred_element_type=jnp.float32)
                     + vu_all[i - 1:i, :])
        u_seq_ref[i:i + 1, :] = u

    u_seq = u_seq_ref[...]                                # (n_steps, RH)

    # Dynamic biases for all timesteps at once (RH contraction on MXU).
    bh_t = jnp.dot(u_seq, wuh_ref[...],
                   preferred_element_type=jnp.float32) + bh_ref[...]   # (n_steps, H)
    bv_t = jnp.dot(u_seq, wuv_ref[...],
                   preferred_element_type=jnp.float32) + bv_ref[...]   # (n_steps, V)

    # ---------- reconstruction cross-entropy (matches the torch 1e-6 form) ---
    v_tgt = vis_ref[1:T, :]                               # visible[t], (n_steps, V)
    y_t = jax.nn.sigmoid(bv_t)
    ce = (-v_tgt * jnp.log(1e-6 + y_t)
          - (1.0 - v_tgt) * jnp.log(1e-6 + 1.0 - y_t))    # (n_steps, V)
    total = jnp.sum(jnp.sum(ce, axis=1, keepdims=True), axis=0, keepdims=True)
    cost_ref[...] = total * (1.0 / float(T))              # total_cost /= time_steps

    # ---------- phase 2: batched Gibbs chain, no PRNG / no sigmoids ----------
    w_rows = [w_ref[k:k + 1, :] for k in range(V)]        # hoisted (1, H) rows
    wT = wT_ref[...]                                      # (H, V), pre-transposed

    v = vis_ref[0:n_steps, :]                             # v_{t-1} rows, (n_steps, V)
    for g in range(num_gibbs):                            # static unroll
        nh = noise_h_ref[g]                               # (n_steps, H) logistic noise
        nv = noise_v_ref[g]                               # (n_steps, V) logistic noise

        # Hidden pre-activation: (n_steps,V)@(V,H) with tiny V -> VPU FMAs.
        h_pre = v[:, 0:1] * w_rows[0]
        for k in range(1, V):
            h_pre = h_pre + v[:, k:k + 1] * w_rows[k]
        # sigmoid(h_pre+bh_t) > u  <=>  h_pre+bh_t > logit(u) == nh
        h_samp = jnp.where(h_pre + bh_t > nh, 1.0, 0.0)

        # Visible pre-activation: H contraction on MXU against stationary wT.
        v_pre = jnp.dot(h_samp, wT, preferred_element_type=jnp.float32)
        v = jnp.where(v_pre + bv_t > nv, 1.0, 0.0)

    # ---------- per-timestep mean-abs-error, one-shot, no transpose ----------
    abs_diff = jnp.abs(v_tgt - v)                         # (n_steps, V)
    mae_ref[...] = jnp.sum(abs_diff, axis=1, keepdims=True) * (1.0 / float(V))


def rnnrbm_forward(visible, params, seed=0, num_gibbs=20):
    visible = jnp.asarray(visible, jnp.float32)
    T, V = visible.shape
    H = params["w"].shape[1]
    RH = params["wuu"].shape[0]
    n_steps = T - 1

    # Pre-draw all Gibbs randomness and convert to logistic noise up front
    # (off the serial chain; ~ num_gibbs * n_steps * (H+V) * 4B — tiny at T=8).
    key = jax.random.PRNGKey(seed)
    kh, kv = jax.random.split(key)
    eps = 1e-7
    u_h = jax.random.uniform(kh, (num_gibbs, n_steps, H), jnp.float32, eps, 1.0 - eps)
    u_v = jax.random.uniform(kv, (num_gibbs, n_steps, V), jnp.float32, eps, 1.0 - eps)
    noise_h = jnp.log(u_h) - jnp.log1p(-u_h)              # logit(u)
    noise_v = jnp.log(u_v) - jnp.log1p(-u_v)

    kernel = functools.partial(rnnrbm_kernel, num_gibbs=num_gibbs)

    def vmem():
        return pl.BlockSpec(memory_space=pltpu.MemorySpace.VMEM)

    cost, mae = pl.pallas_call(
        kernel,
        out_shape=(
            jax.ShapeDtypeStruct((1, 1), jnp.float32),
            jax.ShapeDtypeStruct((n_steps, 1), jnp.float32),
        ),
        in_specs=[vmem() for _ in range(13)],
        out_specs=(vmem(), vmem()),
        scratch_shapes=[pltpu.VMEM((n_steps, RH), jnp.float32)],  # u_0..u_{T-2}
    )(visible,
      params["w"], jnp.transpose(params["w"]),
      params["wuu"], params["wuv"], params["wuh"], params["wvu"],
      params["bv"], params["bh"], params["bu"], params["u0"],
      noise_h, noise_v)

    return cost[0, 0], mae[:, 0]


def init_params(key, visible_dim=2, hidden_dim=50, rnn_hidden_dim=50, scale=0.1):
    ks = jax.random.split(key, 5)
    V, H, RH = visible_dim, hidden_dim, rnn_hidden_dim
    return {
        "w":   scale * jax.random.normal(ks[0], (V, H), jnp.float32),
        "wuu": scale * jax.random.normal(ks[1], (RH, RH), jnp.float32),
        "wuv": scale * jax.random.normal(ks[2], (RH, V), jnp.float32),
        "wuh": scale * jax.random.normal(ks[3], (RH, H), jnp.float32),
        "wvu": scale * jax.random.normal(ks[4], (V, RH), jnp.float32),
        "bv":  jnp.zeros((1, V), jnp.float32),
        "bh":  jnp.zeros((1, H), jnp.float32),
        "bu":  jnp.zeros((1, RH), jnp.float32),
        "u0":  jnp.zeros((1, RH), jnp.float32),
    }


if __name__ == "__main__":
    key = jax.random.PRNGKey(0)
    pkey, vkey = jax.random.split(key)

    # module defaults: visible_dim=2, hidden_dim=50, rnn_hidden_dim=50; seq T=8
    V, H, RH, T = 2, 50, 50, 8
    params = init_params(pkey, V, H, RH)
    visible = jax.random.bernoulli(vkey, 0.5, (T, V)).astype(jnp.float32)

    total_cost, mae = rnnrbm_forward(visible, params, seed=42, num_gibbs=20)
    jax.block_until_ready((total_cost, mae))

    assert total_cost.shape == () and mae.shape == (T - 1,)
    assert bool(jnp.isfinite(total_cost)) and bool(jnp.all(jnp.isfinite(mae)))
    print("KERNEL_OK")
</pallas_src>

<mosaic_0001>
module attributes {stable_mosaic.version = 11 : i64} {
  func.func @rnnrbm_kernel(%arg0: memref<8x2xf32, #tpu.memory_space<vmem>>, %arg1: memref<2x50xf32, #tpu.memory_space<vmem>>, %arg2: memref<50x2xf32, #tpu.memory_space<vmem>>, %arg3: memref<50x50xf32, #tpu.memory_space<vmem>>, %arg4: memref<50x2xf32, #tpu.memory_space<vmem>>, %arg5: memref<50x50xf32, #tpu.memory_space<vmem>>, %arg6: memref<2x50xf32, #tpu.memory_space<vmem>>, %arg7: memref<1x2xf32, #tpu.memory_space<vmem>>, %arg8: memref<1x50xf32, #tpu.memory_space<vmem>>, %arg9: memref<1x50xf32, #tpu.memory_space<vmem>>, %arg10: memref<1x50xf32, #tpu.memory_space<vmem>>, %arg11: memref<20x7x50xf32, #tpu.memory_space<vmem>>, %arg12: memref<20x7x2xf32, #tpu.memory_space<vmem>>, %arg13: memref<1x1xf32, #tpu.memory_space<vmem>>, %arg14: memref<7x1xf32, #tpu.memory_space<vmem>>, %arg15: memref<7x50xf32, #tpu.memory_space<vmem>>) attributes {dimension_semantics = [], scalar_prefetch = 0 : i64, scratch_operands = 1 : i64, tpu.core_type = #tpu.core_type<tc>} {
    %c0 = arith.constant 0 : index
    %c0_0 = arith.constant 0 : index
    %0 = vector.load %arg3[%c0, %c0_0] : memref<50x50xf32, #tpu.memory_space<vmem>>, vector<50x50xf32>
    %c0_1 = arith.constant 0 : index
    %c0_2 = arith.constant 0 : index
    %1 = vector.load %arg9[%c0_1, %c0_2] : memref<1x50xf32, #tpu.memory_space<vmem>>, vector<1x50xf32>
    %c1 = arith.constant 1 : index
    %c0_3 = arith.constant 0 : index
    %2 = vector.load %arg0[%c1, %c0_3] : memref<8x2xf32, #tpu.memory_space<vmem>>, vector<6x2xf32>
    %3 = vector.extract_strided_slice %2 {offsets = [0, 0], sizes = [6, 1], strides = [1, 1]} : vector<6x2xf32> to vector<6x1xf32>
    %c0_4 = arith.constant 0 : index
    %c0_5 = arith.constant 0 : index
    %4 = vector.load %arg6[%c0_4, %c0_5] : memref<2x50xf32, #tpu.memory_space<vmem>>, vector<1x50xf32>
    %5 = vector.broadcast %3 : vector<6x1xf32> to vector<6x50xf32>
    %6 = vector.broadcast %4 : vector<1x50xf32> to vector<6x50xf32>
    %7 = arith.mulf %5, %6 : vector<6x50xf32>
    %8 = vector.extract_strided_slice %2 {offsets = [0, 1], sizes = [6, 1], strides = [1, 1]} : vector<6x2xf32> to vector<6x1xf32>
    %c1_6 = arith.constant 1 : index
    %c0_7 = arith.constant 0 : index
    %9 = vector.load %arg6[%c1_6, %c0_7] : memref<2x50xf32, #tpu.memory_space<vmem>>, vector<1x50xf32>
    %10 = vector.broadcast %8 : vector<6x1xf32> to vector<6x50xf32>
    %11 = vector.broadcast %9 : vector<1x50xf32> to vector<6x50xf32>
    %12 = arith.mulf %10, %11 : vector<6x50xf32>
    %13 = arith.addf %7, %12 : vector<6x50xf32>
    %14 = vector.broadcast %1 : vector<1x50xf32> to vector<6x50xf32>
    %15 = arith.addf %13, %14 : vector<6x50xf32>
    %c0_8 = arith.constant 0 : index
    %c0_9 = arith.constant 0 : index
    %16 = vector.load %arg10[%c0_8, %c0_9] : memref<1x50xf32, #tpu.memory_space<vmem>>, vector<1x50xf32>
    %c0_10 = arith.constant 0 : index
    %c0_11 = arith.constant 0 : index
    %17 = vector.load %arg15[%c0_10, %c0_11] : memref<7x50xf32, #tpu.memory_space<vmem>>, vector<1x50xf32>
    tpu.vector_store %arg15[%c0_10, %c0_11], %16 {strides = array<i32>} : memref<7x50xf32, #tpu.memory_space<vmem>>, vector<1x50xf32>,
    %cst = arith.constant dense<0.000000e+00> : vector<1x50xf32>
    %18 = tpu.matmul %16, %0, %cst {dimension_numbers = #tpu.dot_dimension_numbers<[1], [0], [0], [1], [0, 0, 1, 1], [], []>} : vector<1x50xf32>, vector<50x50xf32>, vector<1x50xf32> -> vector<1x50xf32>
    %19 = vector.extract_strided_slice %15 {offsets = [0, 0], sizes = [1, 50], strides = [1, 1]} : vector<6x50xf32> to vector<1x50xf32>
    %20 = arith.addf %18, %19 : vector<1x50xf32>
    %21 = math.tanh %20 : vector<1x50xf32>
    %c1_12 = arith.constant 1 : index
    %c0_13 = arith.constant 0 : index
    %22 = vector.load %arg15[%c1_12, %c0_13] : memref<7x50xf32, #tpu.memory_space<vmem>>, vector<1x50xf32>
    tpu.vector_store %arg15[%c1_12, %c0_13], %21 {strides = array<i32>} : memref<7x50xf32, #tpu.memory_space<vmem>>, vector<1x50xf32>,
    %cst_14 = arith.constant dense<0.000000e+00> : vector<1x50xf32>
    %23 = tpu.matmul %21, %0, %cst_14 {dimension_numbers = #tpu.dot_dimension_numbers<[1], [0], [0], [1], [0, 0, 1, 1], [], []>} : vector<1x50xf32>, vector<50x50xf32>, vector<1x50xf32> -> vector<1x50xf32>
    %24 = vector.extract_strided_slice %15 {offsets = [1, 0], sizes = [1, 50], strides = [1, 1]} : vector<6x50xf32> to vector<1x50xf32>
    %25 = arith.addf %23, %24 : vector<1x50xf32>
    %26 = math.tanh %25 : vector<1x50xf32>
    %c2 = arith.constant 2 : index
    %c0_15 = arith.constant 0 : index
    %27 = vector.load %arg15[%c2, %c0_15] : memref<7x50xf32, #tpu.memory_space<vmem>>, vector<1x50xf32>
    tpu.vector_store %arg15[%c2, %c0_15], %26 {strides = array<i32>} : memref<7x50xf32, #tpu.memory_space<vmem>>, vector<1x50xf32>,
    %cst_16 = arith.constant dense<0.000000e+00> : vector<1x50xf32>
    %28 = tpu.matmul %26, %0, %cst_16 {dimension_numbers = #tpu.dot_dimension_numbers<[1], [0], [0], [1], [0, 0, 1, 1], [], []>} : vector<1x50xf32>, vector<50x50xf32>, vector<1x50xf32> -> vector<1x50xf32>
    %29 = vector.extract_strided_slice %15 {offsets = [2, 0], sizes = [1, 50], strides = [1, 1]} : vector<6x50xf32> to vector<1x50xf32>
    %30 = arith.addf %28, %29 : vector<1x50xf32>
    %31 = math.tanh %30 : vector<1x50xf32>
    %c3 = arith.constant 3 : index
    %c0_17 = arith.constant 0 : index
    %32 = vector.load %arg15[%c3, %c0_17] : memref<7x50xf32, #tpu.memory_space<vmem>>, vector<1x50xf32>
    tpu.vector_store %arg15[%c3, %c0_17], %31 {strides = array<i32>} : memref<7x50xf32, #tpu.memory_space<vmem>>, vector<1x50xf32>,
    %cst_18 = arith.constant dense<0.000000e+00> : vector<1x50xf32>
    %33 = tpu.matmul %31, %0, %cst_18 {dimension_numbers = #tpu.dot_dimension_numbers<[1], [0], [0], [1], [0, 0, 1, 1], [], []>} : vector<1x50xf32>, vector<50x50xf32>, vector<1x50xf32> -> vector<1x50xf32>
    %34 = vector.extract_strided_slice %15 {offsets = [3, 0], sizes = [1, 50], strides = [1, 1]} : vector<6x50xf32> to vector<1x50xf32>
    %35 = arith.addf %33, %34 : vector<1x50xf32>
    %36 = math.tanh %35 : vector<1x50xf32>
    %c4 = arith.constant 4 : index
    %c0_19 = arith.constant 0 : index
    %37 = vector.load %arg15[%c4, %c0_19] : memref<7x50xf32, #tpu.memory_space<vmem>>, vector<1x50xf32>
    tpu.vector_store %arg15[%c4, %c0_19], %36 {strides = array<i32>} : memref<7x50xf32, #tpu.memory_space<vmem>>, vector<1x50xf32>,
    %cst_20 = arith.constant dense<0.000000e+00> : vector<1x50xf32>
    %38 = tpu.matmul %36, %0, %cst_20 {dimension_numbers = #tpu.dot_dimension_numbers<[1], [0], [0], [1], [0, 0, 1, 1], [], []>} : vector<1x50xf32>, vector<50x50xf32>, vector<1x50xf32> -> vector<1x50xf32>
    %39 = vector.extract_strided_slice %15 {offsets = [4, 0], sizes = [1, 50], strides = [1, 1]} : vector<6x50xf32> to vector<1x50xf32>
    %40 = arith.addf %38, %39 : vector<1x50xf32>
    %41 = math.tanh %40 : vector<1x50xf32>
    %c5 = arith.constant 5 : index
    %c0_21 = arith.constant 0 : index
    %42 = vector.load %arg15[%c5, %c0_21] : memref<7x50xf32, #tpu.memory_space<vmem>>, vector<1x50xf32>
    tpu.vector_store %arg15[%c5, %c0_21], %41 {strides = array<i32>} : memref<7x50xf32, #tpu.memory_space<vmem>>, vector<1x50xf32>,
    %cst_22 = arith.constant dense<0.000000e+00> : vector<1x50xf32>
    %43 = tpu.matmul %41, %0, %cst_22 {dimension_numbers = #tpu.dot_dimension_numbers<[1], [0], [0], [1], [0, 0, 1, 1], [], []>} : vector<1x50xf32>, vector<50x50xf32>, vector<1x50xf32> -> vector<1x50xf32>
    %44 = vector.extract_strided_slice %15 {offsets = [5, 0], sizes = [1, 50], strides = [1, 1]} : vector<6x50xf32> to vector<1x50xf32>
    %45 = arith.addf %43, %44 : vector<1x50xf32>
    %46 = math.tanh %45 : vector<1x50xf32>
    %c6 = arith.constant 6 : index
    %c0_23 = arith.constant 0 : index
    %47 = vector.load %arg15[%c6, %c0_23] : memref<7x50xf32, #tpu.memory_space<vmem>>, vector<1x50xf32>
    tpu.vector_store %arg15[%c6, %c0_23], %46 {strides = array<i32>} : memref<7x50xf32, #tpu.memory_space<vmem>>, vector<1x50xf32>,
    %c0_24 = arith.constant 0 : index
    %c0_25 = arith.constant 0 : index
    %48 = vector.load %arg15[%c0_24, %c0_25] : memref<7x50xf32, #tpu.memory_space<vmem>>, vector<7x50xf32>
    %c0_26 = arith.constant 0 : index
    %c0_27 = arith.constant 0 : index
    %49 = vector.load %arg5[%c0_26, %c0_27] : memref<50x50xf32, #tpu.memory_space<vmem>>, vector<50x50xf32>
    %cst_28 = arith.constant dense<0.000000e+00> : vector<7x50xf32>
    %50 = tpu.matmul %48, %49, %cst_28 {dimension_numbers = #tpu.dot_dimension_numbers<[1], [0], [0], [1], [0, 0, 1, 1], [], []>} : vector<7x50xf32>, vector<50x50xf32>, vector<7x50xf32> -> vector<7x50xf32>
    %c0_29 = arith.constant 0 : index
    %c0_30 = arith.constant 0 : index
    %51 = vector.load %arg8[%c0_29, %c0_30] : memref<1x50xf32, #tpu.memory_space<vmem>>, vector<1x50xf32>
    %52 = vector.broadcast %51 : vector<1x50xf32> to vector<7x50xf32>
    %53 = arith.addf %50, %52 : vector<7x50xf32>
    %c0_31 = arith.constant 0 : index
    %c0_32 = arith.constant 0 : index
    %54 = vector.load %arg4[%c0_31, %c0_32] : memref<50x2xf32, #tpu.memory_space<vmem>>, vector<50x2xf32>
    %cst_33 = arith.constant dense<0.000000e+00> : vector<7x2xf32>
    %55 = tpu.matmul %48, %54, %cst_33 {dimension_numbers = #tpu.dot_dimension_numbers<[1], [0], [0], [1], [0, 0, 1, 1], [], []>} : vector<7x50xf32>, vector<50x2xf32>, vector<7x2xf32> -> vector<7x2xf32>
    %c0_34 = arith.constant 0 : index
    %c0_35 = arith.constant 0 : index
    %56 = vector.load %arg7[%c0_34, %c0_35] : memref<1x2xf32, #tpu.memory_space<vmem>>, vector<1x2xf32>
    %57 = vector.broadcast %56 : vector<1x2xf32> to vector<7x2xf32>
    %58 = arith.addf %55, %57 : vector<7x2xf32>
    %c1_36 = arith.constant 1 : index
    %c0_37 = arith.constant 0 : index
    %59 = vector.load %arg0[%c1_36, %c0_37] : memref<8x2xf32, #tpu.memory_space<vmem>>, vector<7x2xf32>
    %60 = arith.negf %58 : vector<7x2xf32>
    %61 = math.exp %60 : vector<7x2xf32>
    %cst_38 = arith.constant 1.000000e+00 : f32
    %62 = vector.broadcast %cst_38 : f32 to vector<7x2xf32>
    %63 = arith.addf %62, %61 : vector<7x2xf32>
    %64 = arith.divf %62, %63 : vector<7x2xf32>
    %cst_39 = arith.constant 0.000000e+00 : f32
    %65 = vector.broadcast %cst_39 : f32 to vector<7x2xf32>
    %66 = arith.subf %65, %59 : vector<7x2xf32>
    %cst_40 = arith.constant 9.99999997E-7 : f32
    %67 = vector.broadcast %cst_40 : f32 to vector<7x2xf32>
    %68 = arith.addf %67, %64 : vector<7x2xf32>
    %69 = math.log %68 : vector<7x2xf32>
    %70 = arith.mulf %66, %69 : vector<7x2xf32>
    %cst_41 = arith.constant 1.000000e+00 : f32
    %71 = vector.broadcast %cst_41 : f32 to vector<7x2xf32>
    %72 = arith.subf %71, %59 : vector<7x2xf32>
    %cst_42 = arith.constant 1.00000095 : f32
    %73 = vector.broadcast %cst_42 : f32 to vector<7x2xf32>
    %74 = arith.subf %73, %64 : vector<7x2xf32>
    %75 = math.log %74 : vector<7x2xf32>
    %76 = arith.mulf %72, %75 : vector<7x2xf32>
    %77 = arith.subf %70, %76 : vector<7x2xf32>
    %cst_43 = arith.constant dense<0.000000e+00> : vector<7xf32>
    %78 = vector.multi_reduction <add>, %77, %cst_43 [1] : vector<7x2xf32> to vector<7xf32>
    %79 = vector.shape_cast %78 : vector<7xf32> to vector<7x1xf32>
    %cst_44 = arith.constant dense<0.000000e+00> : vector<1xf32>
    %80 = vector.multi_reduction <add>, %79, %cst_44 [0] : vector<7x1xf32> to vector<1xf32>
    %81 = vector.shape_cast %80 : vector<1xf32> to vector<1x1xf32>
    %cst_45 = arith.constant 1.250000e-01 : f32
    %82 = vector.broadcast %cst_45 : f32 to vector<1x1xf32>
    %83 = arith.mulf %81, %82 : vector<1x1xf32>
    %c0_46 = arith.constant 0 : index
    %c0_47 = arith.constant 0 : index
    %84 = vector.load %arg13[%c0_46, %c0_47] : memref<1x1xf32, #tpu.memory_space<vmem>>, vector<1x1xf32>
    tpu.vector_store %arg13[%c0_46, %c0_47], %83 {strides = array<i32>} : memref<1x1xf32, #tpu.memory_space<vmem>>, vector<1x1xf32>,
    %c0_48 = arith.constant 0 : index
    %c0_49 = arith.constant 0 : index
    %85 = vector.load %arg1[%c0_48, %c0_49] : memref<2x50xf32, #tpu.memory_space<vmem>>, vector<1x50xf32>
    %c1_50 = arith.constant 1 : index
    %c0_51 = arith.constant 0 : index
    %86 = vector.load %arg1[%c1_50, %c0_51] : memref<2x50xf32, #tpu.memory_space<vmem>>, vector<1x50xf32>
    %c0_52 = arith.constant 0 : index
    %c0_53 = arith.constant 0 : index
    %87 = vector.load %arg2[%c0_52, %c0_53] : memref<50x2xf32, #tpu.memory_space<vmem>>, vector<50x2xf32>
    %c0_54 = arith.constant 0 : index
    %c0_55 = arith.constant 0 : index
    %88 = vector.load %arg0[%c0_54, %c0_55] : memref<8x2xf32, #tpu.memory_space<vmem>>, vector<7x2xf32>
    %c0_56 = arith.constant 0 : index
    %c0_57 = arith.constant 0 : index
    %c0_58 = arith.constant 0 : index
    %89 = vector.load %arg11[%c0_56, %c0_57, %c0_58] : memref<20x7x50xf32, #tpu.memory_space<vmem>>, vector<1x7x50xf32>
    %90 = vector.shape_cast %89 : vector<1x7x50xf32> to vector<7x50xf32>
    %c0_59 = arith.constant 0 : index
    %c0_60 = arith.constant 0 : index
    %c0_61 = arith.constant 0 : index
    %91 = vector.load %arg12[%c0_59, %c0_60, %c0_61] : memref<20x7x2xf32, #tpu.memory_space<vmem>>, vector<1x7x2xf32>
    %92 = vector.shape_cast %91 : vector<1x7x2xf32> to vector<7x2xf32>
    %93 = vector.extract_strided_slice %88 {offsets = [0, 0], sizes = [7, 1], strides = [1, 1]} : vector<7x2xf32> to vector<7x1xf32>
    %94 = vector.broadcast %93 : vector<7x1xf32> to vector<7x50xf32>
    %95 = vector.broadcast %85 : vector<1x50xf32> to vector<7x50xf32>
    %96 = arith.mulf %94, %95 : vector<7x50xf32>
    %97 = vector.extract_strided_slice %88 {offsets = [0, 1], sizes = [7, 1], strides = [1, 1]} : vector<7x2xf32> to vector<7x1xf32>
    %98 = vector.broadcast %97 : vector<7x1xf32> to vector<7x50xf32>
    %99 = vector.broadcast %86 : vector<1x50xf32> to vector<7x50xf32>
    %100 = arith.mulf %98, %99 : vector<7x50xf32>
    %101 = arith.addf %96, %100 : vector<7x50xf32>
    %102 = arith.addf %101, %53 : vector<7x50xf32>
    %103 = arith.cmpf ogt, %102, %90 : vector<7x50xf32>
    %cst_62 = arith.constant 1.000000e+00 : f32
    %cst_63 = arith.constant 0.000000e+00 : f32
    %104 = vector.broadcast %cst_62 : f32 to vector<7x50xf32>
    %105 = vector.broadcast %cst_63 : f32 to vector<7x50xf32>
    %106 = arith.select %103, %104, %105 : vector<7x50xi1>, vector<7x50xf32>
    %cst_64 = arith.constant dense<0.000000e+00> : vector<7x2xf32>
    %107 = tpu.matmul %106, %87, %cst_64 {dimension_numbers = #tpu.dot_dimension_numbers<[1], [0], [0], [1], [0, 0, 1, 1], [], []>} : vector<7x50xf32>, vector<50x2xf32>, vector<7x2xf32> -> vector<7x2xf32>
    %108 = arith.addf %107, %58 : vector<7x2xf32>
    %109 = arith.cmpf ogt, %108, %92 : vector<7x2xf32>
    %cst_65 = arith.constant 1.000000e+00 : f32
    %cst_66 = arith.constant 0.000000e+00 : f32
    %110 = vector.broadcast %cst_65 : f32 to vector<7x2xf32>
    %111 = vector.broadcast %cst_66 : f32 to vector<7x2xf32>
    %112 = arith.select %109, %110, %111 : vector<7x2xi1>, vector<7x2xf32>
    %c1_67 = arith.constant 1 : index
    %c0_68 = arith.constant 0 : index
    %c0_69 = arith.constant 0 : index
    %113 = vector.load %arg11[%c1_67, %c0_68, %c0_69] : memref<20x7x50xf32, #tpu.memory_space<vmem>>, vector<1x7x50xf32>
    %114 = vector.shape_cast %113 : vector<1x7x50xf32> to vector<7x50xf32>
    %c1_70 = arith.constant 1 : index
    %c0_71 = arith.constant 0 : index
    %c0_72 = arith.constant 0 : index
    %115 = vector.load %arg12[%c1_70, %c0_71, %c0_72] : memref<20x7x2xf32, #tpu.memory_space<vmem>>, vector<1x7x2xf32>
    %116 = vector.shape_cast %115 : vector<1x7x2xf32> to vector<7x2xf32>
    %117 = vector.extract_strided_slice %112 {offsets = [0, 0], sizes = [7, 1], strides = [1, 1]} : vector<7x2xf32> to vector<7x1xf32>
    %118 = vector.broadcast %117 : vector<7x1xf32> to vector<7x50xf32>
    %119 = vector.broadcast %85 : vector<1x50xf32> to vector<7x50xf32>
    %120 = arith.mulf %118, %119 : vector<7x50xf32>
    %121 = vector.extract_strided_slice %112 {offsets = [0, 1], sizes = [7, 1], strides = [1, 1]} : vector<7x2xf32> to vector<7x1xf32>
    %122 = vector.broadcast %121 : vector<7x1xf32> to vector<7x50xf32>
    %123 = vector.broadcast %86 : vector<1x50xf32> to vector<7x50xf32>
    %124 = arith.mulf %122, %123 : vector<7x50xf32>
    %125 = arith.addf %120, %124 : vector<7x50xf32>
    %126 = arith.addf %125, %53 : vector<7x50xf32>
    %127 = arith.cmpf ogt, %126, %114 : vector<7x50xf32>
    %cst_73 = arith.constant 1.000000e+00 : f32
    %cst_74 = arith.constant 0.000000e+00 : f32
    %128 = vector.broadcast %cst_73 : f32 to vector<7x50xf32>
    %129 = vector.broadcast %cst_74 : f32 to vector<7x50xf32>
    %130 = arith.select %127, %128, %129 : vector<7x50xi1>, vector<7x50xf32>
    %cst_75 = arith.constant dense<0.000000e+00> : vector<7x2xf32>
    %131 = tpu.matmul %130, %87, %cst_75 {dimension_numbers = #tpu.dot_dimension_numbers<[1], [0], [0], [1], [0, 0, 1, 1], [], []>} : vector<7x50xf32>, vector<50x2xf32>, vector<7x2xf32> -> vector<7x2xf32>
    %132 = arith.addf %131, %58 : vector<7x2xf32>
    %133 = arith.cmpf ogt, %132, %116 : vector<7x2xf32>
    %cst_76 = arith.constant 1.000000e+00 : f32
    %cst_77 = arith.constant 0.000000e+00 : f32
    %134 = vector.broadcast %cst_76 : f32 to vector<7x2xf32>
    %135 = vector.broadcast %cst_77 : f32 to vector<7x2xf32>
    %136 = arith.select %133, %134, %135 : vector<7x2xi1>, vector<7x2xf32>
    %c2_78 = arith.constant 2 : index
    %c0_79 = arith.constant 0 : index
    %c0_80 = arith.constant 0 : index
    %137 = vector.load %arg11[%c2_78, %c0_79, %c0_80] : memref<20x7x50xf32, #tpu.memory_space<vmem>>, vector<1x7x50xf32>
    %138 = vector.shape_cast %137 : vector<1x7x50xf32> to vector<7x50xf32>
    %c2_81 = arith.constant 2 : index
    %c0_82 = arith.constant 0 : index
    %c0_83 = arith.constant 0 : index
    %139 = vector.load %arg12[%c2_81, %c0_82, %c0_83] : memref<20x7x2xf32, #tpu.memory_space<vmem>>, vector<1x7x2xf32>
    %140 = vector.shape_cast %139 : vector<1x7x2xf32> to vector<7x2xf32>
    %141 = vector.extract_strided_slice %136 {offsets = [0, 0], sizes = [7, 1], strides = [1, 1]} : vector<7x2xf32> to vector<7x1xf32>
    %142 = vector.broadcast %141 : vector<7x1xf32> to vector<7x50xf32>
    %143 = vector.broadcast %85 : vector<1x50xf32> to vector<7x50xf32>
    %144 = arith.mulf %142, %143 : vector<7x50xf32>
    %145 = vector.extract_strided_slice %136 {offsets = [0, 1], sizes = [7, 1], strides = [1, 1]} : vector<7x2xf32> to vector<7x1xf32>
    %146 = vector.broadcast %145 : vector<7x1xf32> to vector<7x50xf32>
    %147 = vector.broadcast %86 : vector<1x50xf32> to vector<7x50xf32>
    %148 = arith.mulf %146, %147 : vector<7x50xf32>
    %149 = arith.addf %144, %148 : vector<7x50xf32>
    %150 = arith.addf %149, %53 : vector<7x50xf32>
    %151 = arith.cmpf ogt, %150, %138 : vector<7x50xf32>
    %cst_84 = arith.constant 1.000000e+00 : f32
    %cst_85 = arith.constant 0.000000e+00 : f32
    %152 = vector.broadcast %cst_84 : f32 to vector<7x50xf32>
    %153 = vector.broadcast %cst_85 : f32 to vector<7x50xf32>
    %154 = arith.select %151, %152, %153 : vector<7x50xi1>, vector<7x50xf32>
    %cst_86 = arith.constant dense<0.000000e+00> : vector<7x2xf32>
    %155 = tpu.matmul %154, %87, %cst_86 {dimension_numbers = #tpu.dot_dimension_numbers<[1], [0], [0], [1], [0, 0, 1, 1], [], []>} : vector<7x50xf32>, vector<50x2xf32>, vector<7x2xf32> -> vector<7x2xf32>
    %156 = arith.addf %155, %58 : vector<7x2xf32>
    %157 = arith.cmpf ogt, %156, %140 : vector<7x2xf32>
    %cst_87 = arith.constant 1.000000e+00 : f32
    %cst_88 = arith.constant 0.000000e+00 : f32
    %158 = vector.broadcast %cst_87 : f32 to vector<7x2xf32>
    %159 = vector.broadcast %cst_88 : f32 to vector<7x2xf32>
    %160 = arith.select %157, %158, %159 : vector<7x2xi1>, vector<7x2xf32>
    %c3_89 = arith.constant 3 : index
    %c0_90 = arith.constant 0 : index
    %c0_91 = arith.constant 0 : index
    %161 = vector.load %arg11[%c3_89, %c0_90, %c0_91] : memref<20x7x50xf32, #tpu.memory_space<vmem>>, vector<1x7x50xf32>
    %162 = vector.shape_cast %161 : vector<1x7x50xf32> to vector<7x50xf32>
    %c3_92 = arith.constant 3 : index
    %c0_93 = arith.constant 0 : index
    %c0_94 = arith.constant 0 : index
    %163 = vector.load %arg12[%c3_92, %c0_93, %c0_94] : memref<20x7x2xf32, #tpu.memory_space<vmem>>, vector<1x7x2xf32>
    %164 = vector.shape_cast %163 : vector<1x7x2xf32> to vector<7x2xf32>
    %165 = vector.extract_strided_slice %160 {offsets = [0, 0], sizes = [7, 1], strides = [1, 1]} : vector<7x2xf32> to vector<7x1xf32>
    %166 = vector.broadcast %165 : vector<7x1xf32> to vector<7x50xf32>
    %167 = vector.broadcast %85 : vector<1x50xf32> to vector<7x50xf32>
    %168 = arith.mulf %166, %167 : vector<7x50xf32>
    %169 = vector.extract_strided_slice %160 {offsets = [0, 1], sizes = [7, 1], strides = [1, 1]} : vector<7x2xf32> to vector<7x1xf32>
    %170 = vector.broadcast %169 : vector<7x1xf32> to vector<7x50xf32>
    %171 = vector.broadcast %86 : vector<1x50xf32> to vector<7x50xf32>
    %172 = arith.mulf %170, %171 : vector<7x50xf32>
    %173 = arith.addf %168, %172 : vector<7x50xf32>
    %174 = arith.addf %173, %53 : vector<7x50xf32>
    %175 = arith.cmpf ogt, %174, %162 : vector<7x50xf32>
    %cst_95 = arith.constant 1.000000e+00 : f32
    %cst_96 = arith.constant 0.000000e+00 : f32
    %176 = vector.broadcast %cst_95 : f32 to vector<7x50xf32>
    %177 = vector.broadcast %cst_96 : f32 to vector<7x50xf32>
    %178 = arith.select %175, %176, %177 : vector<7x50xi1>, vector<7x50xf32>
    %cst_97 = arith.constant dense<0.000000e+00> : vector<7x2xf32>
    %179 = tpu.matmul %178, %87, %cst_97 {dimension_numbers = #tpu.dot_dimension_numbers<[1], [0], [0], [1], [0, 0, 1, 1], [], []>} : vector<7x50xf32>, vector<50x2xf32>, vector<7x2xf32> -> vector<7x2xf32>
    %180 = arith.addf %179, %58 : vector<7x2xf32>
    %181 = arith.cmpf ogt, %180, %164 : vector<7x2xf32>
    %cst_98 = arith.constant 1.000000e+00 : f32
    %cst_99 = arith.constant 0.000000e+00 : f32
    %182 = vector.broadcast %cst_98 : f32 to vector<7x2xf32>
    %183 = vector.broadcast %cst_99 : f32 to vector<7x2xf32>
    %184 = arith.select %181, %182, %183 : vector<7x2xi1>, vector<7x2xf32>
    %c4_100 = arith.constant 4 : index
    %c0_101 = arith.constant 0 : index
    %c0_102 = arith.constant 0 : index
    %185 = vector.load %arg11[%c4_100, %c0_101, %c0_102] : memref<20x7x50xf32, #tpu.memory_space<vmem>>, vector<1x7x50xf32>
    %186 = vector.shape_cast %185 : vector<1x7x50xf32> to vector<7x50xf32>
    %c4_103 = arith.constant 4 : index
    %c0_104 = arith.constant 0 : index
    %c0_105 = arith.constant 0 : index
    %187 = vector.load %arg12[%c4_103, %c0_104, %c0_105] : memref<20x7x2xf32, #tpu.memory_space<vmem>>, vector<1x7x2xf32>
    %188 = vector.shape_cast %187 : vector<1x7x2xf32> to vector<7x2xf32>
    %189 = vector.extract_strided_slice %184 {offsets = [0, 0], sizes = [7, 1], strides = [1, 1]} : vector<7x2xf32> to vector<7x1xf32>
    %190 = vector.broadcast %189 : vector<7x1xf32> to vector<7x50xf32>
    %191 = vector.broadcast %85 : vector<1x50xf32> to vector<7x50xf32>
    %192 = arith.mulf %190, %191 : vector<7x50xf32>
    %193 = vector.extract_strided_slice %184 {offsets = [0, 1], sizes = [7, 1], strides = [1, 1]} : vector<7x2xf32> to vector<7x1xf32>
    %194 = vector.broadcast %193 : vector<7x1xf32> to vector<7x50xf32>
    %195 = vector.broadcast %86 : vector<1x50xf32> to vector<7x50xf32>
    %196 = arith.mulf %194, %195 : vector<7x50xf32>
    %197 = arith.addf %192, %196 : vector<7x50xf32>
    %198 = arith.addf %197, %53 : vector<7x50xf32>
    %199 = arith.cmpf ogt, %198, %186 : vector<7x50xf32>
    %cst_106 = arith.constant 1.000000e+00 : f32
    %cst_107 = arith.constant 0.000000e+00 : f32
    %200 = vector.broadcast %cst_106 : f32 to vector<7x50xf32>
    %201 = vector.broadcast %cst_107 : f32 to vector<7x50xf32>
    %202 = arith.select %199, %200, %201 : vector<7x50xi1>, vector<7x50xf32>
    %cst_108 = arith.constant dense<0.000000e+00> : vector<7x2xf32>
    %203 = tpu.matmul %202, %87, %cst_108 {dimension_numbers = #tpu.dot_dimension_numbers<[1], [0], [0], [1], [0, 0, 1, 1], [], []>} : vector<7x50xf32>, vector<50x2xf32>, vector<7x2xf32> -> vector<7x2xf32>
    %204 = arith.addf %203, %58 : vector<7x2xf32>
    %205 = arith.cmpf ogt, %204, %188 : vector<7x2xf32>
    %cst_109 = arith.constant 1.000000e+00 : f32
    %cst_110 = arith.constant 0.000000e+00 : f32
    %206 = vector.broadcast %cst_109 : f32 to vector<7x2xf32>
    %207 = vector.broadcast %cst_110 : f32 to vector<7x2xf32>
    %208 = arith.select %205, %206, %207 : vector<7x2xi1>, vector<7x2xf32>
    %c5_111 = arith.constant 5 : index
    %c0_112 = arith.constant 0 : index
    %c0_113 = arith.constant 0 : index
    %209 = vector.load %arg11[%c5_111, %c0_112, %c0_113] : memref<20x7x50xf32, #tpu.memory_space<vmem>>, vector<1x7x50xf32>
    %210 = vector.shape_cast %209 : vector<1x7x50xf32> to vector<7x50xf32>
    %c5_114 = arith.constant 5 : index
    %c0_115 = arith.constant 0 : index
    %c0_116 = arith.constant 0 : index
    %211 = vector.load %arg12[%c5_114, %c0_115, %c0_116] : memref<20x7x2xf32, #tpu.memory_space<vmem>>, vector<1x7x2xf32>
    %212 = vector.shape_cast %211 : vector<1x7x2xf32> to vector<7x2xf32>
    %213 = vector.extract_strided_slice %208 {offsets = [0, 0], sizes = [7, 1], strides = [1, 1]} : vector<7x2xf32> to vector<7x1xf32>
    %214 = vector.broadcast %213 : vector<7x1xf32> to vector<7x50xf32>
    %215 = vector.broadcast %85 : vector<1x50xf32> to vector<7x50xf32>
    %216 = arith.mulf %214, %215 : vector<7x50xf32>
    %217 = vector.extract_strided_slice %208 {offsets = [0, 1], sizes = [7, 1], strides = [1, 1]} : vector<7x2xf32> to vector<7x1xf32>
    %218 = vector.broadcast %217 : vector<7x1xf32> to vector<7x50xf32>
    %219 = vector.broadcast %86 : vector<1x50xf32> to vector<7x50xf32>
    %220 = arith.mulf %218, %219 : vector<7x50xf32>
    %221 = arith.addf %216, %220 : vector<7x50xf32>
    %222 = arith.addf %221, %53 : vector<7x50xf32>
    %223 = arith.cmpf ogt, %222, %210 : vector<7x50xf32>
    %cst_117 = arith.constant 1.000000e+00 : f32
    %cst_118 = arith.constant 0.000000e+00 : f32
    %224 = vector.broadcast %cst_117 : f32 to vector<7x50xf32>
    %225 = vector.broadcast %cst_118 : f32 to vector<7x50xf32>
    %226 = arith.select %223, %224, %225 : vector<7x50xi1>, vector<7x50xf32>
    %cst_119 = arith.constant dense<0.000000e+00> : vector<7x2xf32>
    %227 = tpu.matmul %226, %87, %cst_119 {dimension_numbers = #tpu.dot_dimension_numbers<[1], [0], [0], [1], [0, 0, 1, 1], [], []>} : vector<7x50xf32>, vector<50x2xf32>, vector<7x2xf32> -> vector<7x2xf32>
    %228 = arith.addf %227, %58 : vector<7x2xf32>
    %229 = arith.cmpf ogt, %228, %212 : vector<7x2xf32>
    %cst_120 = arith.constant 1.000000e+00 : f32
    %cst_121 = arith.constant 0.000000e+00 : f32
    %230 = vector.broadcast %cst_120 : f32 to vector<7x2xf32>
    %231 = vector.broadcast %cst_121 : f32 to vector<7x2xf32>
    %232 = arith.select %229, %230, %231 : vector<7x2xi1>, vector<7x2xf32>
    %c6_122 = arith.constant 6 : index
    %c0_123 = arith.constant 0 : index
    %c0_124 = arith.constant 0 : index
    %233 = vector.load %arg11[%c6_122, %c0_123, %c0_124] : memref<20x7x50xf32, #tpu.memory_space<vmem>>, vector<1x7x50xf32>
    %234 = vector.shape_cast %233 : vector<1x7x50xf32> to vector<7x50xf32>
    %c6_125 = arith.constant 6 : index
    %c0_126 = arith.constant 0 : index
    %c0_127 = arith.constant 0 : index
    %235 = vector.load %arg12[%c6_125, %c0_126, %c0_127] : memref<20x7x2xf32, #tpu.memory_space<vmem>>, vector<1x7x2xf32>
    %236 = vector.shape_cast %235 : vector<1x7x2xf32> to vector<7x2xf32>
    %237 = vector.extract_strided_slice %232 {offsets = [0, 0], sizes = [7, 1], strides = [1, 1]} : vector<7x2xf32> to vector<7x1xf32>
    %238 = vector.broadcast %237 : vector<7x1xf32> to vector<7x50xf32>
    %239 = vector.broadcast %85 : vector<1x50xf32> to vector<7x50xf32>
    %240 = arith.mulf %238, %239 : vector<7x50xf32>
    %241 = vector.extract_strided_slice %232 {offsets = [0, 1], sizes = [7, 1], strides = [1, 1]} : vector<7x2xf32> to vector<7x1xf32>
    %242 = vector.broadcast %241 : vector<7x1xf32> to vector<7x50xf32>
    %243 = vector.broadcast %86 : vector<1x50xf32> to vector<7x50xf32>
    %244 = arith.mulf %242, %243 : vector<7x50xf32>
    %245 = arith.addf %240, %244 : vector<7x50xf32>
    %246 = arith.addf %245, %53 : vector<7x50xf32>
    %247 = arith.cmpf ogt, %246, %234 : vector<7x50xf32>
    %cst_128 = arith.constant 1.000000e+00 : f32
    %cst_129 = arith.constant 0.000000e+00 : f32
    %248 = vector.broadcast %cst_128 : f32 to vector<7x50xf32>
    %249 = vector.broadcast %cst_129 : f32 to vector<7x50xf32>
    %250 = arith.select %247, %248, %249 : vector<7x50xi1>, vector<7x50xf32>
    %cst_130 = arith.constant dense<0.000000e+00> : vector<7x2xf32>
    %251 = tpu.matmul %250, %87, %cst_130 {dimension_numbers = #tpu.dot_dimension_numbers<[1], [0], [0], [1], [0, 0, 1, 1], [], []>} : vector<7x50xf32>, vector<50x2xf32>, vector<7x2xf32> -> vector<7x2xf32>
    %252 = arith.addf %251, %58 : vector<7x2xf32>
    %253 = arith.cmpf ogt, %252, %236 : vector<7x2xf32>
    %cst_131 = arith.constant 1.000000e+00 : f32
    %cst_132 = arith.constant 0.000000e+00 : f32
    %254 = vector.broadcast %cst_131 : f32 to vector<7x2xf32>
    %255 = vector.broadcast %cst_132 : f32 to vector<7x2xf32>
    %256 = arith.select %253, %254, %255 : vector<7x2xi1>, vector<7x2xf32>
    %c7 = arith.constant 7 : index
    %c0_133 = arith.constant 0 : index
    %c0_134 = arith.constant 0 : index
    %257 = vector.load %arg11[%c7, %c0_133, %c0_134] : memref<20x7x50xf32, #tpu.memory_space<vmem>>, vector<1x7x50xf32>
    %258 = vector.shape_cast %257 : vector<1x7x50xf32> to vector<7x50xf32>
    %c7_135 = arith.constant 7 : index
    %c0_136 = arith.constant 0 : index
    %c0_137 = arith.constant 0 : index
    %259 = vector.load %arg12[%c7_135, %c0_136, %c0_137] : memref<20x7x2xf32, #tpu.memory_space<vmem>>, vector<1x7x2xf32>
    %260 = vector.shape_cast %259 : vector<1x7x2xf32> to vector<7x2xf32>
    %261 = vector.extract_strided_slice %256 {offsets = [0, 0], sizes = [7, 1], strides = [1, 1]} : vector<7x2xf32> to vector<7x1xf32>
    %262 = vector.broadcast %261 : vector<7x1xf32> to vector<7x50xf32>
    %263 = vector.broadcast %85 : vector<1x50xf32> to vector<7x50xf32>
    %264 = arith.mulf %262, %263 : vector<7x50xf32>
    %265 = vector.extract_strided_slice %256 {offsets = [0, 1], sizes = [7, 1], strides = [1, 1]} : vector<7x2xf32> to vector<7x1xf32>
    %266 = vector.broadcast %265 : vector<7x1xf32> to vector<7x50xf32>
    %267 = vector.broadcast %86 : vector<1x50xf32> to vector<7x50xf32>
    %268 = arith.mulf %266, %267 : vector<7x50xf32>
    %269 = arith.addf %264, %268 : vector<7x50xf32>
    %270 = arith.addf %269, %53 : vector<7x50xf32>
    %271 = arith.cmpf ogt, %270, %258 : vector<7x50xf32>
    %cst_138 = arith.constant 1.000000e+00 : f32
    %cst_139 = arith.constant 0.000000e+00 : f32
    %272 = vector.broadcast %cst_138 : f32 to vector<7x50xf32>
    %273 = vector.broadcast %cst_139 : f32 to vector<7x50xf32>
    %274 = arith.select %271, %272, %273 : vector<7x50xi1>, vector<7x50xf32>
    %cst_140 = arith.constant dense<0.000000e+00> : vector<7x2xf32>
    %275 = tpu.matmul %274, %87, %cst_140 {dimension_numbers = #tpu.dot_dimension_numbers<[1], [0], [0], [1], [0, 0, 1, 1], [], []>} : vector<7x50xf32>, vector<50x2xf32>, vector<7x2xf32> -> vector<7x2xf32>
    %276 = arith.addf %275, %58 : vector<7x2xf32>
    %277 = arith.cmpf ogt, %276, %260 : vector<7x2xf32>
    %cst_141 = arith.constant 1.000000e+00 : f32
    %cst_142 = arith.constant 0.000000e+00 : f32
    %278 = vector.broadcast %cst_141 : f32 to vector<7x2xf32>
    %279 = vector.broadcast %cst_142 : f32 to vector<7x2xf32>
    %280 = arith.select %277, %278, %279 : vector<7x2xi1>, vector<7x2xf32>
    %c8 = arith.constant 8 : index
    %c0_143 = arith.constant 0 : index
    %c0_144 = arith.constant 0 : index
    %281 = vector.load %arg11[%c8, %c0_143, %c0_144] : memref<20x7x50xf32, #tpu.memory_space<vmem>>, vector<1x7x50xf32>
    %282 = vector.shape_cast %281 : vector<1x7x50xf32> to vector<7x50xf32>
    %c8_145 = arith.constant 8 : index
    %c0_146 = arith.constant 0 : index
    %c0_147 = arith.constant 0 : index
    %283 = vector.load %arg12[%c8_145, %c0_146, %c0_147] : memref<20x7x2xf32, #tpu.memory_space<vmem>>, vector<1x7x2xf32>
    %284 = vector.shape_cast %283 : vector<1x7x2xf32> to vector<7x2xf32>
    %285 = vector.extract_strided_slice %280 {offsets = [0, 0], sizes = [7, 1], strides = [1, 1]} : vector<7x2xf32> to vector<7x1xf32>
    %286 = vector.broadcast %285 : vector<7x1xf32> to vector<7x50xf32>
    %287 = vector.broadcast %85 : vector<1x50xf32> to vector<7x50xf32>
    %288 = arith.mulf %286, %287 : vector<7x50xf32>
    %289 = vector.extract_strided_slice %280 {offsets = [0, 1], sizes = [7, 1], strides = [1, 1]} : vector<7x2xf32> to vector<7x1xf32>
    %290 = vector.broadcast %289 : vector<7x1xf32> to vector<7x50xf32>
    %291 = vector.broadcast %86 : vector<1x50xf32> to vector<7x50xf32>
    %292 = arith.mulf %290, %291 : vector<7x50xf32>
    %293 = arith.addf %288, %292 : vector<7x50xf32>
    %294 = arith.addf %293, %53 : vector<7x50xf32>
    %295 = arith.cmpf ogt, %294, %282 : vector<7x50xf32>
    %cst_148 = arith.constant 1.000000e+00 : f32
    %cst_149 = arith.constant 0.000000e+00 : f32
    %296 = vector.broadcast %cst_148 : f32 to vector<7x50xf32>
    %297 = vector.broadcast %cst_149 : f32 to vector<7x50xf32>
    %298 = arith.select %295, %296, %297 : vector<7x50xi1>, vector<7x50xf32>
    %cst_150 = arith.constant dense<0.000000e+00> : vector<7x2xf32>
    %299 = tpu.matmul %298, %87, %cst_150 {dimension_numbers = #tpu.dot_dimension_numbers<[1], [0], [0], [1], [0, 0, 1, 1], [], []>} : vector<7x50xf32>, vector<50x2xf32>, vector<7x2xf32> -> vector<7x2xf32>
    %300 = arith.addf %299, %58 : vector<7x2xf32>
    %301 = arith.cmpf ogt, %300, %284 : vector<7x2xf32>
    %cst_151 = arith.constant 1.000000e+00 : f32
    %cst_152 = arith.constant 0.000000e+00 : f32
    %302 = vector.broadcast %cst_151 : f32 to vector<7x2xf32>
    %303 = vector.broadcast %cst_152 : f32 to vector<7x2xf32>
    %304 = arith.select %301, %302, %303 : vector<7x2xi1>, vector<7x2xf32>
    %c9 = arith.constant 9 : index
    %c0_153 = arith.constant 0 : index
    %c0_154 = arith.constant 0 : index
    %305 = vector.load %arg11[%c9, %c0_153, %c0_154] : memref<20x7x50xf32, #tpu.memory_space<vmem>>, vector<1x7x50xf32>
    %306 = vector.shape_cast %305 : vector<1x7x50xf32> to vector<7x50xf32>
    %c9_155 = arith.constant 9 : index
    %c0_156 = arith.constant 0 : index
    %c0_157 = arith.constant 0 : index
    %307 = vector.load %arg12[%c9_155, %c0_156, %c0_157] : memref<20x7x2xf32, #tpu.memory_space<vmem>>, vector<1x7x2xf32>
    %308 = vector.shape_cast %307 : vector<1x7x2xf32> to vector<7x2xf32>
    %309 = vector.extract_strided_slice %304 {offsets = [0, 0], sizes = [7, 1], strides = [1, 1]} : vector<7x2xf32> to vector<7x1xf32>
    %310 = vector.broadcast %309 : vector<7x1xf32> to vector<7x50xf32>
    %311 = vector.broadcast %85 : vector<1x50xf32> to vector<7x50xf32>
    %312 = arith.mulf %310, %311 : vector<7x50xf32>
    %313 = vector.extract_strided_slice %304 {offsets = [0, 1], sizes = [7, 1], strides = [1, 1]} : vector<7x2xf32> to vector<7x1xf32>
    %314 = vector.broadcast %313 : vector<7x1xf32> to vector<7x50xf32>
    %315 = vector.broadcast %86 : vector<1x50xf32> to vector<7x50xf32>
    %316 = arith.mulf %314, %315 : vector<7x50xf32>
    %317 = arith.addf %312, %316 : vector<7x50xf32>
    %318 = arith.addf %317, %53 : vector<7x50xf32>
    %319 = arith.cmpf ogt, %318, %306 : vector<7x50xf32>
    %cst_158 = arith.constant 1.000000e+00 : f32
    %cst_159 = arith.constant 0.000000e+00 : f32
    %320 = vector.broadcast %cst_158 : f32 to vector<7x50xf32>
    %321 = vector.broadcast %cst_159 : f32 to vector<7x50xf32>
    %322 = arith.select %319, %320, %321 : vector<7x50xi1>, vector<7x50xf32>
    %cst_160 = arith.constant dense<0.000000e+00> : vector<7x2xf32>
    %323 = tpu.matmul %322, %87, %cst_160 {dimension_numbers = #tpu.dot_dimension_numbers<[1], [0], [0], [1], [0, 0, 1, 1], [], []>} : vector<7x50xf32>, vector<50x2xf32>, vector<7x2xf32> -> vector<7x2xf32>
    %324 = arith.addf %323, %58 : vector<7x2xf32>
    %325 = arith.cmpf ogt, %324, %308 : vector<7x2xf32>
    %cst_161 = arith.constant 1.000000e+00 : f32
    %cst_162 = arith.constant 0.000000e+00 : f32
    %326 = vector.broadcast %cst_161 : f32 to vector<7x2xf32>
    %327 = vector.broadcast %cst_162 : f32 to vector<7x2xf32>
    %328 = arith.select %325, %326, %327 : vector<7x2xi1>, vector<7x2xf32>
    %c10 = arith.constant 10 : index
    %c0_163 = arith.constant 0 : index
    %c0_164 = arith.constant 0 : index
    %329 = vector.load %arg11[%c10, %c0_163, %c0_164] : memref<20x7x50xf32, #tpu.memory_space<vmem>>, vector<1x7x50xf32>
    %330 = vector.shape_cast %329 : vector<1x7x50xf32> to vector<7x50xf32>
    %c10_165 = arith.constant 10 : index
    %c0_166 = arith.constant 0 : index
    %c0_167 = arith.constant 0 : index
    %331 = vector.load %arg12[%c10_165, %c0_166, %c0_167] : memref<20x7x2xf32, #tpu.memory_space<vmem>>, vector<1x7x2xf32>
    %332 = vector.shape_cast %331 : vector<1x7x2xf32> to vector<7x2xf32>
    %333 = vector.extract_strided_slice %328 {offsets = [0, 0], sizes = [7, 1], strides = [1, 1]} : vector<7x2xf32> to vector<7x1xf32>
    %334 = vector.broadcast %333 : vector<7x1xf32> to vector<7x50xf32>
    %335 = vector.broadcast %85 : vector<1x50xf32> to vector<7x50xf32>
    %336 = arith.mulf %334, %335 : vector<7x50xf32>
    %337 = vector.extract_strided_slice %328 {offsets = [0, 1], sizes = [7, 1], strides = [1, 1]} : vector<7x2xf32> to vector<7x1xf32>
    %338 = vector.broadcast %337 : vector<7x1xf32> to vector<7x50xf32>
    %339 = vector.broadcast %86 : vector<1x50xf32> to vector<7x50xf32>
    %340 = arith.mulf %338, %339 : vector<7x50xf32>
    %341 = arith.addf %336, %340 : vector<7x50xf32>
    %342 = arith.addf %341, %53 : vector<7x50xf32>
    %343 = arith.cmpf ogt, %342, %330 : vector<7x50xf32>
    %cst_168 = arith.constant 1.000000e+00 : f32
    %cst_169 = arith.constant 0.000000e+00 : f32
    %344 = vector.broadcast %cst_168 : f32 to vector<7x50xf32>
    %345 = vector.broadcast %cst_169 : f32 to vector<7x50xf32>
    %346 = arith.select %343, %344, %345 : vector<7x50xi1>, vector<7x50xf32>
    %cst_170 = arith.constant dense<0.000000e+00> : vector<7x2xf32>
    %347 = tpu.matmul %346, %87, %cst_170 {dimension_numbers = #tpu.dot_dimension_numbers<[1], [0], [0], [1], [0, 0, 1, 1], [], []>} : vector<7x50xf32>, vector<50x2xf32>, vector<7x2xf32> -> vector<7x2xf32>
    %348 = arith.addf %347, %58 : vector<7x2xf32>
    %349 = arith.cmpf ogt, %348, %332 : vector<7x2xf32>
    %cst_171 = arith.constant 1.000000e+00 : f32
    %cst_172 = arith.constant 0.000000e+00 : f32
    %350 = vector.broadcast %cst_171 : f32 to vector<7x2xf32>
    %351 = vector.broadcast %cst_172 : f32 to vector<7x2xf32>
    %352 = arith.select %349, %350, %351 : vector<7x2xi1>, vector<7x2xf32>
    %c11 = arith.constant 11 : index
    %c0_173 = arith.constant 0 : index
    %c0_174 = arith.constant 0 : index
    %353 = vector.load %arg11[%c11, %c0_173, %c0_174] : memref<20x7x50xf32, #tpu.memory_space<vmem>>, vector<1x7x50xf32>
    %354 = vector.shape_cast %353 : vector<1x7x50xf32> to vector<7x50xf32>
    %c11_175 = arith.constant 11 : index
    %c0_176 = arith.constant 0 : index
    %c0_177 = arith.constant 0 : index
    %355 = vector.load %arg12[%c11_175, %c0_176, %c0_177] : memref<20x7x2xf32, #tpu.memory_space<vmem>>, vector<1x7x2xf32>
    %356 = vector.shape_cast %355 : vector<1x7x2xf32> to vector<7x2xf32>
    %357 = vector.extract_strided_slice %352 {offsets = [0, 0], sizes = [7, 1], strides = [1, 1]} : vector<7x2xf32> to vector<7x1xf32>
    %358 = vector.broadcast %357 : vector<7x1xf32> to vector<7x50xf32>
    %359 = vector.broadcast %85 : vector<1x50xf32> to vector<7x50xf32>
    %360 = arith.mulf %358, %359 : vector<7x50xf32>
    %361 = vector.extract_strided_slice %352 {offsets = [0, 1], sizes = [7, 1], strides = [1, 1]} : vector<7x2xf32> to vector<7x1xf32>
    %362 = vector.broadcast %361 : vector<7x1xf32> to vector<7x50xf32>
    %363 = vector.broadcast %86 : vector<1x50xf32> to vector<7x50xf32>
    %364 = arith.mulf %362, %363 : vector<7x50xf32>
    %365 = arith.addf %360, %364 : vector<7x50xf32>
    %366 = arith.addf %365, %53 : vector<7x50xf32>
    %367 = arith.cmpf ogt, %366, %354 : vector<7x50xf32>
    %cst_178 = arith.constant 1.000000e+00 : f32
    %cst_179 = arith.constant 0.000000e+00 : f32
    %368 = vector.broadcast %cst_178 : f32 to vector<7x50xf32>
    %369 = vector.broadcast %cst_179 : f32 to vector<7x50xf32>
    %370 = arith.select %367, %368, %369 : vector<7x50xi1>, vector<7x50xf32>
    %cst_180 = arith.constant dense<0.000000e+00> : vector<7x2xf32>
    %371 = tpu.matmul %370, %87, %cst_180 {dimension_numbers = #tpu.dot_dimension_numbers<[1], [0], [0], [1], [0, 0, 1, 1], [], []>} : vector<7x50xf32>, vector<50x2xf32>, vector<7x2xf32> -> vector<7x2xf32>
    %372 = arith.addf %371, %58 : vector<7x2xf32>
    %373 = arith.cmpf ogt, %372, %356 : vector<7x2xf32>
    %cst_181 = arith.constant 1.000000e+00 : f32
    %cst_182 = arith.constant 0.000000e+00 : f32
    %374 = vector.broadcast %cst_181 : f32 to vector<7x2xf32>
    %375 = vector.broadcast %cst_182 : f32 to vector<7x2xf32>
    %376 = arith.select %373, %374, %375 : vector<7x2xi1>, vector<7x2xf32>
    %c12 = arith.constant 12 : index
    %c0_183 = arith.constant 0 : index
    %c0_184 = arith.constant 0 : index
    %377 = vector.load %arg11[%c12, %c0_183, %c0_184] : memref<20x7x50xf32, #tpu.memory_space<vmem>>, vector<1x7x50xf32>
    %378 = vector.shape_cast %377 : vector<1x7x50xf32> to vector<7x50xf32>
    %c12_185 = arith.constant 12 : index
    %c0_186 = arith.constant 0 : index
    %c0_187 = arith.constant 0 : index
    %379 = vector.load %arg12[%c12_185, %c0_186, %c0_187] : memref<20x7x2xf32, #tpu.memory_space<vmem>>, vector<1x7x2xf32>
    %380 = vector.shape_cast %379 : vector<1x7x2xf32> to vector<7x2xf32>
    %381 = vector.extract_strided_slice %376 {offsets = [0, 0], sizes = [7, 1], strides = [1, 1]} : vector<7x2xf32> to vector<7x1xf32>
    %382 = vector.broadcast %381 : vector<7x1xf32> to vector<7x50xf32>
    %383 = vector.broadcast %85 : vector<1x50xf32> to vector<7x50xf32>
    %384 = arith.mulf %382, %383 : vector<7x50xf32>
    %385 = vector.extract_strided_slice %376 {offsets = [0, 1], sizes = [7, 1], strides = [1, 1]} : vector<7x2xf32> to vector<7x1xf32>
    %386 = vector.broadcast %385 : vector<7x1xf32> to vector<7x50xf32>
    %387 = vector.broadcast %86 : vector<1x50xf32> to vector<7x50xf32>
    %388 = arith.mulf %386, %387 : vector<7x50xf32>
    %389 = arith.addf %384, %388 : vector<7x50xf32>
    %390 = arith.addf %389, %53 : vector<7x50xf32>
    %391 = arith.cmpf ogt, %390, %378 : vector<7x50xf32>
    %cst_188 = arith.constant 1.000000e+00 : f32
    %cst_189 = arith.constant 0.000000e+00 : f32
    %392 = vector.broadcast %cst_188 : f32 to vector<7x50xf32>
    %393 = vector.broadcast %cst_189 : f32 to vector<7x50xf32>
    %394 = arith.select %391, %392, %393 : vector<7x50xi1>, vector<7x50xf32>
    %cst_190 = arith.constant dense<0.000000e+00> : vector<7x2xf32>
    %395 = tpu.matmul %394, %87, %cst_190 {dimension_numbers = #tpu.dot_dimension_numbers<[1], [0], [0], [1], [0, 0, 1, 1], [], []>} : vector<7x50xf32>, vector<50x2xf32>, vector<7x2xf32> -> vector<7x2xf32>
    %396 = arith.addf %395, %58 : vector<7x2xf32>
    %397 = arith.cmpf ogt, %396, %380 : vector<7x2xf32>
    %cst_191 = arith.constant 1.000000e+00 : f32
    %cst_192 = arith.constant 0.000000e+00 : f32
    %398 = vector.broadcast %cst_191 : f32 to vector<7x2xf32>
    %399 = vector.broadcast %cst_192 : f32 to vector<7x2xf32>
    %400 = arith.select %397, %398, %399 : vector<7x2xi1>, vector<7x2xf32>
    %c13 = arith.constant 13 : index
    %c0_193 = arith.constant 0 : index
    %c0_194 = arith.constant 0 : index
    %401 = vector.load %arg11[%c13, %c0_193, %c0_194] : memref<20x7x50xf32, #tpu.memory_space<vmem>>, vector<1x7x50xf32>
    %402 = vector.shape_cast %401 : vector<1x7x50xf32> to vector<7x50xf32>
    %c13_195 = arith.constant 13 : index
    %c0_196 = arith.constant 0 : index
    %c0_197 = arith.constant 0 : index
    %403 = vector.load %arg12[%c13_195, %c0_196, %c0_197] : memref<20x7x2xf32, #tpu.memory_space<vmem>>, vector<1x7x2xf32>
    %404 = vector.shape_cast %403 : vector<1x7x2xf32> to vector<7x2xf32>
    %405 = vector.extract_strided_slice %400 {offsets = [0, 0], sizes = [7, 1], strides = [1, 1]} : vector<7x2xf32> to vector<7x1xf32>
    %406 = vector.broadcast %405 : vector<7x1xf32> to vector<7x50xf32>
    %407 = vector.broadcast %85 : vector<1x50xf32> to vector<7x50xf32>
    %408 = arith.mulf %406, %407 : vector<7x50xf32>
    %409 = vector.extract_strided_slice %400 {offsets = [0, 1], sizes = [7, 1], strides = [1, 1]} : vector<7x2xf32> to vector<7x1xf32>
    %410 = vector.broadcast %409 : vector<7x1xf32> to vector<7x50xf32>
    %411 = vector.broadcast %86 : vector<1x50xf32> to vector<7x50xf32>
    %412 = arith.mulf %410, %411 : vector<7x50xf32>
    %413 = arith.addf %408, %412 : vector<7x50xf32>
    %414 = arith.addf %413, %53 : vector<7x50xf32>
    %415 = arith.cmpf ogt, %414, %402 : vector<7x50xf32>
    %cst_198 = arith.constant 1.000000e+00 : f32
    %cst_199 = arith.constant 0.000000e+00 : f32
    %416 = vector.broadcast %cst_198 : f32 to vector<7x50xf32>
    %417 = vector.broadcast %cst_199 : f32 to vector<7x50xf32>
    %418 = arith.select %415, %416, %417 : vector<7x50xi1>, vector<7x50xf32>
    %cst_200 = arith.constant dense<0.000000e+00> : vector<7x2xf32>
    %419 = tpu.matmul %418, %87, %cst_200 {dimension_numbers = #tpu.dot_dimension_numbers<[1], [0], [0], [1], [0, 0, 1, 1], [], []>} : vector<7x50xf32>, vector<50x2xf32>, vector<7x2xf32> -> vector<7x2xf32>
    %420 = arith.addf %419, %58 : vector<7x2xf32>
    %421 = arith.cmpf ogt, %420, %404 : vector<7x2xf32>
    %cst_201 = arith.constant 1.000000e+00 : f32
    %cst_202 = arith.constant 0.000000e+00 : f32
    %422 = vector.broadcast %cst_201 : f32 to vector<7x2xf32>
    %423 = vector.broadcast %cst_202 : f32 to vector<7x2xf32>
    %424 = arith.select %421, %422, %423 : vector<7x2xi1>, vector<7x2xf32>
    %c14 = arith.constant 14 : index
    %c0_203 = arith.constant 0 : index
    %c0_204 = arith.constant 0 : index
    %425 = vector.load %arg11[%c14, %c0_203, %c0_204] : memref<20x7x50xf32, #tpu.memory_space<vmem>>, vector<1x7x50xf32>
    %426 = vector.shape_cast %425 : vector<1x7x50xf32> to vector<7x50xf32>
    %c14_205 = arith.constant 14 : index
    %c0_206 = arith.constant 0 : index
    %c0_207 = arith.constant 0 : index
    %427 = vector.load %arg12[%c14_205, %c0_206, %c0_207] : memref<20x7x2xf32, #tpu.memory_space<vmem>>, vector<1x7x2xf32>
    %428 = vector.shape_cast %427 : vector<1x7x2xf32> to vector<7x2xf32>
    %429 = vector.extract_strided_slice %424 {offsets = [0, 0], sizes = [7, 1], strides = [1, 1]} : vector<7x2xf32> to vector<7x1xf32>
    %430 = vector.broadcast %429 : vector<7x1xf32> to vector<7x50xf32>
    %431 = vector.broadcast %85 : vector<1x50xf32> to vector<7x50xf32>
    %432 = arith.mulf %430, %431 : vector<7x50xf32>
    %433 = vector.extract_strided_slice %424 {offsets = [0, 1], sizes = [7, 1], strides = [1, 1]} : vector<7x2xf32> to vector<7x1xf32>
    %434 = vector.broadcast %433 : vector<7x1xf32> to vector<7x50xf32>
    %435 = vector.broadcast %86 : vector<1x50xf32> to vector<7x50xf32>
    %436 = arith.mulf %434, %435 : vector<7x50xf32>
    %437 = arith.addf %432, %436 : vector<7x50xf32>
    %438 = arith.addf %437, %53 : vector<7x50xf32>
    %439 = arith.cmpf ogt, %438, %426 : vector<7x50xf32>
    %cst_208 = arith.constant 1.000000e+00 : f32
    %cst_209 = arith.constant 0.000000e+00 : f32
    %440 = vector.broadcast %cst_208 : f32 to vector<7x50xf32>
    %441 = vector.broadcast %cst_209 : f32 to vector<7x50xf32>
    %442 = arith.select %439, %440, %441 : vector<7x50xi1>, vector<7x50xf32>
    %cst_210 = arith.constant dense<0.000000e+00> : vector<7x2xf32>
    %443 = tpu.matmul %442, %87, %cst_210 {dimension_numbers = #tpu.dot_dimension_numbers<[1], [0], [0], [1], [0, 0, 1, 1], [], []>} : vector<7x50xf32>, vector<50x2xf32>, vector<7x2xf32> -> vector<7x2xf32>
    %444 = arith.addf %443, %58 : vector<7x2xf32>
    %445 = arith.cmpf ogt, %444, %428 : vector<7x2xf32>
    %cst_211 = arith.constant 1.000000e+00 : f32
    %cst_212 = arith.constant 0.000000e+00 : f32
    %446 = vector.broadcast %cst_211 : f32 to vector<7x2xf32>
    %447 = vector.broadcast %cst_212 : f32 to vector<7x2xf32>
    %448 = arith.select %445, %446, %447 : vector<7x2xi1>, vector<7x2xf32>
    %c15 = arith.constant 15 : index
    %c0_213 = arith.constant 0 : index
    %c0_214 = arith.constant 0 : index
    %449 = vector.load %arg11[%c15, %c0_213, %c0_214] : memref<20x7x50xf32, #tpu.memory_space<vmem>>, vector<1x7x50xf32>
    %450 = vector.shape_cast %449 : vector<1x7x50xf32> to vector<7x50xf32>
    %c15_215 = arith.constant 15 : index
    %c0_216 = arith.constant 0 : index
    %c0_217 = arith.constant 0 : index
    %451 = vector.load %arg12[%c15_215, %c0_216, %c0_217] : memref<20x7x2xf32, #tpu.memory_space<vmem>>, vector<1x7x2xf32>
    %452 = vector.shape_cast %451 : vector<1x7x2xf32> to vector<7x2xf32>
    %453 = vector.extract_strided_slice %448 {offsets = [0, 0], sizes = [7, 1], strides = [1, 1]} : vector<7x2xf32> to vector<7x1xf32>
    %454 = vector.broadcast %453 : vector<7x1xf32> to vector<7x50xf32>
    %455 = vector.broadcast %85 : vector<1x50xf32> to vector<7x50xf32>
    %456 = arith.mulf %454, %455 : vector<7x50xf32>
    %457 = vector.extract_strided_slice %448 {offsets = [0, 1], sizes = [7, 1], strides = [1, 1]} : vector<7x2xf32> to vector<7x1xf32>
    %458 = vector.broadcast %457 : vector<7x1xf32> to vector<7x50xf32>
    %459 = vector.broadcast %86 : vector<1x50xf32> to vector<7x50xf32>
    %460 = arith.mulf %458, %459 : vector<7x50xf32>
    %461 = arith.addf %456, %460 : vector<7x50xf32>
    %462 = arith.addf %461, %53 : vector<7x50xf32>
    %463 = arith.cmpf ogt, %462, %450 : vector<7x50xf32>
    %cst_218 = arith.constant 1.000000e+00 : f32
    %cst_219 = arith.constant 0.000000e+00 : f32
    %464 = vector.broadcast %cst_218 : f32 to vector<7x50xf32>
    %465 = vector.broadcast %cst_219 : f32 to vector<7x50xf32>
    %466 = arith.select %463, %464, %465 : vector<7x50xi1>, vector<7x50xf32>
    %cst_220 = arith.constant dense<0.000000e+00> : vector<7x2xf32>
    %467 = tpu.matmul %466, %87, %cst_220 {dimension_numbers = #tpu.dot_dimension_numbers<[1], [0], [0], [1], [0, 0, 1, 1], [], []>} : vector<7x50xf32>, vector<50x2xf32>, vector<7x2xf32> -> vector<7x2xf32>
    %468 = arith.addf %467, %58 : vector<7x2xf32>
    %469 = arith.cmpf ogt, %468, %452 : vector<7x2xf32>
    %cst_221 = arith.constant 1.000000e+00 : f32
    %cst_222 = arith.constant 0.000000e+00 : f32
    %470 = vector.broadcast %cst_221 : f32 to vector<7x2xf32>
    %471 = vector.broadcast %cst_222 : f32 to vector<7x2xf32>
    %472 = arith.select %469, %470, %471 : vector<7x2xi1>, vector<7x2xf32>
    %c16 = arith.constant 16 : index
    %c0_223 = arith.constant 0 : index
    %c0_224 = arith.constant 0 : index
    %473 = vector.load %arg11[%c16, %c0_223, %c0_224] : memref<20x7x50xf32, #tpu.memory_space<vmem>>, vector<1x7x50xf32>
    %474 = vector.shape_cast %473 : vector<1x7x50xf32> to vector<7x50xf32>
    %c16_225 = arith.constant 16 : index
    %c0_226 = arith.constant 0 : index
    %c0_227 = arith.constant 0 : index
    %475 = vector.load %arg12[%c16_225, %c0_226, %c0_227] : memref<20x7x2xf32, #tpu.memory_space<vmem>>, vector<1x7x2xf32>
    %476 = vector.shape_cast %475 : vector<1x7x2xf32> to vector<7x2xf32>
    %477 = vector.extract_strided_slice %472 {offsets = [0, 0], sizes = [7, 1], strides = [1, 1]} : vector<7x2xf32> to vector<7x1xf32>
    %478 = vector.broadcast %477 : vector<7x1xf32> to vector<7x50xf32>
    %479 = vector.broadcast %85 : vector<1x50xf32> to vector<7x50xf32>
    %480 = arith.mulf %478, %479 : vector<7x50xf32>
    %481 = vector.extract_strided_slice %472 {offsets = [0, 1], sizes = [7, 1], strides = [1, 1]} : vector<7x2xf32> to vector<7x1xf32>
    %482 = vector.broadcast %481 : vector<7x1xf32> to vector<7x50xf32>
    %483 = vector.broadcast %86 : vector<1x50xf32> to vector<7x50xf32>
    %484 = arith.mulf %482, %483 : vector<7x50xf32>
    %485 = arith.addf %480, %484 : vector<7x50xf32>
    %486 = arith.addf %485, %53 : vector<7x50xf32>
    %487 = arith.cmpf ogt, %486, %474 : vector<7x50xf32>
    %cst_228 = arith.constant 1.000000e+00 : f32
    %cst_229 = arith.constant 0.000000e+00 : f32
    %488 = vector.broadcast %cst_228 : f32 to vector<7x50xf32>
    %489 = vector.broadcast %cst_229 : f32 to vector<7x50xf32>
    %490 = arith.select %487, %488, %489 : vector<7x50xi1>, vector<7x50xf32>
    %cst_230 = arith.constant dense<0.000000e+00> : vector<7x2xf32>
    %491 = tpu.matmul %490, %87, %cst_230 {dimension_numbers = #tpu.dot_dimension_numbers<[1], [0], [0], [1], [0, 0, 1, 1], [], []>} : vector<7x50xf32>, vector<50x2xf32>, vector<7x2xf32> -> vector<7x2xf32>
    %492 = arith.addf %491, %58 : vector<7x2xf32>
    %493 = arith.cmpf ogt, %492, %476 : vector<7x2xf32>
    %cst_231 = arith.constant 1.000000e+00 : f32
    %cst_232 = arith.constant 0.000000e+00 : f32
    %494 = vector.broadcast %cst_231 : f32 to vector<7x2xf32>
    %495 = vector.broadcast %cst_232 : f32 to vector<7x2xf32>
    %496 = arith.select %493, %494, %495 : vector<7x2xi1>, vector<7x2xf32>
    %c17 = arith.constant 17 : index
    %c0_233 = arith.constant 0 : index
    %c0_234 = arith.constant 0 : index
    %497 = vector.load %arg11[%c17, %c0_233, %c0_234] : memref<20x7x50xf32, #tpu.memory_space<vmem>>, vector<1x7x50xf32>
    %498 = vector.shape_cast %497 : vector<1x7x50xf32> to vector<7x50xf32>
    %c17_235 = arith.constant 17 : index
    %c0_236 = arith.constant 0 : index
    %c0_237 = arith.constant 0 : index
    %499 = vector.load %arg12[%c17_235, %c0_236, %c0_237] : memref<20x7x2xf32, #tpu.memory_space<vmem>>, vector<1x7x2xf32>
    %500 = vector.shape_cast %499 : vector<1x7x2xf32> to vector<7x2xf32>
    %501 = vector.extract_strided_slice %496 {offsets = [0, 0], sizes = [7, 1], strides = [1, 1]} : vector<7x2xf32> to vector<7x1xf32>
    %502 = vector.broadcast %501 : vector<7x1xf32> to vector<7x50xf32>
    %503 = vector.broadcast %85 : vector<1x50xf32> to vector<7x50xf32>
    %504 = arith.mulf %502, %503 : vector<7x50xf32>
    %505 = vector.extract_strided_slice %496 {offsets = [0, 1], sizes = [7, 1], strides = [1, 1]} : vector<7x2xf32> to vector<7x1xf32>
    %506 = vector.broadcast %505 : vector<7x1xf32> to vector<7x50xf32>
    %507 = vector.broadcast %86 : vector<1x50xf32> to vector<7x50xf32>
    %508 = arith.mulf %506, %507 : vector<7x50xf32>
    %509 = arith.addf %504, %508 : vector<7x50xf32>
    %510 = arith.addf %509, %53 : vector<7x50xf32>
    %511 = arith.cmpf ogt, %510, %498 : vector<7x50xf32>
    %cst_238 = arith.constant 1.000000e+00 : f32
    %cst_239 = arith.constant 0.000000e+00 : f32
    %512 = vector.broadcast %cst_238 : f32 to vector<7x50xf32>
    %513 = vector.broadcast %cst_239 : f32 to vector<7x50xf32>
    %514 = arith.select %511, %512, %513 : vector<7x50xi1>, vector<7x50xf32>
    %cst_240 = arith.constant dense<0.000000e+00> : vector<7x2xf32>
    %515 = tpu.matmul %514, %87, %cst_240 {dimension_numbers = #tpu.dot_dimension_numbers<[1], [0], [0], [1], [0, 0, 1, 1], [], []>} : vector<7x50xf32>, vector<50x2xf32>, vector<7x2xf32> -> vector<7x2xf32>
    %516 = arith.addf %515, %58 : vector<7x2xf32>
    %517 = arith.cmpf ogt, %516, %500 : vector<7x2xf32>
    %cst_241 = arith.constant 1.000000e+00 : f32
    %cst_242 = arith.constant 0.000000e+00 : f32
    %518 = vector.broadcast %cst_241 : f32 to vector<7x2xf32>
    %519 = vector.broadcast %cst_242 : f32 to vector<7x2xf32>
    %520 = arith.select %517, %518, %519 : vector<7x2xi1>, vector<7x2xf32>
    %c18 = arith.constant 18 : index
    %c0_243 = arith.constant 0 : index
    %c0_244 = arith.constant 0 : index
    %521 = vector.load %arg11[%c18, %c0_243, %c0_244] : memref<20x7x50xf32, #tpu.memory_space<vmem>>, vector<1x7x50xf32>
    %522 = vector.shape_cast %521 : vector<1x7x50xf32> to vector<7x50xf32>
    %c18_245 = arith.constant 18 : index
    %c0_246 = arith.constant 0 : index
    %c0_247 = arith.constant 0 : index
    %523 = vector.load %arg12[%c18_245, %c0_246, %c0_247] : memref<20x7x2xf32, #tpu.memory_space<vmem>>, vector<1x7x2xf32>
    %524 = vector.shape_cast %523 : vector<1x7x2xf32> to vector<7x2xf32>
    %525 = vector.extract_strided_slice %520 {offsets = [0, 0], sizes = [7, 1], strides = [1, 1]} : vector<7x2xf32> to vector<7x1xf32>
    %526 = vector.broadcast %525 : vector<7x1xf32> to vector<7x50xf32>
    %527 = vector.broadcast %85 : vector<1x50xf32> to vector<7x50xf32>
    %528 = arith.mulf %526, %527 : vector<7x50xf32>
    %529 = vector.extract_strided_slice %520 {offsets = [0, 1], sizes = [7, 1], strides = [1, 1]} : vector<7x2xf32> to vector<7x1xf32>
    %530 = vector.broadcast %529 : vector<7x1xf32> to vector<7x50xf32>
    %531 = vector.broadcast %86 : vector<1x50xf32> to vector<7x50xf32>
    %532 = arith.mulf %530, %531 : vector<7x50xf32>
    %533 = arith.addf %528, %532 : vector<7x50xf32>
    %534 = arith.addf %533, %53 : vector<7x50xf32>
    %535 = arith.cmpf ogt, %534, %522 : vector<7x50xf32>
    %cst_248 = arith.constant 1.000000e+00 : f32
    %cst_249 = arith.constant 0.000000e+00 : f32
    %536 = vector.broadcast %cst_248 : f32 to vector<7x50xf32>
    %537 = vector.broadcast %cst_249 : f32 to vector<7x50xf32>
    %538 = arith.select %535, %536, %537 : vector<7x50xi1>, vector<7x50xf32>
    %cst_250 = arith.constant dense<0.000000e+00> : vector<7x2xf32>
    %539 = tpu.matmul %538, %87, %cst_250 {dimension_numbers = #tpu.dot_dimension_numbers<[1], [0], [0], [1], [0, 0, 1, 1], [], []>} : vector<7x50xf32>, vector<50x2xf32>, vector<7x2xf32> -> vector<7x2xf32>
    %540 = arith.addf %539, %58 : vector<7x2xf32>
    %541 = arith.cmpf ogt, %540, %524 : vector<7x2xf32>
    %cst_251 = arith.constant 1.000000e+00 : f32
    %cst_252 = arith.constant 0.000000e+00 : f32
    %542 = vector.broadcast %cst_251 : f32 to vector<7x2xf32>
    %543 = vector.broadcast %cst_252 : f32 to vector<7x2xf32>
    %544 = arith.select %541, %542, %543 : vector<7x2xi1>, vector<7x2xf32>
    %c19 = arith.constant 19 : index
    %c0_253 = arith.constant 0 : index
    %c0_254 = arith.constant 0 : index
    %545 = vector.load %arg11[%c19, %c0_253, %c0_254] : memref<20x7x50xf32, #tpu.memory_space<vmem>>, vector<1x7x50xf32>
    %546 = vector.shape_cast %545 : vector<1x7x50xf32> to vector<7x50xf32>
    %c19_255 = arith.constant 19 : index
    %c0_256 = arith.constant 0 : index
    %c0_257 = arith.constant 0 : index
    %547 = vector.load %arg12[%c19_255, %c0_256, %c0_257] : memref<20x7x2xf32, #tpu.memory_space<vmem>>, vector<1x7x2xf32>
    %548 = vector.shape_cast %547 : vector<1x7x2xf32> to vector<7x2xf32>
    %549 = vector.extract_strided_slice %544 {offsets = [0, 0], sizes = [7, 1], strides = [1, 1]} : vector<7x2xf32> to vector<7x1xf32>
    %550 = vector.broadcast %549 : vector<7x1xf32> to vector<7x50xf32>
    %551 = vector.broadcast %85 : vector<1x50xf32> to vector<7x50xf32>
    %552 = arith.mulf %550, %551 : vector<7x50xf32>
    %553 = vector.extract_strided_slice %544 {offsets = [0, 1], sizes = [7, 1], strides = [1, 1]} : vector<7x2xf32> to vector<7x1xf32>
    %554 = vector.broadcast %553 : vector<7x1xf32> to vector<7x50xf32>
    %555 = vector.broadcast %86 : vector<1x50xf32> to vector<7x50xf32>
    %556 = arith.mulf %554, %555 : vector<7x50xf32>
    %557 = arith.addf %552, %556 : vector<7x50xf32>
    %558 = arith.addf %557, %53 : vector<7x50xf32>
    %559 = arith.cmpf ogt, %558, %546 : vector<7x50xf32>
    %cst_258 = arith.constant 1.000000e+00 : f32
    %cst_259 = arith.constant 0.000000e+00 : f32
    %560 = vector.broadcast %cst_258 : f32 to vector<7x50xf32>
    %561 = vector.broadcast %cst_259 : f32 to vector<7x50xf32>
    %562 = arith.select %559, %560, %561 : vector<7x50xi1>, vector<7x50xf32>
    %cst_260 = arith.constant dense<0.000000e+00> : vector<7x2xf32>
    %563 = tpu.matmul %562, %87, %cst_260 {dimension_numbers = #tpu.dot_dimension_numbers<[1], [0], [0], [1], [0, 0, 1, 1], [], []>} : vector<7x50xf32>, vector<50x2xf32>, vector<7x2xf32> -> vector<7x2xf32>
    %564 = arith.addf %563, %58 : vector<7x2xf32>
    %565 = arith.cmpf ogt, %564, %548 : vector<7x2xf32>
    %cst_261 = arith.constant 1.000000e+00 : f32
    %cst_262 = arith.constant 0.000000e+00 : f32
    %566 = vector.broadcast %cst_261 : f32 to vector<7x2xf32>
    %567 = vector.broadcast %cst_262 : f32 to vector<7x2xf32>
    %568 = arith.select %565, %566, %567 : vector<7x2xi1>, vector<7x2xf32>
    %569 = arith.subf %59, %568 : vector<7x2xf32>
    %570 = math.absf %569 : vector<7x2xf32>
    %cst_263 = arith.constant dense<0.000000e+00> : vector<7xf32>
    %571 = vector.multi_reduction <add>, %570, %cst_263 [1] : vector<7x2xf32> to vector<7xf32>
    %572 = vector.shape_cast %571 : vector<7xf32> to vector<7x1xf32>
    %cst_264 = arith.constant 5.000000e-01 : f32
    %573 = vector.broadcast %cst_264 : f32 to vector<7x1xf32>
    %574 = arith.mulf %572, %573 : vector<7x1xf32>
    %c0_265 = arith.constant 0 : index
    %c0_266 = arith.constant 0 : index
    %575 = vector.load %arg14[%c0_265, %c0_266] : memref<7x1xf32, #tpu.memory_space<vmem>>, vector<7x1xf32>
    tpu.vector_store %arg14[%c0_265, %c0_266], %574 {strides = array<i32>} : memref<7x1xf32, #tpu.memory_space<vmem>>, vector<7x1xf32>,
    return
  }
}

</mosaic_0001>

<llo_original>
// kernel: tpu_custom_call.1
$region0: #{tpu_custom_call.1}
  #allocation0 [shape = 'u32[]', space=smem, size = 0x4, offset = 0x4, fixed_abs, tag = 'smem constant byte address 0x4 - core index']
  #allocation1 [shape = 'u32[144,128]{1,0:T(1,128)}', space=vmem, size = 0x12000, scoped, tag = 'internal scratch']
  #allocation2 [shape = 'f32[7,50]{1,0:T(8,128)}', space=vmem, size = 0x1000, scoped, tag = 'scratch operand']
  %s0 = inlined_call_operand.vmem [shape: f32[8,2], index: 0, kind: input, shape index: {}]
  %s1 = inlined_call_operand.vmem [shape: f32[2,50], index: 1, kind: input, shape index: {}]
  %s2 = inlined_call_operand.vmem [shape: f32[50,2], index: 2, kind: input, shape index: {}]
  %s3 = inlined_call_operand.vmem [shape: f32[50,50], index: 3, kind: input, shape index: {}]
  %s4 = inlined_call_operand.vmem [shape: f32[50,2], index: 4, kind: input, shape index: {}]
  %s5 = inlined_call_operand.vmem [shape: f32[50,50], index: 5, kind: input, shape index: {}]
  %s6 = inlined_call_operand.vmem [shape: f32[2,50], index: 6, kind: input, shape index: {}]
  %s7 = inlined_call_operand.vmem [shape: f32[1,2], index: 7, kind: input, shape index: {}]
  %s8 = inlined_call_operand.vmem [shape: f32[1,50], index: 8, kind: input, shape index: {}]
  %s9 = inlined_call_operand.vmem [shape: f32[1,50], index: 9, kind: input, shape index: {}]
  %s10 = inlined_call_operand.vmem [shape: f32[1,50], index: 10, kind: input, shape index: {}]
  %s11 = inlined_call_operand.vmem [shape: f32[20,7,50], index: 11, kind: input, shape index: {}]
  %s12 = inlined_call_operand.vmem [shape: f32[20,7,2], index: 12, kind: input, shape index: {}]
  %s13 = inlined_call_operand.hbm [shape: f32[1,1], index: 13, kind: output, shape index: {0}]
  %s14 = inlined_call_operand.vmem [shape: f32[7,1], index: 14, kind: output, shape index: {1}]
  %15 = xla_tuple %s13, %s14
  %s16 = sld [smem:[#allocation0]]
  $region70: #{tpu_custom_call.1} parent=0
    _
  %s18 = ssub.s32 1, %s16
  %s19 = scalar_select 0, %s18, %s16
  $region1: #{tpu_custom_call.1} parent=0
    #allocation3 [shape = 'u8[512]{0}', space=vmem, size = 0x400, scoped, tag = 'output window, operand 0, single buffered']
    #allocation4 [shape = 's32[1]{0}', space=sflag, size = 0x4, scoped, tag = 'scoped memory for tpu_custom_call.1']
    %20 = vsyncpa [#allocation4], 0
    // Predicated region
    $region2: #{tpu_custom_call.1} parent=1 // pred_check
      _
    $region3: #{tpu_custom_call.1} parent=1 // pred_check_branch
      %22 = sbr.rel (0) target = $region5
    $region4: #{tpu_custom_call.1} parent=1 // pred_region
      _
    $region5: #{tpu_custom_call.1} parent=1 // pred_fallthru
      _
    // Predicated region
    $region6: #{tpu_custom_call.1} parent=1 // pred_check
      _
    $region7: #{tpu_custom_call.1} parent=1 // pred_check_branch
      %24 = sbr.rel (0) target = $region9
    $region8: #{tpu_custom_call.1} parent=1 // pred_region
      _
    $region9: #{tpu_custom_call.1} parent=1 // pred_fallthru
      _
    // Predicated region
    $region10: #{tpu_custom_call.1} parent=1 // pred_check
      _
    $region11: #{tpu_custom_call.1} parent=1 // pred_check_branch
      %26 = sbr.rel (0) target = $region13
    $region12: #{tpu_custom_call.1} parent=1 // pred_region
      _
    $region13: #{tpu_custom_call.1} parent=1 // pred_fallthru
      _
    // Predicated region
    $region14: #{tpu_custom_call.1} parent=1 // pred_check
      _
    $region15: #{tpu_custom_call.1} parent=1 // pred_check_branch
      %28 = sbr.rel (0) target = $region17
    $region16: #{tpu_custom_call.1} parent=1 // pred_region
      _
    $region17: #{tpu_custom_call.1} parent=1 // pred_fallthru
      _
    // Predicated region
    $region18: #{tpu_custom_call.1} parent=1 // pred_check
      _
    $region19: #{tpu_custom_call.1} parent=1 // pred_check_branch
      %30 = sbr.rel (0) target = $region21
    $region20: #{tpu_custom_call.1} parent=1 // pred_region
      _
    $region21: #{tpu_custom_call.1} parent=1 // pred_fallthru
      _
    // Predicated region
    $region22: #{tpu_custom_call.1} parent=1 // pred_check
      _
    $region23: #{tpu_custom_call.1} parent=1 // pred_check_branch
      %32 = sbr.rel (0) target = $region25
    $region24: #{tpu_custom_call.1} parent=1 // pred_region
      _
    $region25: #{tpu_custom_call.1} parent=1 // pred_fallthru
      _
    // Predicated region
    $region26: #{tpu_custom_call.1} parent=1 // pred_check
      _
    $region27: #{tpu_custom_call.1} parent=1 // pred_check_branch
      %34 = sbr.rel (0) target = $region29
    $region28: #{tpu_custom_call.1} parent=1 // pred_region
      _
    $region29: #{tpu_custom_call.1} parent=1 // pred_fallthru
      _
    // Predicated region
    $region30: #{tpu_custom_call.1} parent=1 // pred_check
      _
    $region31: #{tpu_custom_call.1} parent=1 // pred_check_branch
      %36 = sbr.rel (0) target = $region33
    $region32: #{tpu_custom_call.1} parent=1 // pred_region
      _
    $region33: #{tpu_custom_call.1} parent=1 // pred_fallthru
      _
    // Predicated region
    $region34: #{tpu_custom_call.1} parent=1 // pred_check
      _
    $region35: #{tpu_custom_call.1} parent=1 // pred_check_branch
      %38 = sbr.rel (0) target = $region37
    $region36: #{tpu_custom_call.1} parent=1 // pred_region
      _
    $region37: #{tpu_custom_call.1} parent=1 // pred_fallthru
      _
    // Predicated region
    $region38: #{tpu_custom_call.1} parent=1 // pred_check
      _
    $region39: #{tpu_custom_call.1} parent=1 // pred_check_branch
      %40 = sbr.rel (0) target = $region41
    $region40: #{tpu_custom_call.1} parent=1 // pred_region
      _
    $region41: #{tpu_custom_call.1} parent=1 // pred_fallthru
      _
    // Predicated region
    $region42: #{tpu_custom_call.1} parent=1 // pred_check
      _
    $region43: #{tpu_custom_call.1} parent=1 // pred_check_branch
      %42 = sbr.rel (0) target = $region45
    $region44: #{tpu_custom_call.1} parent=1 // pred_region
      _
    $region45: #{tpu_custom_call.1} parent=1 // pred_fallthru
      _
    // Predicated region
    $region46: #{tpu_custom_call.1} parent=1 // pred_check
      _
    $region47: #{tpu_custom_call.1} parent=1 // pred_check_branch
      %44 = sbr.rel (0) target = $region49
    $region48: #{tpu_custom_call.1} parent=1 // pred_region
      _
    $region49: #{tpu_custom_call.1} parent=1 // pred_fallthru
      _
    // Predicated region
    $region50: #{tpu_custom_call.1} parent=1 // pred_check
      _
    $region51: #{tpu_custom_call.1} parent=1 // pred_check_branch
      %46 = sbr.rel (0) target = $region53
    $region52: #{tpu_custom_call.1} parent=1 // pred_region
      _
    $region53: #{tpu_custom_call.1} parent=1 // pred_fallthru
      _
    %v47 = vld [vmem:[%s3] sm:$0xff]
    %v48 = vld [vmem:[%s3 + $0x8] sm:$0xff]
    %v49 = vld [vmem:[%s3 + $0x10] sm:$0xff]
    %v50 = vld [vmem:[%s3 + $0x18] sm:$0xff]
    %v51 = vld [vmem:[%s3 + $0x20] sm:$0xff]
    %v52 = vld [vmem:[%s3 + $0x28] sm:$0xff]
    %v53 = vld [vmem:[%s3 + $0x30] sm:$0x3]
    %v54 = vld [vmem:[%s9] sm:$0x1]
    %v55 = vld [vmem:[%s0 + $0x1] sm:$0x3f]
    %v56 = vld [vmem:[%s6] sm:$0x1]
    %58 = vset.pattern.permute.xlu0 0
    %59 = vperm.xlu0 %58, %v55
    %v60 = vpop.permute.xlu0 %59
    %v62 = vlaneseq
    %v63 = vshrl.u32 %v62, 7
    %v64 = vsub.s32 0, %v63
    %v65 = vrot.slane %v56, %v64
    %v66 = vmul.f32 %v60, %v65
    %v67 = vld [vmem:[%s6 + $0x1] sm:$0x1]
    %68 = vset.pattern.permute.xlu0 1
    %69 = vperm.xlu0 %68, %v55
    %v70 = vpop.permute.xlu0 %69
    %v72 = vlaneseq
    %v73 = vshrl.u32 %v72, 7
    %v74 = vsub.s32 0, %v73
    %v75 = vrot.slane %v67, %v74
    %v76 = vmul.f32 %v70, %v75
    %v77 = vadd.f32 %v66, %v76
    %v79 = vlaneseq
    %v80 = vshrl.u32 %v79, 7
    %v81 = vsub.s32 0, %v80
    %v82 = vrot.slane %v54, %v81
    %v84 = vadd.f32 %v77, %v82
    %v85 = vld [vmem:[%s10] sm:$0x1]
    %vm86 = vcmask 401408
    %87 = vst.msk [vmem:[#allocation2] sm:$0x1] %vm86, %v85
    %vm88 = vcmask 408576
    %v90 = vsel %vm88, %v85, 0
    %vm92 = vcmask 1041408
    %v94 = vsel %vm92, %v53, 0
    %96 = vmatprep.subr.mxu0 0.0
    %97 = vmatpush1.msra.mxu0 %v47
    %98 = vmatprep.subr.mxu0 0.0
    %99 = vmatpush1.msra.mxu0 %v48
    %100 = vmatprep.subr.mxu0 0.0
    %101 = vmatpush1.msra.mxu0 %v49
    %102 = vmatprep.subr.mxu0 0.0
    %103 = vmatpush1.msra.mxu0 %v50
    %104 = vmatprep.subr.mxu0 0.0
    %105 = vmatpush1.msra.mxu0 %v51
    %106 = vmatprep.subr.mxu0 0.0
    %107 = vmatpush1.msra.mxu0 %v52
    %108 = vmatprep.subr.mxu0 0.0
    %109 = vmatpush1.msra.mxu0 %v94
    %110 = vmatprep.subr.mxu0 0.0
    %111 = vmatpush1.msra.mxu0 0.0
    %112 = vmatprep.subr.mxu0 0.0
    %113 = vmatpush1.msra.mxu0 0.0
    %114 = vmatprep.subr.mxu0 0.0
    %115 = vmatpush1.msra.mxu0 0.0
    %116 = vmatprep.subr.mxu0 0.0
    %117 = vmatpush1.msra.mxu0 0.0
    %118 = vmatprep.subr.mxu0 0.0
    %119 = vmatpush1.msra.mxu0 0.0
    %120 = vmatprep.subr.mxu0 0.0
    %121 = vmatpush1.msra.mxu0 0.0
    %122 = vmatprep.subr.mxu0 0.0
    %123 = vmatpush1.msra.mxu0 0.0
    %124 = vmatprep.subr.mxu0 0.0
    %125 = vmatpush1.msra.mxu0 0.0
    %126 = vmatprep.subr.mxu0 0.0
    %127 = vmatpush1.msra.mxu0 0.0
    %128 = vmatprep.subr.mxu0 0.0
    %129 = vmatpush1.msra.mxu0 0.0
    %130 = vmatprep.subr.mxu0 0.0
    %131 = vmatpush1.msra.mxu0 0.0
    %132 = vmatprep.subr.mxu0 0.0
    %133 = vmatpush1.msra.mxu0 0.0
    %134 = vmatprep.subr.mxu0 0.0
    %135 = vmatpush1.msra.mxu0 0.0
    %136 = vmatprep.subr.mxu0 0.0
    %137 = vmatpush1.msra.mxu0 0.0
    %138 = vmatprep.subr.mxu0 0.0
    %139 = vmatpush1.msra.mxu0 0.0
    %140 = vmatprep.subr.mxu0 0.0
    %141 = vmatpush1.msra.mxu0 0.0
    %142 = vmatprep.subr.mxu0 0.0
    %143 = vmatpush1.msra.mxu0 0.0
    %144 = vmatprep.subr.mxu0 0.0
    %145 = vmatpush1.msra.mxu0 0.0
    %146 = vmatprep.subr.mxu0 0.0
    %147 = vmatpush1.msra.mxu0 0.0
    %148 = vmatprep.subr.mxu0 0.0
    %149 = vmatpush1.msra.mxu0 0.0
    %150 = vmatprep.subr.mxu0 0.0
    %151 = vmatpush1.msra.mxu0 0.0
    %152 = vmatprep.subr.mxu0 0.0
    %153 = vmatpush1.msra.mxu0 0.0
    %154 = vmatprep.subr.mxu0 0.0
    %155 = vmatpush1.msra.mxu0 0.0
    %156 = vmatprep.subr.mxu0 0.0
    %157 = vmatpush1.msra.mxu0 0.0
    %158 = vmatprep.subr.mxu0 0.0
    %159 = vmatpush1.msra.mxu0 0.0
    %160 = vmatprep.mubr.f32.mxu0 0.0
    %161 = vmatmul.mubr.f32.gmra.mrb[0].mxu0 %v90
    %v162 = vpop.f32.mrb[0].mxu0
    %v163 = vadd.f32 %v84, %v162
    %v164 = vpop.f32.mrb[0].mxu0
    %165 = vdwg.mxu0
    %v166 = vtanh.pop %v163
    %167 = vst.msk [vmem:[#allocation2 + $0x1] sm:$0x1] %vm86, %v166
    %v169 = vrot.slane %v84, 1
    %v172 = vsel %vm88, %v166, 0
    %174 = vmatprep.subr.mxu0 0.0
    %175 = vmatpush1.msra.mxu0 %v47
    %176 = vmatprep.subr.mxu0 0.0
    %177 = vmatpush1.msra.mxu0 %v48
    %178 = vmatprep.subr.mxu0 0.0
    %179 = vmatpush1.msra.mxu0 %v49
    %180 = vmatprep.subr.mxu0 0.0
    %181 = vmatpush1.msra.mxu0 %v50
    %182 = vmatprep.subr.mxu0 0.0
    %183 = vmatpush1.msra.mxu0 %v51
    %184 = vmatprep.subr.mxu0 0.0
    %185 = vmatpush1.msra.mxu0 %v52
    %186 = vmatprep.subr.mxu0 0.0
    %187 = vmatpush1.msra.mxu0 %v94
    %188 = vmatprep.subr.mxu0 0.0
    %189 = vmatpush1.msra.mxu0 0.0
    %190 = vmatprep.subr.mxu0 0.0
    %191 = vmatpush1.msra.mxu0 0.0
    %192 = vmatprep.subr.mxu0 0.0
    %193 = vmatpush1.msra.mxu0 0.0
    %194 = vmatprep.subr.mxu0 0.0
    %195 = vmatpush1.msra.mxu0 0.0
    %196 = vmatprep.subr.mxu0 0.0
    %197 = vmatpush1.msra.mxu0 0.0
    %198 = vmatprep.subr.mxu0 0.0
    %199 = vmatpush1.msra.mxu0 0.0
    %200 = vmatprep.subr.mxu0 0.0
    %201 = vmatpush1.msra.mxu0 0.0
    %202 = vmatprep.subr.mxu0 0.0
    %203 = vmatpush1.msra.mxu0 0.0
    %204 = vmatprep.subr.mxu0 0.0
    %205 = vmatpush1.msra.mxu0 0.0
    %206 = vmatprep.subr.mxu0 0.0
    %207 = vmatpush1.msra.mxu0 0.0
    %208 = vmatprep.subr.mxu0 0.0
    %209 = vmatpush1.msra.mxu0 0.0
    %210 = vmatprep.subr.mxu0 0.0
    %211 = vmatpush1.msra.mxu0 0.0
    %212 = vmatprep.subr.mxu0 0.0
    %213 = vmatpush1.msra.mxu0 0.0
    %214 = vmatprep.subr.mxu0 0.0
    %215 = vmatpush1.msra.mxu0 0.0
    %216 = vmatprep.subr.mxu0 0.0
    %217 = vmatpush1.msra.mxu0 0.0
    %218 = vmatprep.subr.mxu0 0.0
    %219 = vmatpush1.msra.mxu0 0.0
    %220 = vmatprep.subr.mxu0 0.0
    %221 = vmatpush1.msra.mxu0 0.0
    %222 = vmatprep.subr.mxu0 0.0
    %223 = vmatpush1.msra.mxu0 0.0
    %224 = vmatprep.subr.mxu0 0.0
    %225 = vmatpush1.msra.mxu0 0.0
    %226 = vmatprep.subr.mxu0 0.0
    %227 = vmatpush1.msra.mxu0 0.0
    %228 = vmatprep.subr.mxu0 0.0
    %229 = vmatpush1.msra.mxu0 0.0
    %230 = vmatprep.subr.mxu0 0.0
    %231 = vmatpush1.msra.mxu0 0.0
    %232 = vmatprep.subr.mxu0 0.0
    %233 = vmatpush1.msra.mxu0 0.0
    %234 = vmatprep.subr.mxu0 0.0
    %235 = vmatpush1.msra.mxu0 0.0
    %236 = vmatprep.subr.mxu0 0.0
    %237 = vmatpush1.msra.mxu0 0.0
    %238 = vmatprep.mubr.f32.mxu0 0.0
    %239 = vmatmul.mubr.f32.gmra.mrb[0].mxu0 %v172
    %v240 = vpop.f32.mrb[0].mxu0
    %v241 = vadd.f32 %v169, %v240
    %v242 = vpop.f32.mrb[0].mxu0
    %243 = vdwg.mxu0
    %v244 = vtanh.pop %v241
    %245 = vst.msk [vmem:[#allocation2 + $0x2] sm:$0x1] %vm86, %v244
    %v246 = vrot.slane %v84, 2
    %v249 = vsel %vm88, %v244, 0
    %251 = vmatprep.subr.mxu0 0.0
    %252 = vmatpush1.msra.mxu0 %v47
    %253 = vmatprep.subr.mxu0 0.0
    %254 = vmatpush1.msra.mxu0 %v48
    %255 = vmatprep.subr.mxu0 0.0
    %256 = vmatpush1.msra.mxu0 %v49
    %257 = vmatprep.subr.mxu0 0.0
    %258 = vmatpush1.msra.mxu0 %v50
    %259 = vmatprep.subr.mxu0 0.0
    %260 = vmatpush1.msra.mxu0 %v51
    %261 = vmatprep.subr.mxu0 0.0
    %262 = vmatpush1.msra.mxu0 %v52
    %263 = vmatprep.subr.mxu0 0.0
    %264 = vmatpush1.msra.mxu0 %v94
    %265 = vmatprep.subr.mxu0 0.0
    %266 = vmatpush1.msra.mxu0 0.0
    %267 = vmatprep.subr.mxu0 0.0
    %268 = vmatpush1.msra.mxu0 0.0
    %269 = vmatprep.subr.mxu0 0.0
    %270 = vmatpush1.msra.mxu0 0.0
    %271 = vmatprep.subr.mxu0 0.0
    %272 = vmatpush1.msra.mxu0 0.0
    %273 = vmatprep.subr.mxu0 0.0
    %274 = vmatpush1.msra.mxu0 0.0
    %275 = vmatprep.subr.mxu0 0.0
    %276 = vmatpush1.msra.mxu0 0.0
    %277 = vmatprep.subr.mxu0 0.0
    %278 = vmatpush1.msra.mxu0 0.0
    %279 = vmatprep.subr.mxu0 0.0
    %280 = vmatpush1.msra.mxu0 0.0
    %281 = vmatprep.subr.mxu0 0.0
    %282 = vmatpush1.msra.mxu0 0.0
    %283 = vmatprep.subr.mxu0 0.0
    %284 = vmatpush1.msra.mxu0 0.0
    %285 = vmatprep.subr.mxu0 0.0
    %286 = vmatpush1.msra.mxu0 0.0
    %287 = vmatprep.subr.mxu0 0.0
    %288 = vmatpush1.msra.mxu0 0.0
    %289 = vmatprep.subr.mxu0 0.0
    %290 = vmatpush1.msra.mxu0 0.0
    %291 = vmatprep.subr.mxu0 0.0
    %292 = vmatpush1.msra.mxu0 0.0
    %293 = vmatprep.subr.mxu0 0.0
    %294 = vmatpush1.msra.mxu0 0.0
    %295 = vmatprep.subr.mxu0 0.0
    %296 = vmatpush1.msra.mxu0 0.0
    %297 = vmatprep.subr.mxu0 0.0
    %298 = vmatpush1.msra.mxu0 0.0
    %299 = vmatprep.subr.mxu0 0.0
    %300 = vmatpush1.msra.mxu0 0.0
    %301 = vmatprep.subr.mxu0 0.0
    %302 = vmatpush1.msra.mxu0 0.0
    %303 = vmatprep.subr.mxu0 0.0
    %304 = vmatpush1.msra.mxu0 0.0
    %305 = vmatprep.subr.mxu0 0.0
    %306 = vmatpush1.msra.mxu0 0.0
    %307 = vmatprep.subr.mxu0 0.0
    %308 = vmatpush1.msra.mxu0 0.0
    %309 = vmatprep.subr.mxu0 0.0
    %310 = vmatpush1.msra.mxu0 0.0
    %311 = vmatprep.subr.mxu0 0.0
    %312 = vmatpush1.msra.mxu0 0.0
    %313 = vmatprep.subr.mxu0 0.0
    %314 = vmatpush1.msra.mxu0 0.0
    %315 = vmatprep.mubr.f32.mxu0 0.0
    %316 = vmatmul.mubr.f32.gmra.mrb[0].mxu0 %v249
    %v317 = vpop.f32.mrb[0].mxu0
    %v318 = vadd.f32 %v246, %v317
    %v319 = vpop.f32.mrb[0].mxu0
    %320 = vdwg.mxu0
    %v321 = vtanh.pop %v318
    %322 = vst.msk [vmem:[#allocation2 + $0x3] sm:$0x1] %vm86, %v321
    %v323 = vrot.slane %v84, 3
    %v326 = vsel %vm88, %v321, 0
    %328 = vmatprep.subr.mxu0 0.0
    %329 = vmatpush1.msra.mxu0 %v47
    %330 = vmatprep.subr.mxu0 0.0
    %331 = vmatpush1.msra.mxu0 %v48
    %332 = vmatprep.subr.mxu0 0.0
    %333 = vmatpush1.msra.mxu0 %v49
    %334 = vmatprep.subr.mxu0 0.0
    %335 = vmatpush1.msra.mxu0 %v50
    %336 = vmatprep.subr.mxu0 0.0
    %337 = vmatpush1.msra.mxu0 %v51
    %338 = vmatprep.subr.mxu0 0.0
    %339 = vmatpush1.msra.mxu0 %v52
    %340 = vmatprep.subr.mxu0 0.0
    %341 = vmatpush1.msra.mxu0 %v94
    %342 = vmatprep.subr.mxu0 0.0
    %343 = vmatpush1.msra.mxu0 0.0
    %344 = vmatprep.subr.mxu0 0.0
    %345 = vmatpush1.msra.mxu0 0.0
    %346 = vmatprep.subr.mxu0 0.0
    %347 = vmatpush1.msra.mxu0 0.0
    %348 = vmatprep.subr.mxu0 0.0
    %349 = vmatpush1.msra.mxu0 0.0
    %350 = vmatprep.subr.mxu0 0.0
    %351 = vmatpush1.msra.mxu0 0.0
    %352 = vmatprep.subr.mxu0 0.0
    %353 = vmatpush1.msra.mxu0 0.0
    %354 = vmatprep.subr.mxu0 0.0
    %355 = vmatpush1.msra.mxu0 0.0
    %356 = vmatprep.subr.mxu0 0.0
    %357 = vmatpush1.msra.mxu0 0.0
    %358 = vmatprep.subr.mxu0 0.0
    %359 = vmatpush1.msra.mxu0 0.0
    %360 = vmatprep.subr.mxu0 0.0
    %361 = vmatpush1.msra.mxu0 0.0
    %362 = vmatprep.subr.mxu0 0.0
    %363 = vmatpush1.msra.mxu0 0.0
    %364 = vmatprep.subr.mxu0 0.0
    %365 = vmatpush1.msra.mxu0 0.0
    %366 = vmatprep.subr.mxu0 0.0
    %367 = vmatpush1.msra.mxu0 0.0
    %368 = vmatprep.subr.mxu0 0.0
    %369 = vmatpush1.msra.mxu0 0.0
    %370 = vmatprep.subr.mxu0 0.0
    %371 = vmatpush1.msra.mxu0 0.0
    %372 = vmatprep.subr.mxu0 0.0
    %373 = vmatpush1.msra.mxu0 0.0
    %374 = vmatprep.subr.mxu0 0.0
    %375 = vmatpush1.msra.mxu0 0.0
    %376 = vmatprep.subr.mxu0 0.0
    %377 = vmatpush1.msra.mxu0 0.0
    %378 = vmatprep.subr.mxu0 0.0
    %379 = vmatpush1.msra.mxu0 0.0
    %380 = vmatprep.subr.mxu0 0.0
    %381 = vmatpush1.msra.mxu0 0.0
    %382 = vmatprep.subr.mxu0 0.0
    %383 = vmatpush1.msra.mxu0 0.0
    %384 = vmatprep.subr.mxu0 0.0
    %385 = vmatpush1.msra.mxu0 0.0
    %386 = vmatprep.subr.mxu0 0.0
    %387 = vmatpush1.msra.mxu0 0.0
    %388 = vmatprep.subr.mxu0 0.0
    %389 = vmatpush1.msra.mxu0 0.0
    %390 = vmatprep.subr.mxu0 0.0
    %391 = vmatpush1.msra.mxu0 0.0
    %392 = vmatprep.mubr.f32.mxu0 0.0
    %393 = vmatmul.mubr.f32.gmra.mrb[0].mxu0 %v326
    %v394 = vpop.f32.mrb[0].mxu0
    %v395 = vadd.f32 %v323, %v394
    %v396 = vpop.f32.mrb[0].mxu0
    %397 = vdwg.mxu0
    %v398 = vtanh.pop %v395
    %399 = vst.msk [vmem:[#allocation2 + $0x4] sm:$0x1] %vm86, %v398
    %v400 = vrot.slane %v84, 4
    %v403 = vsel %vm88, %v398, 0
    %405 = vmatprep.subr.mxu0 0.0
    %406 = vmatpush1.msra.mxu0 %v47
    %407 = vmatprep.subr.mxu0 0.0
    %408 = vmatpush1.msra.mxu0 %v48
    %409 = vmatprep.subr.mxu0 0.0
    %410 = vmatpush1.msra.mxu0 %v49
    %411 = vmatprep.subr.mxu0 0.0
    %412 = vmatpush1.msra.mxu0 %v50
    %413 = vmatprep.subr.mxu0 0.0
    %414 = vmatpush1.msra.mxu0 %v51
    %415 = vmatprep.subr.mxu0 0.0
    %416 = vmatpush1.msra.mxu0 %v52
    %417 = vmatprep.subr.mxu0 0.0
    %418 = vmatpush1.msra.mxu0 %v94
    %419 = vmatprep.subr.mxu0 0.0
    %420 = vmatpush1.msra.mxu0 0.0
    %421 = vmatprep.subr.mxu0 0.0
    %422 = vmatpush1.msra.mxu0 0.0
    %423 = vmatprep.subr.mxu0 0.0
    %424 = vmatpush1.msra.mxu0 0.0
    %425 = vmatprep.subr.mxu0 0.0
    %426 = vmatpush1.msra.mxu0 0.0
    %427 = vmatprep.subr.mxu0 0.0
    %428 = vmatpush1.msra.mxu0 0.0
    %429 = vmatprep.subr.mxu0 0.0
    %430 = vmatpush1.msra.mxu0 0.0
    %431 = vmatprep.subr.mxu0 0.0
    %432 = vmatpush1.msra.mxu0 0.0
    %433 = vmatprep.subr.mxu0 0.0
    %434 = vmatpush1.msra.mxu0 0.0
    %435 = vmatprep.subr.mxu0 0.0
    %436 = vmatpush1.msra.mxu0 0.0
    %437 = vmatprep.subr.mxu0 0.0
    %438 = vmatpush1.msra.mxu0 0.0
    %439 = vmatprep.subr.mxu0 0.0
    %440 = vmatpush1.msra.mxu0 0.0
    %441 = vmatprep.subr.mxu0 0.0
    %442 = vmatpush1.msra.mxu0 0.0
    %443 = vmatprep.subr.mxu0 0.0
    %444 = vmatpush1.msra.mxu0 0.0
    %445 = vmatprep.subr.mxu0 0.0
    %446 = vmatpush1.msra.mxu0 0.0
    %447 = vmatprep.subr.mxu0 0.0
    %448 = vmatpush1.msra.mxu0 0.0
    %449 = vmatprep.subr.mxu0 0.0
    %450 = vmatpush1.msra.mxu0 0.0
    %451 = vmatprep.subr.mxu0 0.0
    %452 = vmatpush1.msra.mxu0 0.0
    %453 = vmatprep.subr.mxu0 0.0
    %454 = vmatpush1.msra.mxu0 0.0
    %455 = vmatprep.subr.mxu0 0.0
    %456 = vmatpush1.msra.mxu0 0.0
    %457 = vmatprep.subr.mxu0 0.0
    %458 = vmatpush1.msra.mxu0 0.0
    %459 = vmatprep.subr.mxu0 0.0
    %460 = vmatpush1.msra.mxu0 0.0
    %461 = vmatprep.subr.mxu0 0.0
    %462 = vmatpush1.msra.mxu0 0.0
    %463 = vmatprep.subr.mxu0 0.0
    %464 = vmatpush1.msra.mxu0 0.0
    %465 = vmatprep.subr.mxu0 0.0
    %466 = vmatpush1.msra.mxu0 0.0
    %467 = vmatprep.subr.mxu0 0.0
    %468 = vmatpush1.msra.mxu0 0.0
    %469 = vmatprep.mubr.f32.mxu0 0.0
    %470 = vmatmul.mubr.f32.gmra.mrb[0].mxu0 %v403
    %v471 = vpop.f32.mrb[0].mxu0
    %v472 = vadd.f32 %v400, %v471
    %v473 = vpop.f32.mrb[0].mxu0
    %474 = vdwg.mxu0
    %v475 = vtanh.pop %v472
    %476 = vst.msk [vmem:[#allocation2 + $0x5] sm:$0x1] %vm86, %v475
    %v477 = vrot.slane %v84, 5
    %v480 = vsel %vm88, %v475, 0
    %482 = vmatprep.subr.mxu0 0.0
    %483 = vmatpush1.msra.mxu0 %v47
    %484 = vmatprep.subr.mxu0 0.0
    %485 = vmatpush1.msra.mxu0 %v48
    %486 = vmatprep.subr.mxu0 0.0
    %487 = vmatpush1.msra.mxu0 %v49
    %488 = vmatprep.subr.mxu0 0.0
    %489 = vmatpush1.msra.mxu0 %v50
    %490 = vmatprep.subr.mxu0 0.0
    %491 = vmatpush1.msra.mxu0 %v51
    %492 = vmatprep.subr.mxu0 0.0
    %493 = vmatpush1.msra.mxu0 %v52
    %494 = vmatprep.subr.mxu0 0.0
    %495 = vmatpush1.msra.mxu0 %v94
    %496 = vmatprep.subr.mxu0 0.0
    %497 = vmatpush1.msra.mxu0 0.0
    %498 = vmatprep.subr.mxu0 0.0
    %499 = vmatpush1.msra.mxu0 0.0
    %500 = vmatprep.subr.mxu0 0.0
    %501 = vmatpush1.msra.mxu0 0.0
    %502 = vmatprep.subr.mxu0 0.0
    %503 = vmatpush1.msra.mxu0 0.0
    %504 = vmatprep.subr.mxu0 0.0
    %505 = vmatpush1.msra.mxu0 0.0
    %506 = vmatprep.subr.mxu0 0.0
    %507 = vmatpush1.msra.mxu0 0.0
    %508 = vmatprep.subr.mxu0 0.0
    %509 = vmatpush1.msra.mxu0 0.0
    %510 = vmatprep.subr.mxu0 0.0
    %511 = vmatpush1.msra.mxu0 0.0
    %512 = vmatprep.subr.mxu0 0.0
    %513 = vmatpush1.msra.mxu0 0.0
    %514 = vmatprep.subr.mxu0 0.0
    %515 = vmatpush1.msra.mxu0 0.0
    %516 = vmatprep.subr.mxu0 0.0
    %517 = vmatpush1.msra.mxu0 0.0
    %518 = vmatprep.subr.mxu0 0.0
    %519 = vmatpush1.msra.mxu0 0.0
    %520 = vmatprep.subr.mxu0 0.0
    %521 = vmatpush1.msra.mxu0 0.0
    %522 = vmatprep.subr.mxu0 0.0
    %523 = vmatpush1.msra.mxu0 0.0
    %524 = vmatprep.subr.mxu0 0.0
    %525 = vmatpush1.msra.mxu0 0.0
    %526 = vmatprep.subr.mxu0 0.0
    %527 = vmatpush1.msra.mxu0 0.0
    %528 = vmatprep.subr.mxu0 0.0
    %529 = vmatpush1.msra.mxu0 0.0
    %530 = vmatprep.subr.mxu0 0.0
    %531 = vmatpush1.msra.mxu0 0.0
    %532 = vmatprep.subr.mxu0 0.0
    %533 = vmatpush1.msra.mxu0 0.0
    %534 = vmatprep.subr.mxu0 0.0
    %535 = vmatpush1.msra.mxu0 0.0
    %536 = vmatprep.subr.mxu0 0.0
    %537 = vmatpush1.msra.mxu0 0.0
    %538 = vmatprep.subr.mxu0 0.0
    %539 = vmatpush1.msra.mxu0 0.0
    %540 = vmatprep.subr.mxu0 0.0
    %541 = vmatpush1.msra.mxu0 0.0
    %542 = vmatprep.subr.mxu0 0.0
    %543 = vmatpush1.msra.mxu0 0.0
    %544 = vmatprep.subr.mxu0 0.0
    %545 = vmatpush1.msra.mxu0 0.0
    %546 = vmatprep.mubr.f32.mxu0 0.0
    %547 = vmatmul.mubr.f32.gmra.mrb[0].mxu0 %v480
    %v548 = vpop.f32.mrb[0].mxu0
    %v549 = vadd.f32 %v477, %v548
    %v550 = vpop.f32.mrb[0].mxu0
    %551 = vdwg.mxu0
    %v552 = vtanh.pop %v549
    %553 = vst.msk [vmem:[#allocation2 + $0x6] sm:$0x1] %vm86, %v552
    %v554 = vld [vmem:[#allocation2] sm:$0x7f]
    %v555 = vld [vmem:[%s5] sm:$0xff]
    %v556 = vld [vmem:[%s5 + $0x8] sm:$0xff]
    %v557 = vld [vmem:[%s5 + $0x10] sm:$0xff]
    %v558 = vld [vmem:[%s5 + $0x18] sm:$0xff]
    %v559 = vld [vmem:[%s5 + $0x20] sm:$0xff]
    %v560 = vld [vmem:[%s5 + $0x28] sm:$0xff]
    %v561 = vld [vmem:[%s5 + $0x30] sm:$0x3]
    %v562 = vld [vmem:[%s8] sm:$0x1]
    %v564 = vlaneseq
    %v565 = vshrl.u32 %v564, 7
    %v566 = vsub.s32 0, %v565
    %v567 = vrot.slane %v562, %v566
    %v570 = vsel %vm88, %v554, 0
    %v573 = vsel %vm92, %v561, 0
    %575 = vmatprep.subr.mxu0 0.0
    %576 = vmatpush1.msra.mxu0 %v555
    %577 = vmatprep.subr.mxu0 0.0
    %578 = vmatpush1.msra.mxu0 %v556
    %579 = vmatprep.subr.mxu0 0.0
    %580 = vmatpush1.msra.mxu0 %v557
    %581 = vmatprep.subr.mxu0 0.0
    %582 = vmatpush1.msra.mxu0 %v558
    %583 = vmatprep.subr.mxu0 0.0
    %584 = vmatpush1.msra.mxu0 %v559
    %585 = vmatprep.subr.mxu0 0.0
    %586 = vmatpush1.msra.mxu0 %v560
    %587 = vmatprep.subr.mxu0 0.0
    %588 = vmatpush1.msra.mxu0 %v573
    %589 = vmatprep.subr.mxu0 0.0
    %590 = vmatpush1.msra.mxu0 0.0
    %591 = vmatprep.subr.mxu0 0.0
    %592 = vmatpush1.msra.mxu0 0.0
    %593 = vmatprep.subr.mxu0 0.0
    %594 = vmatpush1.msra.mxu0 0.0
    %595 = vmatprep.subr.mxu0 0.0
    %596 = vmatpush1.msra.mxu0 0.0
    %597 = vmatprep.subr.mxu0 0.0
    %598 = vmatpush1.msra.mxu0 0.0
    %599 = vmatprep.subr.mxu0 0.0
    %600 = vmatpush1.msra.mxu0 0.0
    %601 = vmatprep.subr.mxu0 0.0
    %602 = vmatpush1.msra.mxu0 0.0
    %603 = vmatprep.subr.mxu0 0.0
    %604 = vmatpush1.msra.mxu0 0.0
    %605 = vmatprep.subr.mxu0 0.0
    %606 = vmatpush1.msra.mxu0 0.0
    %607 = vmatprep.subr.mxu0 0.0
    %608 = vmatpush1.msra.mxu0 0.0
    %609 = vmatprep.subr.mxu0 0.0
    %610 = vmatpush1.msra.mxu0 0.0
    %611 = vmatprep.subr.mxu0 0.0
    %612 = vmatpush1.msra.mxu0 0.0
    %613 = vmatprep.subr.mxu0 0.0
    %614 = vmatpush1.msra.mxu0 0.0
    %615 = vmatprep.subr.mxu0 0.0
    %616 = vmatpush1.msra.mxu0 0.0
    %617 = vmatprep.subr.mxu0 0.0
    %618 = vmatpush1.msra.mxu0 0.0
    %619 = vmatprep.subr.mxu0 0.0
    %620 = vmatpush1.msra.mxu0 0.0
    %621 = vmatprep.subr.mxu0 0.0
    %622 = vmatpush1.msra.mxu0 0.0
    %623 = vmatprep.subr.mxu0 0.0
    %624 = vmatpush1.msra.mxu0 0.0
    %625 = vmatprep.subr.mxu0 0.0
    %626 = vmatpush1.msra.mxu0 0.0
    %627 = vmatprep.subr.mxu0 0.0
    %628 = vmatpush1.msra.mxu0 0.0
    %629 = vmatprep.subr.mxu0 0.0
    %630 = vmatpush1.msra.mxu0 0.0
    %631 = vmatprep.subr.mxu0 0.0
    %632 = vmatpush1.msra.mxu0 0.0
    %633 = vmatprep.subr.mxu0 0.0
    %634 = vmatpush1.msra.mxu0 0.0
    %635 = vmatprep.subr.mxu0 0.0
    %636 = vmatpush1.msra.mxu0 0.0
    %637 = vmatprep.subr.mxu0 0.0
    %638 = vmatpush1.msra.mxu0 0.0
    %639 = vmatprep.mubr.f32.mxu0 0.0
    %640 = vmatmul.mubr.f32.gmra.mrb[0].mxu0 %v570
    %v641 = vpop.f32.mrb[0].mxu0
    %v642 = vadd.f32 %v567, %v641
    %v643 = vpop.f32.mrb[0].mxu0
    %644 = vdwg.mxu0
    %v645 = vld [vmem:[%s4] sm:$0xff]
    %v646 = vld [vmem:[%s4 + $0x8] sm:$0xff]
    %v647 = vld [vmem:[%s4 + $0x10] sm:$0xff]
    %v648 = vld [vmem:[%s4 + $0x18] sm:$0xff]
    %v649 = vld [vmem:[%s4 + $0x20] sm:$0xff]
    %v650 = vld [vmem:[%s4 + $0x28] sm:$0xff]
    %v651 = vld [vmem:[%s4 + $0x30] sm:$0x3]
    %v652 = vld [vmem:[%s7] sm:$0x1]
    %v654 = vlaneseq
    %v655 = vshrl.u32 %v654, 7
    %v656 = vsub.s32 0, %v655
    %v657 = vrot.slane %v652, %v656
    %v660 = vsel %vm92, %v651, 0
    %662 = vmatprep.subr.mxu0 0.0
    %663 = vmatpush1.msra.mxu0 %v645
    %664 = vmatprep.subr.mxu0 0.0
    %665 = vmatpush1.msra.mxu0 %v646
    %666 = vmatprep.subr.mxu0 0.0
    %667 = vmatpush1.msra.mxu0 %v647
    %668 = vmatprep.subr.mxu0 0.0
    %669 = vmatpush1.msra.mxu0 %v648
    %670 = vmatprep.subr.mxu0 0.0
    %671 = vmatpush1.msra.mxu0 %v649
    %672 = vmatprep.subr.mxu0 0.0
    %673 = vmatpush1.msra.mxu0 %v650
    %674 = vmatprep.subr.mxu0 0.0
    %675 = vmatpush1.msra.mxu0 %v660
    %676 = vmatprep.subr.mxu0 0.0
    %677 = vmatpush1.msra.mxu0 0.0
    %678 = vmatprep.subr.mxu0 0.0
    %679 = vmatpush1.msra.mxu0 0.0
    %680 = vmatprep.subr.mxu0 0.0
    %681 = vmatpush1.msra.mxu0 0.0
    %682 = vmatprep.subr.mxu0 0.0
    %683 = vmatpush1.msra.mxu0 0.0
    %684 = vmatprep.subr.mxu0 0.0
    %685 = vmatpush1.msra.mxu0 0.0
    %686 = vmatprep.subr.mxu0 0.0
    %687 = vmatpush1.msra.mxu0 0.0
    %688 = vmatprep.subr.mxu0 0.0
    %689 = vmatpush1.msra.mxu0 0.0
    %690 = vmatprep.subr.mxu0 0.0
    %691 = vmatpush1.msra.mxu0 0.0
    %692 = vmatprep.subr.mxu0 0.0
    %693 = vmatpush1.msra.mxu0 0.0
    %694 = vmatprep.subr.mxu0 0.0
    %695 = vmatpush1.msra.mxu0 0.0
    %696 = vmatprep.subr.mxu0 0.0
    %697 = vmatpush1.msra.mxu0 0.0
    %698 = vmatprep.subr.mxu0 0.0
    %699 = vmatpush1.msra.mxu0 0.0
    %700 = vmatprep.subr.mxu0 0.0
    %701 = vmatpush1.msra.mxu0 0.0
    %702 = vmatprep.subr.mxu0 0.0
    %703 = vmatpush1.msra.mxu0 0.0
    %704 = vmatprep.subr.mxu0 0.0
    %705 = vmatpush1.msra.mxu0 0.0
    %706 = vmatprep.subr.mxu0 0.0
    %707 = vmatpush1.msra.mxu0 0.0
    %708 = vmatprep.subr.mxu0 0.0
    %709 = vmatpush1.msra.mxu0 0.0
    %710 = vmatprep.subr.mxu0 0.0
    %711 = vmatpush1.msra.mxu0 0.0
    %712 = vmatprep.subr.mxu0 0.0
    %713 = vmatpush1.msra.mxu0 0.0
    %714 = vmatprep.subr.mxu0 0.0
    %715 = vmatpush1.msra.mxu0 0.0
    %716 = vmatprep.subr.mxu0 0.0
    %717 = vmatpush1.msra.mxu0 0.0
    %718 = vmatprep.subr.mxu0 0.0
    %719 = vmatpush1.msra.mxu0 0.0
    %720 = vmatprep.subr.mxu0 0.0
    %721 = vmatpush1.msra.mxu0 0.0
    %722 = vmatprep.subr.mxu0 0.0
    %723 = vmatpush1.msra.mxu0 0.0
    %724 = vmatprep.subr.mxu0 0.0
    %725 = vmatpush1.msra.mxu0 0.0
    %726 = vmatprep.mubr.f32.mxu0 0.0
    %727 = vmatmul.mubr.f32.gmra.mrb[0].mxu0 %v570
    %v728 = vpop.f32.mrb[0].mxu0
    %v729 = vadd.f32 %v657, %v728
    %v730 = vpop.f32.mrb[0].mxu0
    %731 = vdwg.mxu0
    %v732 = vld [vmem:[%s0 + $0x1] sm:$0x7f]
    %v733 = vxor.u32 %v729, 2147483648
    %v734 = vmul.f32 %v733, 1.442695
    %v735 = vpow.pop %v734
    %v736 = vadd.f32 %v735, 1.0
    %v737 = vrcp.pop %v736
    %v738 = vmul.f32 1.0, %v737
    %v739 = vsub.f32 0.0, %v732
    %v740 = vadd.f32 %v738, 1e-06
    %v741 = vlog2.pop %v740
    %v742 = vmul.f32 %v741, 0.6931472
    %v743 = vmul.f32 %v739, %v742
    %v744 = vsub.f32 1.0, %v732
    %v745 = vsub.f32 1.000001, %v738
    %v746 = vlog2.pop %v745
    %v747 = vmul.f32 %v746, 0.6931472
    %v748 = vmul.f32 %v744, %v747
    %v749 = vsub.f32 %v743, %v748
    %vm750 = vcmask 14336
    %v751 = vsel %vm750, %v749, 0.0
    %752 = vadd.xlane.f32.xlu0 %v751
    %v753 = vpop.xlane.xlu0 %752
    %vm754 = vcmask 1046528
    %v755 = vsel %vm754, %v753, 0.0
    %v756 = vrot.slane %v755, 4
    %v757 = vadd.f32 %v755, %v756
    %v758 = vrot.slane %v757, 2
    %v759 = vadd.f32 %v757, %v758
    %v760 = vrot.slane %v759, 1
    %v761 = vadd.f32 %v759, %v760
    %v762 = vmul.f32 %v761, 0.125
    %vm763 = vcmask 0
    %764 = vst.msk [vmem:[#allocation3] sm:$0x1] %vm763, %v762
    %v765 = vld [vmem:[%s1] sm:$0x1]
    %v766 = vld [vmem:[%s1 + $0x1] sm:$0x1]
    %v767 = vld [vmem:[%s2] sm:$0xff]
    %v768 = vld [vmem:[%s2 + $0x8] sm:$0xff]
    %v769 = vld [vmem:[%s2 + $0x10] sm:$0xff]
    %v770 = vld [vmem:[%s2 + $0x18] sm:$0xff]
    %v771 = vld [vmem:[%s2 + $0x20] sm:$0xff]
    %v772 = vld [vmem:[%s2 + $0x28] sm:$0xff]
    %v773 = vld [vmem:[%s2 + $0x30] sm:$0x3]
    %v774 = vld [vmem:[%s0] sm:$0x7f]
    %v775 = vld [vmem:[%s11] sm:$0x7f]
    %v776 = vld [vmem:[%s12] sm:$0x7f]
    %778 = vset.pattern.permute.xlu0 0
    %779 = vperm.xlu0 %778, %v774
    %v780 = vpop.permute.xlu0 %779
    %v782 = vlaneseq
    %v783 = vshrl.u32 %v782, 7
    %v784 = vsub.s32 0, %v783
    %v785 = vrot.slane %v765, %v784
    %v786 = vmul.f32 %v780, %v785
    %787 = vset.pattern.permute.xlu0 1
    %788 = vperm.xlu0 %787, %v774
    %v789 = vpop.permute.xlu0 %788
    %v791 = vlaneseq
    %v792 = vshrl.u32 %v791, 7
    %v793 = vsub.s32 0, %v792
    %v794 = vrot.slane %v766, %v793
    %v795 = vmul.f32 %v789, %v794
    %v796 = vadd.f32 %v786, %v795
    %v797 = vadd.f32 %v796, %v642
    %vm798 = vcmp.gt.f32.partialorder %v797, %v775
    %v799 = vsel %vm798, 1.0, 0.0
    %v801 = vsel %vm88, %v799, 0
    %v804 = vsel %vm92, %v773, 0
    %806 = vmatprep.subr.mxu0 0.0
    %807 = vmatpush1.msra.mxu0 %v767
    %808 = vmatprep.subr.mxu0 0.0
    %809 = vmatpush1.msra.mxu0 %v768
    %810 = vmatprep.subr.mxu0 0.0
    %811 = vmatpush1.msra.mxu0 %v769
    %812 = vmatprep.subr.mxu0 0.0
    %813 = vmatpush1.msra.mxu0 %v770
    %814 = vmatprep.subr.mxu0 0.0
    %815 = vmatpush1.msra.mxu0 %v771
    %816 = vmatprep.subr.mxu0 0.0
    %817 = vmatpush1.msra.mxu0 %v772
    %818 = vmatprep.subr.mxu0 0.0
    %819 = vmatpush1.msra.mxu0 %v804
    %820 = vmatprep.subr.mxu0 0.0
    %821 = vmatpush1.msra.mxu0 0.0
    %822 = vmatprep.subr.mxu0 0.0
    %823 = vmatpush1.msra.mxu0 0.0
    %824 = vmatprep.subr.mxu0 0.0
    %825 = vmatpush1.msra.mxu0 0.0
    %826 = vmatprep.subr.mxu0 0.0
    %827 = vmatpush1.msra.mxu0 0.0
    %828 = vmatprep.subr.mxu0 0.0
    %829 = vmatpush1.msra.mxu0 0.0
    %830 = vmatprep.subr.mxu0 0.0
    %831 = vmatpush1.msra.mxu0 0.0
    %832 = vmatprep.subr.mxu0 0.0
    %833 = vmatpush1.msra.mxu0 0.0
    %834 = vmatprep.subr.mxu0 0.0
    %835 = vmatpush1.msra.mxu0 0.0
    %836 = vmatprep.subr.mxu0 0.0
    %837 = vmatpush1.msra.mxu0 0.0
    %838 = vmatprep.subr.mxu0 0.0
    %839 = vmatpush1.msra.mxu0 0.0
    %840 = vmatprep.subr.mxu0 0.0
    %841 = vmatpush1.msra.mxu0 0.0
    %842 = vmatprep.subr.mxu0 0.0
    %843 = vmatpush1.msra.mxu0 0.0
    %844 = vmatprep.subr.mxu0 0.0
    %845 = vmatpush1.msra.mxu0 0.0
    %846 = vmatprep.subr.mxu0 0.0
    %847 = vmatpush1.msra.mxu0 0.0
    %848 = vmatprep.subr.mxu0 0.0
    %849 = vmatpush1.msra.mxu0 0.0
    %850 = vmatprep.subr.mxu0 0.0
    %851 = vmatpush1.msra.mxu0 0.0
    %852 = vmatprep.subr.mxu0 0.0
    %853 = vmatpush1.msra.mxu0 0.0
    %854 = vmatprep.subr.mxu0 0.0
    %855 = vmatpush1.msra.mxu0 0.0
    %856 = vmatprep.subr.mxu0 0.0
    %857 = vmatpush1.msra.mxu0 0.0
    %858 = vmatprep.subr.mxu0 0.0
    %859 = vmatpush1.msra.mxu0 0.0
    %860 = vmatprep.subr.mxu0 0.0
    %861 = vmatpush1.msra.mxu0 0.0
    %862 = vmatprep.subr.mxu0 0.0
    %863 = vmatpush1.msra.mxu0 0.0
    %864 = vmatprep.subr.mxu0 0.0
    %865 = vmatpush1.msra.mxu0 0.0
    %866 = vmatprep.subr.mxu0 0.0
    %867 = vmatpush1.msra.mxu0 0.0
    %868 = vmatprep.subr.mxu0 0.0
    %869 = vmatpush1.msra.mxu0 0.0
    %870 = vmatprep.mubr.f32.mxu0 0.0
    %871 = vmatmul.mubr.f32.gmra.mrb[0].mxu0 %v801
    %v872 = vpop.f32.mrb[0].mxu0
    %v873 = vadd.f32 %v729, %v872
    %v874 = vpop.f32.mrb[0].mxu0
    %875 = vdwg.mxu0
    %vm876 = vcmp.gt.f32.partialorder %v873, %v776
    %v877 = vsel %vm876, 1.0, 0.0
    %s878 = scalar_lea.vmem %s11, 8
    %v879 = vld [vmem:[%s878] sm:$0x7f]
    %s880 = scalar_lea.vmem %s12, 8
    %v881 = vld [vmem:[%s880] sm:$0x7f]
    %883 = vset.pattern.permute.xlu0 0
    %884 = vperm.xlu0 %883, %v877
    %v885 = vpop.permute.xlu0 %884
    %v887 = vmul.f32 %v885, %v785
    %888 = vset.pattern.permute.xlu0 1
    %889 = vperm.xlu0 %888, %v877
    %v890 = vpop.permute.xlu0 %889
    %v892 = vmul.f32 %v890, %v794
    %v893 = vadd.f32 %v887, %v892
    %v894 = vadd.f32 %v893, %v642
    %vm895 = vcmp.gt.f32.partialorder %v894, %v879
    %v896 = vsel %vm895, 1.0, 0.0
    %v898 = vsel %vm88, %v896, 0
    %900 = vmatprep.subr.mxu0 0.0
    %901 = vmatpush1.msra.mxu0 %v767
    %902 = vmatprep.subr.mxu0 0.0
    %903 = vmatpush1.msra.mxu0 %v768
    %904 = vmatprep.subr.mxu0 0.0
    %905 = vmatpush1.msra.mxu0 %v769
    %906 = vmatprep.subr.mxu0 0.0
    %907 = vmatpush1.msra.mxu0 %v770
    %908 = vmatprep.subr.mxu0 0.0
    %909 = vmatpush1.msra.mxu0 %v771
    %910 = vmatprep.subr.mxu0 0.0
    %911 = vmatpush1.msra.mxu0 %v772
    %912 = vmatprep.subr.mxu0 0.0
    %913 = vmatpush1.msra.mxu0 %v804
    %914 = vmatprep.subr.mxu0 0.0
    %915 = vmatpush1.msra.mxu0 0.0
    %916 = vmatprep.subr.mxu0 0.0
    %917 = vmatpush1.msra.mxu0 0.0
    %918 = vmatprep.subr.mxu0 0.0
    %919 = vmatpush1.msra.mxu0 0.0
    %920 = vmatprep.subr.mxu0 0.0
    %921 = vmatpush1.msra.mxu0 0.0
    %922 = vmatprep.subr.mxu0 0.0
    %923 = vmatpush1.msra.mxu0 0.0
    %924 = vmatprep.subr.mxu0 0.0
    %925 = vmatpush1.msra.mxu0 0.0
    %926 = vmatprep.subr.mxu0 0.0
    %927 = vmatpush1.msra.mxu0 0.0
    %928 = vmatprep.subr.mxu0 0.0
    %929 = vmatpush1.msra.mxu0 0.0
    %930 = vmatprep.subr.mxu0 0.0
    %931 = vmatpush1.msra.mxu0 0.0
    %932 = vmatprep.subr.mxu0 0.0
    %933 = vmatpush1.msra.mxu0 0.0
    %934 = vmatprep.subr.mxu0 0.0
    %935 = vmatpush1.msra.mxu0 0.0
    %936 = vmatprep.subr.mxu0 0.0
    %937 = vmatpush1.msra.mxu0 0.0
    %938 = vmatprep.subr.mxu0 0.0
    %939 = vmatpush1.msra.mxu0 0.0
    %940 = vmatprep.subr.mxu0 0.0
    %941 = vmatpush1.msra.mxu0 0.0
    %942 = vmatprep.subr.mxu0 0.0
    %943 = vmatpush1.msra.mxu0 0.0
    %944 = vmatprep.subr.mxu0 0.0
    %945 = vmatpush1.msra.mxu0 0.0
    %946 = vmatprep.subr.mxu0 0.0
    %947 = vmatpush1.msra.mxu0 0.0
    %948 = vmatprep.subr.mxu0 0.0
    %949 = vmatpush1.msra.mxu0 0.0
    %950 = vmatprep.subr.mxu0 0.0
    %951 = vmatpush1.msra.mxu0 0.0
    %952 = vmatprep.subr.mxu0 0.0
    %953 = vmatpush1.msra.mxu0 0.0
    %954 = vmatprep.subr.mxu0 0.0
    %955 = vmatpush1.msra.mxu0 0.0
    %956 = vmatprep.subr.mxu0 0.0
    %957 = vmatpush1.msra.mxu0 0.0
    %958 = vmatprep.subr.mxu0 0.0
    %959 = vmatpush1.msra.mxu0 0.0
    %960 = vmatprep.subr.mxu0 0.0
    %961 = vmatpush1.msra.mxu0 0.0
    %962 = vmatprep.subr.mxu0 0.0
    %963 = vmatpush1.msra.mxu0 0.0
    %964 = vmatprep.mubr.f32.mxu0 0.0
    %965 = vmatmul.mubr.f32.gmra.mrb[0].mxu0 %v898
    %v966 = vpop.f32.mrb[0].mxu0
    %v967 = vadd.f32 %v729, %v966
    %v968 = vpop.f32.mrb[0].mxu0
    %969 = vdwg.mxu0
    %vm970 = vcmp.gt.f32.partialorder %v967, %v881
    %v971 = vsel %vm970, 1.0, 0.0
    %s972 = scalar_lea.vmem %s11, 16
    %v973 = vld [vmem:[%s972] sm:$0x7f]
    %s974 = scalar_lea.vmem %s12, 16
    %v975 = vld [vmem:[%s974] sm:$0x7f]
    %977 = vset.pattern.permute.xlu0 0
    %978 = vperm.xlu0 %977, %v971
    %v979 = vpop.permute.xlu0 %978
    %v981 = vmul.f32 %v979, %v785
    %982 = vset.pattern.permute.xlu0 1
    %983 = vperm.xlu0 %982, %v971
    %v984 = vpop.permute.xlu0 %983
    %v986 = vmul.f32 %v984, %v794
    %v987 = vadd.f32 %v981, %v986
    %v988 = vadd.f32 %v987, %v642
    %vm989 = vcmp.gt.f32.partialorder %v988, %v973
    %v990 = vsel %vm989, 1.0, 0.0
    %v992 = vsel %vm88, %v990, 0
    %994 = vmatprep.subr.mxu0 0.0
    %995 = vmatpush1.msra.mxu0 %v767
    %996 = vmatprep.subr.mxu0 0.0
    %997 = vmatpush1.msra.mxu0 %v768
    %998 = vmatprep.subr.mxu0 0.0
    %999 = vmatpush1.msra.mxu0 %v769
    %1000 = vmatprep.subr.mxu0 0.0
    %1001 = vmatpush1.msra.mxu0 %v770
    %1002 = vmatprep.subr.mxu0 0.0
    %1003 = vmatpush1.msra.mxu0 %v771
    %1004 = vmatprep.subr.mxu0 0.0
    %1005 = vmatpush1.msra.mxu0 %v772
    %1006 = vmatprep.subr.mxu0 0.0
    %1007 = vmatpush1.msra.mxu0 %v804
    %1008 = vmatprep.subr.mxu0 0.0
    %1009 = vmatpush1.msra.mxu0 0.0
    %1010 = vmatprep.subr.mxu0 0.0
    %1011 = vmatpush1.msra.mxu0 0.0
    %1012 = vmatprep.subr.mxu0 0.0
    %1013 = vmatpush1.msra.mxu0 0.0
    %1014 = vmatprep.subr.mxu0 0.0
    %1015 = vmatpush1.msra.mxu0 0.0
    %1016 = vmatprep.subr.mxu0 0.0
    %1017 = vmatpush1.msra.mxu0 0.0
    %1018 = vmatprep.subr.mxu0 0.0
    %1019 = vmatpush1.msra.mxu0 0.0
    %1020 = vmatprep.subr.mxu0 0.0
    %1021 = vmatpush1.msra.mxu0 0.0
    %1022 = vmatprep.subr.mxu0 0.0
    %1023 = vmatpush1.msra.mxu0 0.0
    %1024 = vmatprep.subr.mxu0 0.0
    %1025 = vmatpush1.msra.mxu0 0.0
    %1026 = vmatprep.subr.mxu0 0.0
    %1027 = vmatpush1.msra.mxu0 0.0
    %1028 = vmatprep.subr.mxu0 0.0
    %1029 = vmatpush1.msra.mxu0 0.0
    %1030 = vmatprep.subr.mxu0 0.0
    %1031 = vmatpush1.msra.mxu0 0.0
    %1032 = vmatprep.subr.mxu0 0.0
    %1033 = vmatpush1.msra.mxu0 0.0
    %1034 = vmatprep.subr.mxu0 0.0
    %1035 = vmatpush1.msra.mxu0 0.0
    %1036 = vmatprep.subr.mxu0 0.0
    %1037 = vmatpush1.msra.mxu0 0.0
    %1038 = vmatprep.subr.mxu0 0.0
    %1039 = vmatpush1.msra.mxu0 0.0
    %1040 = vmatprep.subr.mxu0 0.0
    %1041 = vmatpush1.msra.mxu0 0.0
    %1042 = vmatprep.subr.mxu0 0.0
    %1043 = vmatpush1.msra.mxu0 0.0
    %1044 = vmatprep.subr.mxu0 0.0
    %1045 = vmatpush1.msra.mxu0 0.0
    %1046 = vmatprep.subr.mxu0 0.0
    %1047 = vmatpush1.msra.mxu0 0.0
    %1048 = vmatprep.subr.mxu0 0.0
    %1049 = vmatpush1.msra.mxu0 0.0
    %1050 = vmatprep.subr.mxu0 0.0
    %1051 = vmatpush1.msra.mxu0 0.0
    %1052 = vmatprep.subr.mxu0 0.0
    %1053 = vmatpush1.msra.mxu0 0.0
    %1054 = vmatprep.subr.mxu0 0.0
    %1055 = vmatpush1.msra.mxu0 0.0
    %1056 = vmatprep.subr.mxu0 0.0
    %1057 = vmatpush1.msra.mxu0 0.0
    %1058 = vmatprep.mubr.f32.mxu0 0.0
    %1059 = vmatmul.mubr.f32.gmra.mrb[0].mxu0 %v992
    %v1060 = vpop.f32.mrb[0].mxu0
    %v1061 = vadd.f32 %v729, %v1060
    %v1062 = vpop.f32.mrb[0].mxu0
    %1063 = vdwg.mxu0
    %vm1064 = vcmp.gt.f32.partialorder %v1061, %v975
    %v1065 = vsel %vm1064, 1.0, 0.0
    %s1066 = scalar_lea.vmem %s11, 24
    %v1067 = vld [vmem:[%s1066] sm:$0x7f]
    %s1068 = scalar_lea.vmem %s12, 24
    %v1069 = vld [vmem:[%s1068] sm:$0x7f]
    %1071 = vset.pattern.permute.xlu0 0
    %1072 = vperm.xlu0 %1071, %v1065
    %v1073 = vpop.permute.xlu0 %1072
    %v1075 = vmul.f32 %v1073, %v785
    %1076 = vset.pattern.permute.xlu0 1
    %1077 = vperm.xlu0 %1076, %v1065
    %v1078 = vpop.permute.xlu0 %1077
    %v1080 = vmul.f32 %v1078, %v794
    %v1081 = vadd.f32 %v1075, %v1080
    %v1082 = vadd.f32 %v1081, %v642
    %vm1083 = vcmp.gt.f32.partialorder %v1082, %v1067
    %v1084 = vsel %vm1083, 1.0, 0.0
    %v1086 = vsel %vm88, %v1084, 0
    %1088 = vmatprep.subr.mxu0 0.0
    %1089 = vmatpush1.msra.mxu0 %v767
    %1090 = vmatprep.subr.mxu0 0.0
    %1091 = vmatpush1.msra.mxu0 %v768
    %1092 = vmatprep.subr.mxu0 0.0
    %1093 = vmatpush1.msra.mxu0 %v769
    %1094 = vmatprep.subr.mxu0 0.0
    %1095 = vmatpush1.msra.mxu0 %v770
    %1096 = vmatprep.subr.mxu0 0.0
    %1097 = vmatpush1.msra.mxu0 %v771
    %1098 = vmatprep.subr.mxu0 0.0
    %1099 = vmatpush1.msra.mxu0 %v772
    %1100 = vmatprep.subr.mxu0 0.0
    %1101 = vmatpush1.msra.mxu0 %v804
    %1102 = vmatprep.subr.mxu0 0.0
    %1103 = vmatpush1.msra.mxu0 0.0
    %1104 = vmatprep.subr.mxu0 0.0
    %1105 = vmatpush1.msra.mxu0 0.0
    %1106 = vmatprep.subr.mxu0 0.0
    %1107 = vmatpush1.msra.mxu0 0.0
    %1108 = vmatprep.subr.mxu0 0.0
    %1109 = vmatpush1.msra.mxu0 0.0
    %1110 = vmatprep.subr.mxu0 0.0
    %1111 = vmatpush1.msra.mxu0 0.0
    %1112 = vmatprep.subr.mxu0 0.0
    %1113 = vmatpush1.msra.mxu0 0.0
    %1114 = vmatprep.subr.mxu0 0.0
    %1115 = vmatpush1.msra.mxu0 0.0
    %1116 = vmatprep.subr.mxu0 0.0
    %1117 = vmatpush1.msra.mxu0 0.0
    %1118 = vmatprep.subr.mxu0 0.0
    %1119 = vmatpush1.msra.mxu0 0.0
    %1120 = vmatprep.subr.mxu0 0.0
    %1121 = vmatpush1.msra.mxu0 0.0
    %1122 = vmatprep.subr.mxu0 0.0
    %1123 = vmatpush1.msra.mxu0 0.0
    %1124 = vmatprep.subr.mxu0 0.0
    %1125 = vmatpush1.msra.mxu0 0.0
    %1126 = vmatprep.subr.mxu0 0.0
    %1127 = vmatpush1.msra.mxu0 0.0
    %1128 = vmatprep.subr.mxu0 0.0
    %1129 = vmatpush1.msra.mxu0 0.0
    %1130 = vmatprep.subr.mxu0 0.0
    %1131 = vmatpush1.msra.mxu0 0.0
    %1132 = vmatprep.subr.mxu0 0.0
    %1133 = vmatpush1.msra.mxu0 0.0
    %1134 = vmatprep.subr.mxu0 0.0
    %1135 = vmatpush1.msra.mxu0 0.0
    %1136 = vmatprep.subr.mxu0 0.0
    %1137 = vmatpush1.msra.mxu0 0.0
    %1138 = vmatprep.subr.mxu0 0.0
    %1139 = vmatpush1.msra.mxu0 0.0
    %1140 = vmatprep.subr.mxu0 0.0
    %1141 = vmatpush1.msra.mxu0 0.0
    %1142 = vmatprep.subr.mxu0 0.0
    %1143 = vmatpush1.msra.mxu0 0.0
    %1144 = vmatprep.subr.mxu0 0.0
    %1145 = vmatpush1.msra.mxu0 0.0
    %1146 = vmatprep.subr.mxu0 0.0
    %1147 = vmatpush1.msra.mxu0 0.0
    %1148 = vmatprep.subr.mxu0 0.0
    %1149 = vmatpush1.msra.mxu0 0.0
    %1150 = vmatprep.subr.mxu0 0.0
    %1151 = vmatpush1.msra.mxu0 0.0
    %1152 = vmatprep.mubr.f32.mxu0 0.0
    %1153 = vmatmul.mubr.f32.gmra.mrb[0].mxu0 %v1086
    %v1154 = vpop.f32.mrb[0].mxu0
    %v1155 = vadd.f32 %v729, %v1154
    %v1156 = vpop.f32.mrb[0].mxu0
    %1157 = vdwg.mxu0
    %vm1158 = vcmp.gt.f32.partialorder %v1155, %v1069
    %v1159 = vsel %vm1158, 1.0, 0.0
    %s1160 = scalar_lea.vmem %s11, 32
    %v1161 = vld [vmem:[%s1160] sm:$0x7f]
    %s1162 = scalar_lea.vmem %s12, 32
    %v1163 = vld [vmem:[%s1162] sm:$0x7f]
    %1165 = vset.pattern.permute.xlu0 0
    %1166 = vperm.xlu0 %1165, %v1159
    %v1167 = vpop.permute.xlu0 %1166
    %v1169 = vmul.f32 %v1167, %v785
    %1170 = vset.pattern.permute.xlu0 1
    %1171 = vperm.xlu0 %1170, %v1159
    %v1172 = vpop.permute.xlu0 %1171
    %v1174 = vmul.f32 %v1172, %v794
    %v1175 = vadd.f32 %v1169, %v1174
    %v1176 = vadd.f32 %v1175, %v642
    %vm1177 = vcmp.gt.f32.partialorder %v1176, %v1161
    %v1178 = vsel %vm1177, 1.0, 0.0
    %v1180 = vsel %vm88, %v1178, 0
    %1182 = vmatprep.subr.mxu0 0.0
    %1183 = vmatpush1.msra.mxu0 %v767
    %1184 = vmatprep.subr.mxu0 0.0
    %1185 = vmatpush1.msra.mxu0 %v768
    %1186 = vmatprep.subr.mxu0 0.0
    %1187 = vmatpush1.msra.mxu0 %v769
    %1188 = vmatprep.subr.mxu0 0.0
    %1189 = vmatpush1.msra.mxu0 %v770
    %1190 = vmatprep.subr.mxu0 0.0
    %1191 = vmatpush1.msra.mxu0 %v771
    %1192 = vmatprep.subr.mxu0 0.0
    %1193 = vmatpush1.msra.mxu0 %v772
    %1194 = vmatprep.subr.mxu0 0.0
    %1195 = vmatpush1.msra.mxu0 %v804
    %1196 = vmatprep.subr.mxu0 0.0
    %1197 = vmatpush1.msra.mxu0 0.0
    %1198 = vmatprep.subr.mxu0 0.0
    %1199 = vmatpush1.msra.mxu0 0.0
    %1200 = vmatprep.subr.mxu0 0.0
    %1201 = vmatpush1.msra.mxu0 0.0
    %1202 = vmatprep.subr.mxu0 0.0
    %1203 = vmatpush1.msra.mxu0 0.0
    %1204 = vmatprep.subr.mxu0 0.0
    %1205 = vmatpush1.msra.mxu0 0.0
    %1206 = vmatprep.subr.mxu0 0.0
    %1207 = vmatpush1.msra.mxu0 0.0
    %1208 = vmatprep.subr.mxu0 0.0
    %1209 = vmatpush1.msra.mxu0 0.0
    %1210 = vmatprep.subr.mxu0 0.0
    %1211 = vmatpush1.msra.mxu0 0.0
    %1212 = vmatprep.subr.mxu0 0.0
    %1213 = vmatpush1.msra.mxu0 0.0
    %1214 = vmatprep.subr.mxu0 0.0
    %1215 = vmatpush1.msra.mxu0 0.0
    %1216 = vmatprep.subr.mxu0 0.0
    %1217 = vmatpush1.msra.mxu0 0.0
    %1218 = vmatprep.subr.mxu0 0.0
    %1219 = vmatpush1.msra.mxu0 0.0
    %1220 = vmatprep.subr.mxu0 0.0
    %1221 = vmatpush1.msra.mxu0 0.0
    %1222 = vmatprep.subr.mxu0 0.0
    %1223 = vmatpush1.msra.mxu0 0.0
    %1224 = vmatprep.subr.mxu0 0.0
    %1225 = vmatpush1.msra.mxu0 0.0
    %1226 = vmatprep.subr.mxu0 0.0
    %1227 = vmatpush1.msra.mxu0 0.0
    %1228 = vmatprep.subr.mxu0 0.0
    %1229 = vmatpush1.msra.mxu0 0.0
    %1230 = vmatprep.subr.mxu0 0.0
    %1231 = vmatpush1.msra.mxu0 0.0
    %1232 = vmatprep.subr.mxu0 0.0
    %1233 = vmatpush1.msra.mxu0 0.0
    %1234 = vmatprep.subr.mxu0 0.0
    %1235 = vmatpush1.msra.mxu0 0.0
    %1236 = vmatprep.subr.mxu0 0.0
    %1237 = vmatpush1.msra.mxu0 0.0
    %1238 = vmatprep.subr.mxu0 0.0
    %1239 = vmatpush1.msra.mxu0 0.0
    %1240 = vmatprep.subr.mxu0 0.0
    %1241 = vmatpush1.msra.mxu0 0.0
    %1242 = vmatprep.subr.mxu0 0.0
    %1243 = vmatpush1.msra.mxu0 0.0
    %1244 = vmatprep.subr.mxu0 0.0
    %1245 = vmatpush1.msra.mxu0 0.0
    %1246 = vmatprep.mubr.f32.mxu0 0.0
    %1247 = vmatmul.mubr.f32.gmra.mrb[0].mxu0 %v1180
    %v1248 = vpop.f32.mrb[0].mxu0
    %v1249 = vadd.f32 %v729, %v1248
    %v1250 = vpop.f32.mrb[0].mxu0
    %1251 = vdwg.mxu0
    %vm1252 = vcmp.gt.f32.partialorder %v1249, %v1163
    %v1253 = vsel %vm1252, 1.0, 0.0
    %s1254 = scalar_lea.vmem %s11, 40
    %v1255 = vld [vmem:[%s1254] sm:$0x7f]
    %s1256 = scalar_lea.vmem %s12, 40
    %v1257 = vld [vmem:[%s1256] sm:$0x7f]
    %1259 = vset.pattern.permute.xlu0 0
    %1260 = vperm.xlu0 %1259, %v1253
    %v1261 = vpop.permute.xlu0 %1260
    %v1263 = vmul.f32 %v1261, %v785
    %1264 = vset.pattern.permute.xlu0 1
    %1265 = vperm.xlu0 %1264, %v1253
    %v1266 = vpop.permute.xlu0 %1265
    %v1268 = vmul.f32 %v1266, %v794
    %v1269 = vadd.f32 %v1263, %v1268
    %v1270 = vadd.f32 %v1269, %v642
    %vm1271 = vcmp.gt.f32.partialorder %v1270, %v1255
    %v1272 = vsel %vm1271, 1.0, 0.0
    %v1274 = vsel %vm88, %v1272, 0
    %1276 = vmatprep.subr.mxu0 0.0
    %1277 = vmatpush1.msra.mxu0 %v767
    %1278 = vmatprep.subr.mxu0 0.0
    %1279 = vmatpush1.msra.mxu0 %v768
    %1280 = vmatprep.subr.mxu0 0.0
    %1281 = vmatpush1.msra.mxu0 %v769
    %1282 = vmatprep.subr.mxu0 0.0
    %1283 = vmatpush1.msra.mxu0 %v770
    %1284 = vmatprep.subr.mxu0 0.0
    %1285 = vmatpush1.msra.mxu0 %v771
    %1286 = vmatprep.subr.mxu0 0.0
    %1287 = vmatpush1.msra.mxu0 %v772
    %1288 = vmatprep.subr.mxu0 0.0
    %1289 = vmatpush1.msra.mxu0 %v804
    %1290 = vmatprep.subr.mxu0 0.0
    %1291 = vmatpush1.msra.mxu0 0.0
    %1292 = vmatprep.subr.mxu0 0.0
    %1293 = vmatpush1.msra.mxu0 0.0
    %1294 = vmatprep.subr.mxu0 0.0
    %1295 = vmatpush1.msra.mxu0 0.0
    %1296 = vmatprep.subr.mxu0 0.0
    %1297 = vmatpush1.msra.mxu0 0.0
    %1298 = vmatprep.subr.mxu0 0.0
    %1299 = vmatpush1.msra.mxu0 0.0
    %1300 = vmatprep.subr.mxu0 0.0
    %1301 = vmatpush1.msra.mxu0 0.0
    %1302 = vmatprep.subr.mxu0 0.0
    %1303 = vmatpush1.msra.mxu0 0.0
    %1304 = vmatprep.subr.mxu0 0.0
    %1305 = vmatpush1.msra.mxu0 0.0
    %1306 = vmatprep.subr.mxu0 0.0
    %1307 = vmatpush1.msra.mxu0 0.0
    %1308 = vmatprep.subr.mxu0 0.0
    %1309 = vmatpush1.msra.mxu0 0.0
    %1310 = vmatprep.subr.mxu0 0.0
    %1311 = vmatpush1.msra.mxu0 0.0
    %1312 = vmatprep.subr.mxu0 0.0
    %1313 = vmatpush1.msra.mxu0 0.0
    %1314 = vmatprep.subr.mxu0 0.0
    %1315 = vmatpush1.msra.mxu0 0.0
    %1316 = vmatprep.subr.mxu0 0.0
    %1317 = vmatpush1.msra.mxu0 0.0
    %1318 = vmatprep.subr.mxu0 0.0
    %1319 = vmatpush1.msra.mxu0 0.0
    %1320 = vmatprep.subr.mxu0 0.0
    %1321 = vmatpush1.msra.mxu0 0.0
    %1322 = vmatprep.subr.mxu0 0.0
    %1323 = vmatpush1.msra.mxu0 0.0
    %1324 = vmatprep.subr.mxu0 0.0
    %1325 = vmatpush1.msra.mxu0 0.0
    %1326 = vmatprep.subr.mxu0 0.0
    %1327 = vmatpush1.msra.mxu0 0.0
    %1328 = vmatprep.subr.mxu0 0.0
    %1329 = vmatpush1.msra.mxu0 0.0
    %1330 = vmatprep.subr.mxu0 0.0
    %1331 = vmatpush1.msra.mxu0 0.0
    %1332 = vmatprep.subr.mxu0 0.0
    %1333 = vmatpush1.msra.mxu0 0.0
    %1334 = vmatprep.subr.mxu0 0.0
    %1335 = vmatpush1.msra.mxu0 0.0
    %1336 = vmatprep.subr.mxu0 0.0
    %1337 = vmatpush1.msra.mxu0 0.0
    %1338 = vmatprep.subr.mxu0 0.0
    %1339 = vmatpush1.msra.mxu0 0.0
    %1340 = vmatprep.mubr.f32.mxu0 0.0
    %1341 = vmatmul.mubr.f32.gmra.mrb[0].mxu0 %v1274
    %v1342 = vpop.f32.mrb[0].mxu0
    %v1343 = vadd.f32 %v729, %v1342
    %v1344 = vpop.f32.mrb[0].mxu0
    %1345 = vdwg.mxu0
    %vm1346 = vcmp.gt.f32.partialorder %v1343, %v1257
    %v1347 = vsel %vm1346, 1.0, 0.0
    %s1348 = scalar_lea.vmem %s11, 48
    %v1349 = vld [vmem:[%s1348] sm:$0x7f]
    %s1350 = scalar_lea.vmem %s12, 48
    %v1351 = vld [vmem:[%s1350] sm:$0x7f]
    %1353 = vset.pattern.permute.xlu0 0
    %1354 = vperm.xlu0 %1353, %v1347
    %v1355 = vpop.permute.xlu0 %1354
    %v1357 = vmul.f32 %v1355, %v785
    %1358 = vset.pattern.permute.xlu0 1
    %1359 = vperm.xlu0 %1358, %v1347
    %v1360 = vpop.permute.xlu0 %1359
    %v1362 = vmul.f32 %v1360, %v794
    %v1363 = vadd.f32 %v1357, %v1362
    %v1364 = vadd.f32 %v1363, %v642
    %vm1365 = vcmp.gt.f32.partialorder %v1364, %v1349
    %v1366 = vsel %vm1365, 1.0, 0.0
    %v1368 = vsel %vm88, %v1366, 0
    %1370 = vmatprep.subr.mxu0 0.0
    %1371 = vmatpush1.msra.mxu0 %v767
    %1372 = vmatprep.subr.mxu0 0.0
    %1373 = vmatpush1.msra.mxu0 %v768
    %1374 = vmatprep.subr.mxu0 0.0
    %1375 = vmatpush1.msra.mxu0 %v769
    %1376 = vmatprep.subr.mxu0 0.0
    %1377 = vmatpush1.msra.mxu0 %v770
    %1378 = vmatprep.subr.mxu0 0.0
    %1379 = vmatpush1.msra.mxu0 %v771
    %1380 = vmatprep.subr.mxu0 0.0
    %1381 = vmatpush1.msra.mxu0 %v772
    %1382 = vmatprep.subr.mxu0 0.0
    %1383 = vmatpush1.msra.mxu0 %v804
    %1384 = vmatprep.subr.mxu0 0.0
    %1385 = vmatpush1.msra.mxu0 0.0
    %1386 = vmatprep.subr.mxu0 0.0
    %1387 = vmatpush1.msra.mxu0 0.0
    %1388 = vmatprep.subr.mxu0 0.0
    %1389 = vmatpush1.msra.mxu0 0.0
    %1390 = vmatprep.subr.mxu0 0.0
    %1391 = vmatpush1.msra.mxu0 0.0
    %1392 = vmatprep.subr.mxu0 0.0
    %1393 = vmatpush1.msra.mxu0 0.0
    %1394 = vmatprep.subr.mxu0 0.0
    %1395 = vmatpush1.msra.mxu0 0.0
    %1396 = vmatprep.subr.mxu0 0.0
    %1397 = vmatpush1.msra.mxu0 0.0
    %1398 = vmatprep.subr.mxu0 0.0
    %1399 = vmatpush1.msra.mxu0 0.0
    %1400 = vmatprep.subr.mxu0 0.0
    %1401 = vmatpush1.msra.mxu0 0.0
    %1402 = vmatprep.subr.mxu0 0.0
    %1403 = vmatpush1.msra.mxu0 0.0
    %1404 = vmatprep.subr.mxu0 0.0
    %1405 = vmatpush1.msra.mxu0 0.0
    %1406 = vmatprep.subr.mxu0 0.0
    %1407 = vmatpush1.msra.mxu0 0.0
    %1408 = vmatprep.subr.mxu0 0.0
    %1409 = vmatpush1.msra.mxu0 0.0
    %1410 = vmatprep.subr.mxu0 0.0
    %1411 = vmatpush1.msra.mxu0 0.0
    %1412 = vmatprep.subr.mxu0 0.0
    %1413 = vmatpush1.msra.mxu0 0.0
    %1414 = vmatprep.subr.mxu0 0.0
    %1415 = vmatpush1.msra.mxu0 0.0
    %1416 = vmatprep.subr.mxu0 0.0
    %1417 = vmatpush1.msra.mxu0 0.0
    %1418 = vmatprep.subr.mxu0 0.0
    %1419 = vmatpush1.msra.mxu0 0.0
    %1420 = vmatprep.subr.mxu0 0.0
    %1421 = vmatpush1.msra.mxu0 0.0
    %1422 = vmatprep.subr.mxu0 0.0
    %1423 = vmatpush1.msra.mxu0 0.0
    %1424 = vmatprep.subr.mxu0 0.0
    %1425 = vmatpush1.msra.mxu0 0.0
    %1426 = vmatprep.subr.mxu0 0.0
    %1427 = vmatpush1.msra.mxu0 0.0
    %1428 = vmatprep.subr.mxu0 0.0
    %1429 = vmatpush1.msra.mxu0 0.0
    %1430 = vmatprep.subr.mxu0 0.0
    %1431 = vmatpush1.msra.mxu0 0.0
    %1432 = vmatprep.subr.mxu0 0.0
    %1433 = vmatpush1.msra.mxu0 0.0
    %1434 = vmatprep.mubr.f32.mxu0 0.0
    %1435 = vmatmul.mubr.f32.gmra.mrb[0].mxu0 %v1368
    %v1436 = vpop.f32.mrb[0].mxu0
    %v1437 = vadd.f32 %v729, %v1436
    %v1438 = vpop.f32.mrb[0].mxu0
    %1439 = vdwg.mxu0
    %vm1440 = vcmp.gt.f32.partialorder %v1437, %v1351
    %v1441 = vsel %vm1440, 1.0, 0.0
    %s1442 = scalar_lea.vmem %s11, 56
    %v1443 = vld [vmem:[%s1442] sm:$0x7f]
    %s1444 = scalar_lea.vmem %s12, 56
    %v1445 = vld [vmem:[%s1444] sm:$0x7f]
    %1447 = vset.pattern.permute.xlu0 0
    %1448 = vperm.xlu0 %1447, %v1441
    %v1449 = vpop.permute.xlu0 %1448
    %v1451 = vmul.f32 %v1449, %v785
    %1452 = vset.pattern.permute.xlu0 1
    %1453 = vperm.xlu0 %1452, %v1441
    %v1454 = vpop.permute.xlu0 %1453
    %v1456 = vmul.f32 %v1454, %v794
    %v1457 = vadd.f32 %v1451, %v1456
    %v1458 = vadd.f32 %v1457, %v642
    %vm1459 = vcmp.gt.f32.partialorder %v1458, %v1443
    %v1460 = vsel %vm1459, 1.0, 0.0
    %v1462 = vsel %vm88, %v1460, 0
    %1464 = vmatprep.subr.mxu0 0.0
    %1465 = vmatpush1.msra.mxu0 %v767
    %1466 = vmatprep.subr.mxu0 0.0
    %1467 = vmatpush1.msra.mxu0 %v768
    %1468 = vmatprep.subr.mxu0 0.0
    %1469 = vmatpush1.msra.mxu0 %v769
    %1470 = vmatprep.subr.mxu0 0.0
    %1471 = vmatpush1.msra.mxu0 %v770
    %1472 = vmatprep.subr.mxu0 0.0
    %1473 = vmatpush1.msra.mxu0 %v771
    %1474 = vmatprep.subr.mxu0 0.0
    %1475 = vmatpush1.msra.mxu0 %v772
    %1476 = vmatprep.subr.mxu0 0.0
    %1477 = vmatpush1.msra.mxu0 %v804
    %1478 = vmatprep.subr.mxu0 0.0
    %1479 = vmatpush1.msra.mxu0 0.0
    %1480 = vmatprep.subr.mxu0 0.0
    %1481 = vmatpush1.msra.mxu0 0.0
    %1482 = vmatprep.subr.mxu0 0.0
    %1483 = vmatpush1.msra.mxu0 0.0
    %1484 = vmatprep.subr.mxu0 0.0
    %1485 = vmatpush1.msra.mxu0 0.0
    %1486 = vmatprep.subr.mxu0 0.0
    %1487 = vmatpush1.msra.mxu0 0.0
    %1488 = vmatprep.subr.mxu0 0.0
    %1489 = vmatpush1.msra.mxu0 0.0
    %1490 = vmatprep.subr.mxu0 0.0
    %1491 = vmatpush1.msra.mxu0 0.0
    %1492 = vmatprep.subr.mxu0 0.0
    %1493 = vmatpush1.msra.mxu0 0.0
    %1494 = vmatprep.subr.mxu0 0.0
    %1495 = vmatpush1.msra.mxu0 0.0
    %1496 = vmatprep.subr.mxu0 0.0
    %1497 = vmatpush1.msra.mxu0 0.0
    %1498 = vmatprep.subr.mxu0 0.0
    %1499 = vmatpush1.msra.mxu0 0.0
    %1500 = vmatprep.subr.mxu0 0.0
    %1501 = vmatpush1.msra.mxu0 0.0
    %1502 = vmatprep.subr.mxu0 0.0
    %1503 = vmatpush1.msra.mxu0 0.0
    %1504 = vmatprep.subr.mxu0 0.0
    %1505 = vmatpush1.msra.mxu0 0.0
    %1506 = vmatprep.subr.mxu0 0.0
    %1507 = vmatpush1.msra.mxu0 0.0
    %1508 = vmatprep.subr.mxu0 0.0
    %1509 = vmatpush1.msra.mxu0 0.0
    %1510 = vmatprep.subr.mxu0 0.0
    %1511 = vmatpush1.msra.mxu0 0.0
    %1512 = vmatprep.subr.mxu0 0.0
    %1513 = vmatpush1.msra.mxu0 0.0
    %1514 = vmatprep.subr.mxu0 0.0
    %1515 = vmatpush1.msra.mxu0 0.0
    %1516 = vmatprep.subr.mxu0 0.0
    %1517 = vmatpush1.msra.mxu0 0.0
    %1518 = vmatprep.subr.mxu0 0.0
    %1519 = vmatpush1.msra.mxu0 0.0
    %1520 = vmatprep.subr.mxu0 0.0
    %1521 = vmatpush1.msra.mxu0 0.0
    %1522 = vmatprep.subr.mxu0 0.0
    %1523 = vmatpush1.msra.mxu0 0.0
    %1524 = vmatprep.subr.mxu0 0.0
    %1525 = vmatpush1.msra.mxu0 0.0
    %1526 = vmatprep.subr.mxu0 0.0
    %1527 = vmatpush1.msra.mxu0 0.0
    %1528 = vmatprep.mubr.f32.mxu0 0.0
    %1529 = vmatmul.mubr.f32.gmra.mrb[0].mxu0 %v1462
    %v1530 = vpop.f32.mrb[0].mxu0
    %v1531 = vadd.f32 %v729, %v1530
    %v1532 = vpop.f32.mrb[0].mxu0
    %1533 = vdwg.mxu0
    %vm1534 = vcmp.gt.f32.partialorder %v1531, %v1445
    %v1535 = vsel %vm1534, 1.0, 0.0
    %s1536 = scalar_lea.vmem %s11, 64
    %v1537 = vld [vmem:[%s1536] sm:$0x7f]
    %s1538 = scalar_lea.vmem %s12, 64
    %v1539 = vld [vmem:[%s1538] sm:$0x7f]
    %1541 = vset.pattern.permute.xlu0 0
    %1542 = vperm.xlu0 %1541, %v1535
    %v1543 = vpop.permute.xlu0 %1542
    %v1545 = vmul.f32 %v1543, %v785
    %1546 = vset.pattern.permute.xlu0 1
    %1547 = vperm.xlu0 %1546, %v1535
    %v1548 = vpop.permute.xlu0 %1547
    %v1550 = vmul.f32 %v1548, %v794
    %v1551 = vadd.f32 %v1545, %v1550
    %v1552 = vadd.f32 %v1551, %v642
    %vm1553 = vcmp.gt.f32.partialorder %v1552, %v1537
    %v1554 = vsel %vm1553, 1.0, 0.0
    %v1556 = vsel %vm88, %v1554, 0
    %1558 = vmatprep.subr.mxu0 0.0
    %1559 = vmatpush1.msra.mxu0 %v767
    %1560 = vmatprep.subr.mxu0 0.0
    %1561 = vmatpush1.msra.mxu0 %v768
    %1562 = vmatprep.subr.mxu0 0.0
    %1563 = vmatpush1.msra.mxu0 %v769
    %1564 = vmatprep.subr.mxu0 0.0
    %1565 = vmatpush1.msra.mxu0 %v770
    %1566 = vmatprep.subr.mxu0 0.0
    %1567 = vmatpush1.msra.mxu0 %v771
    %1568 = vmatprep.subr.mxu0 0.0
    %1569 = vmatpush1.msra.mxu0 %v772
    %1570 = vmatprep.subr.mxu0 0.0
    %1571 = vmatpush1.msra.mxu0 %v804
    %1572 = vmatprep.subr.mxu0 0.0
    %1573 = vmatpush1.msra.mxu0 0.0
    %1574 = vmatprep.subr.mxu0 0.0
    %1575 = vmatpush1.msra.mxu0 0.0
    %1576 = vmatprep.subr.mxu0 0.0
    %1577 = vmatpush1.msra.mxu0 0.0
    %1578 = vmatprep.subr.mxu0 0.0
    %1579 = vmatpush1.msra.mxu0 0.0
    %1580 = vmatprep.subr.mxu0 0.0
    %1581 = vmatpush1.msra.mxu0 0.0
    %1582 = vmatprep.subr.mxu0 0.0
    %1583 = vmatpush1.msra.mxu0 0.0
    %1584 = vmatprep.subr.mxu0 0.0
    %1585 = vmatpush1.msra.mxu0 0.0
    %1586 = vmatprep.subr.mxu0 0.0
    %1587 = vmatpush1.msra.mxu0 0.0
    %1588 = vmatprep.subr.mxu0 0.0
    %1589 = vmatpush1.msra.mxu0 0.0
    %1590 = vmatprep.subr.mxu0 0.0
    %1591 = vmatpush1.msra.mxu0 0.0
    %1592 = vmatprep.subr.mxu0 0.0
    %1593 = vmatpush1.msra.mxu0 0.0
    %1594 = vmatprep.subr.mxu0 0.0
    %1595 = vmatpush1.msra.mxu0 0.0
    %1596 = vmatprep.subr.mxu0 0.0
    %1597 = vmatpush1.msra.mxu0 0.0
    %1598 = vmatprep.subr.mxu0 0.0
    %1599 = vmatpush1.msra.mxu0 0.0
    %1600 = vmatprep.subr.mxu0 0.0
    %1601 = vmatpush1.msra.mxu0 0.0
    %1602 = vmatprep.subr.mxu0 0.0
    %1603 = vmatpush1.msra.mxu0 0.0
    %1604 = vmatprep.subr.mxu0 0.0
    %1605 = vmatpush1.msra.mxu0 0.0
    %1606 = vmatprep.subr.mxu0 0.0
    %1607 = vmatpush1.msra.mxu0 0.0
    %1608 = vmatprep.subr.mxu0 0.0
    %1609 = vmatpush1.msra.mxu0 0.0
    %1610 = vmatprep.subr.mxu0 0.0
    %1611 = vmatpush1.msra.mxu0 0.0
    %1612 = vmatprep.subr.mxu0 0.0
    %1613 = vmatpush1.msra.mxu0 0.0
    %1614 = vmatprep.subr.mxu0 0.0
    %1615 = vmatpush1.msra.mxu0 0.0
    %1616 = vmatprep.subr.mxu0 0.0
    %1617 = vmatpush1.msra.mxu0 0.0
    %1618 = vmatprep.subr.mxu0 0.0
    %1619 = vmatpush1.msra.mxu0 0.0
    %1620 = vmatprep.subr.mxu0 0.0
    %1621 = vmatpush1.msra.mxu0 0.0
    %1622 = vmatprep.mubr.f32.mxu0 0.0
    %1623 = vmatmul.mubr.f32.gmra.mrb[0].mxu0 %v1556
    %v1624 = vpop.f32.mrb[0].mxu0
    %v1625 = vadd.f32 %v729, %v1624
    %v1626 = vpop.f32.mrb[0].mxu0
    %1627 = vdwg.mxu0
    %vm1628 = vcmp.gt.f32.partialorder %v1625, %v1539
    %v1629 = vsel %vm1628, 1.0, 0.0
    %s1630 = scalar_lea.vmem %s11, 72
    %v1631 = vld [vmem:[%s1630] sm:$0x7f]
    %s1632 = scalar_lea.vmem %s12, 72
    %v1633 = vld [vmem:[%s1632] sm:$0x7f]
    %1635 = vset.pattern.permute.xlu0 0
    %1636 = vperm.xlu0 %1635, %v1629
    %v1637 = vpop.permute.xlu0 %1636
    %v1639 = vmul.f32 %v1637, %v785
    %1640 = vset.pattern.permute.xlu0 1
    %1641 = vperm.xlu0 %1640, %v1629
    %v1642 = vpop.permute.xlu0 %1641
    %v1644 = vmul.f32 %v1642, %v794
    %v1645 = vadd.f32 %v1639, %v1644
    %v1646 = vadd.f32 %v1645, %v642
    %vm1647 = vcmp.gt.f32.partialorder %v1646, %v1631
    %v1648 = vsel %vm1647, 1.0, 0.0
    %v1650 = vsel %vm88, %v1648, 0
    %1652 = vmatprep.subr.mxu0 0.0
    %1653 = vmatpush1.msra.mxu0 %v767
    %1654 = vmatprep.subr.mxu0 0.0
    %1655 = vmatpush1.msra.mxu0 %v768
    %1656 = vmatprep.subr.mxu0 0.0
    %1657 = vmatpush1.msra.mxu0 %v769
    %1658 = vmatprep.subr.mxu0 0.0
    %1659 = vmatpush1.msra.mxu0 %v770
    %1660 = vmatprep.subr.mxu0 0.0
    %1661 = vmatpush1.msra.mxu0 %v771
    %1662 = vmatprep.subr.mxu0 0.0
    %1663 = vmatpush1.msra.mxu0 %v772
    %1664 = vmatprep.subr.mxu0 0.0
    %1665 = vmatpush1.msra.mxu0 %v804
    %1666 = vmatprep.subr.mxu0 0.0
    %1667 = vmatpush1.msra.mxu0 0.0
    %1668 = vmatprep.subr.mxu0 0.0
    %1669 = vmatpush1.msra.mxu0 0.0
    %1670 = vmatprep.subr.mxu0 0.0
    %1671 = vmatpush1.msra.mxu0 0.0
    %1672 = vmatprep.subr.mxu0 0.0
    %1673 = vmatpush1.msra.mxu0 0.0
    %1674 = vmatprep.subr.mxu0 0.0
    %1675 = vmatpush1.msra.mxu0 0.0
    %1676 = vmatprep.subr.mxu0 0.0
    %1677 = vmatpush1.msra.mxu0 0.0
    %1678 = vmatprep.subr.mxu0 0.0
    %1679 = vmatpush1.msra.mxu0 0.0
    %1680 = vmatprep.subr.mxu0 0.0
    %1681 = vmatpush1.msra.mxu0 0.0
    %1682 = vmatprep.subr.mxu0 0.0
    %1683 = vmatpush1.msra.mxu0 0.0
    %1684 = vmatprep.subr.mxu0 0.0
    %1685 = vmatpush1.msra.mxu0 0.0
    %1686 = vmatprep.subr.mxu0 0.0
    %1687 = vmatpush1.msra.mxu0 0.0
    %1688 = vmatprep.subr.mxu0 0.0
    %1689 = vmatpush1.msra.mxu0 0.0
    %1690 = vmatprep.subr.mxu0 0.0
    %1691 = vmatpush1.msra.mxu0 0.0
    %1692 = vmatprep.subr.mxu0 0.0
    %1693 = vmatpush1.msra.mxu0 0.0
    %1694 = vmatprep.subr.mxu0 0.0
    %1695 = vmatpush1.msra.mxu0 0.0
    %1696 = vmatprep.subr.mxu0 0.0
    %1697 = vmatpush1.msra.mxu0 0.0
    %1698 = vmatprep.subr.mxu0 0.0
    %1699 = vmatpush1.msra.mxu0 0.0
    %1700 = vmatprep.subr.mxu0 0.0
    %1701 = vmatpush1.msra.mxu0 0.0
    %1702 = vmatprep.subr.mxu0 0.0
    %1703 = vmatpush1.msra.mxu0 0.0
    %1704 = vmatprep.subr.mxu0 0.0
    %1705 = vmatpush1.msra.mxu0 0.0
    %1706 = vmatprep.subr.mxu0 0.0
    %1707 = vmatpush1.msra.mxu0 0.0
    %1708 = vmatprep.subr.mxu0 0.0
    %1709 = vmatpush1.msra.mxu0 0.0
    %1710 = vmatprep.subr.mxu0 0.0
    %1711 = vmatpush1.msra.mxu0 0.0
    %1712 = vmatprep.subr.mxu0 0.0
    %1713 = vmatpush1.msra.mxu0 0.0
    %1714 = vmatprep.subr.mxu0 0.0
    %1715 = vmatpush1.msra.mxu0 0.0
    %1716 = vmatprep.mubr.f32.mxu0 0.0
    %1717 = vmatmul.mubr.f32.gmra.mrb[0].mxu0 %v1650
    %v1718 = vpop.f32.mrb[0].mxu0
    %v1719 = vadd.f32 %v729, %v1718
    %v1720 = vpop.f32.mrb[0].mxu0
    %1721 = vdwg.mxu0
    %vm1722 = vcmp.gt.f32.partialorder %v1719, %v1633
    %v1723 = vsel %vm1722, 1.0, 0.0
    %s1724 = scalar_lea.vmem %s11, 80
    %v1725 = vld [vmem:[%s1724] sm:$0x7f]
    %s1726 = scalar_lea.vmem %s12, 80
    %v1727 = vld [vmem:[%s1726] sm:$0x7f]
    %1729 = vset.pattern.permute.xlu0 0
    %1730 = vperm.xlu0 %1729, %v1723
    %v1731 = vpop.permute.xlu0 %1730
    %v1733 = vmul.f32 %v1731, %v785
    %1734 = vset.pattern.permute.xlu0 1
    %1735 = vperm.xlu0 %1734, %v1723
    %v1736 = vpop.permute.xlu0 %1735
    %v1738 = vmul.f32 %v1736, %v794
    %v1739 = vadd.f32 %v1733, %v1738
    %v1740 = vadd.f32 %v1739, %v642
    %vm1741 = vcmp.gt.f32.partialorder %v1740, %v1725
    %v1742 = vsel %vm1741, 1.0, 0.0
    %v1744 = vsel %vm88, %v1742, 0
    %1746 = vmatprep.subr.mxu0 0.0
    %1747 = vmatpush1.msra.mxu0 %v767
    %1748 = vmatprep.subr.mxu0 0.0
    %1749 = vmatpush1.msra.mxu0 %v768
    %1750 = vmatprep.subr.mxu0 0.0
    %1751 = vmatpush1.msra.mxu0 %v769
    %1752 = vmatprep.subr.mxu0 0.0
    %1753 = vmatpush1.msra.mxu0 %v770
    %1754 = vmatprep.subr.mxu0 0.0
    %1755 = vmatpush1.msra.mxu0 %v771
    %1756 = vmatprep.subr.mxu0 0.0
    %1757 = vmatpush1.msra.mxu0 %v772
    %1758 = vmatprep.subr.mxu0 0.0
    %1759 = vmatpush1.msra.mxu0 %v804
    %1760 = vmatprep.subr.mxu0 0.0
    %1761 = vmatpush1.msra.mxu0 0.0
    %1762 = vmatprep.subr.mxu0 0.0
    %1763 = vmatpush1.msra.mxu0 0.0
    %1764 = vmatprep.subr.mxu0 0.0
    %1765 = vmatpush1.msra.mxu0 0.0
    %1766 = vmatprep.subr.mxu0 0.0
    %1767 = vmatpush1.msra.mxu0 0.0
    %1768 = vmatprep.subr.mxu0 0.0
    %1769 = vmatpush1.msra.mxu0 0.0
    %1770 = vmatprep.subr.mxu0 0.0
    %1771 = vmatpush1.msra.mxu0 0.0
    %1772 = vmatprep.subr.mxu0 0.0
    %1773 = vmatpush1.msra.mxu0 0.0
    %1774 = vmatprep.subr.mxu0 0.0
    %1775 = vmatpush1.msra.mxu0 0.0
    %1776 = vmatprep.subr.mxu0 0.0
    %1777 = vmatpush1.msra.mxu0 0.0
    %1778 = vmatprep.subr.mxu0 0.0
    %1779 = vmatpush1.msra.mxu0 0.0
    %1780 = vmatprep.subr.mxu0 0.0
    %1781 = vmatpush1.msra.mxu0 0.0
    %1782 = vmatprep.subr.mxu0 0.0
    %1783 = vmatpush1.msra.mxu0 0.0
    %1784 = vmatprep.subr.mxu0 0.0
    %1785 = vmatpush1.msra.mxu0 0.0
    %1786 = vmatprep.subr.mxu0 0.0
    %1787 = vmatpush1.msra.mxu0 0.0
    %1788 = vmatprep.subr.mxu0 0.0
    %1789 = vmatpush1.msra.mxu0 0.0
    %1790 = vmatprep.subr.mxu0 0.0
    %1791 = vmatpush1.msra.mxu0 0.0
    %1792 = vmatprep.subr.mxu0 0.0
    %1793 = vmatpush1.msra.mxu0 0.0
    %1794 = vmatprep.subr.mxu0 0.0
    %1795 = vmatpush1.msra.mxu0 0.0
    %1796 = vmatprep.subr.mxu0 0.0
    %1797 = vmatpush1.msra.mxu0 0.0
    %1798 = vmatprep.subr.mxu0 0.0
    %1799 = vmatpush1.msra.mxu0 0.0
    %1800 = vmatprep.subr.mxu0 0.0
    %1801 = vmatpush1.msra.mxu0 0.0
    %1802 = vmatprep.subr.mxu0 0.0
    %1803 = vmatpush1.msra.mxu0 0.0
    %1804 = vmatprep.subr.mxu0 0.0
    %1805 = vmatpush1.msra.mxu0 0.0
    %1806 = vmatprep.subr.mxu0 0.0
    %1807 = vmatpush1.msra.mxu0 0.0
    %1808 = vmatprep.subr.mxu0 0.0
    %1809 = vmatpush1.msra.mxu0 0.0
    %1810 = vmatprep.mubr.f32.mxu0 0.0
    %1811 = vmatmul.mubr.f32.gmra.mrb[0].mxu0 %v1744
    %v1812 = vpop.f32.mrb[0].mxu0
    %v1813 = vadd.f32 %v729, %v1812
    %v1814 = vpop.f32.mrb[0].mxu0
    %1815 = vdwg.mxu0
    %vm1816 = vcmp.gt.f32.partialorder %v1813, %v1727
    %v1817 = vsel %vm1816, 1.0, 0.0
    %s1818 = scalar_lea.vmem %s11, 88
    %v1819 = vld [vmem:[%s1818] sm:$0x7f]
    %s1820 = scalar_lea.vmem %s12, 88
    %v1821 = vld [vmem:[%s1820] sm:$0x7f]
    %1823 = vset.pattern.permute.xlu0 0
    %1824 = vperm.xlu0 %1823, %v1817
    %v1825 = vpop.permute.xlu0 %1824
    %v1827 = vmul.f32 %v1825, %v785
    %1828 = vset.pattern.permute.xlu0 1
    %1829 = vperm.xlu0 %1828, %v1817
    %v1830 = vpop.permute.xlu0 %1829
    %v1832 = vmul.f32 %v1830, %v794
    %v1833 = vadd.f32 %v1827, %v1832
    %v1834 = vadd.f32 %v1833, %v642
    %vm1835 = vcmp.gt.f32.partialorder %v1834, %v1819
    %v1836 = vsel %vm1835, 1.0, 0.0
    %v1838 = vsel %vm88, %v1836, 0
    %1840 = vmatprep.subr.mxu0 0.0
    %1841 = vmatpush1.msra.mxu0 %v767
    %1842 = vmatprep.subr.mxu0 0.0
    %1843 = vmatpush1.msra.mxu0 %v768
    %1844 = vmatprep.subr.mxu0 0.0
    %1845 = vmatpush1.msra.mxu0 %v769
    %1846 = vmatprep.subr.mxu0 0.0
    %1847 = vmatpush1.msra.mxu0 %v770
    %1848 = vmatprep.subr.mxu0 0.0
    %1849 = vmatpush1.msra.mxu0 %v771
    %1850 = vmatprep.subr.mxu0 0.0
    %1851 = vmatpush1.msra.mxu0 %v772
    %1852 = vmatprep.subr.mxu0 0.0
    %1853 = vmatpush1.msra.mxu0 %v804
    %1854 = vmatprep.subr.mxu0 0.0
    %1855 = vmatpush1.msra.mxu0 0.0
    %1856 = vmatprep.subr.mxu0 0.0
    %1857 = vmatpush1.msra.mxu0 0.0
    %1858 = vmatprep.subr.mxu0 0.0
    %1859 = vmatpush1.msra.mxu0 0.0
    %1860 = vmatprep.subr.mxu0 0.0
    %1861 = vmatpush1.msra.mxu0 0.0
    %1862 = vmatprep.subr.mxu0 0.0
    %1863 = vmatpush1.msra.mxu0 0.0
    %1864 = vmatprep.subr.mxu0 0.0
    %1865 = vmatpush1.msra.mxu0 0.0
    %1866 = vmatprep.subr.mxu0 0.0
    %1867 = vmatpush1.msra.mxu0 0.0
    %1868 = vmatprep.subr.mxu0 0.0
    %1869 = vmatpush1.msra.mxu0 0.0
    %1870 = vmatprep.subr.mxu0 0.0
    %1871 = vmatpush1.msra.mxu0 0.0
    %1872 = vmatprep.subr.mxu0 0.0
    %1873 = vmatpush1.msra.mxu0 0.0
    %1874 = vmatprep.subr.mxu0 0.0
    %1875 = vmatpush1.msra.mxu0 0.0
    %1876 = vmatprep.subr.mxu0 0.0
    %1877 = vmatpush1.msra.mxu0 0.0
    %1878 = vmatprep.subr.mxu0 0.0
    %1879 = vmatpush1.msra.mxu0 0.0
    %1880 = vmatprep.subr.mxu0 0.0
    %1881 = vmatpush1.msra.mxu0 0.0
    %1882 = vmatprep.subr.mxu0 0.0
    %1883 = vmatpush1.msra.mxu0 0.0
    %1884 = vmatprep.subr.mxu0 0.0
    %1885 = vmatpush1.msra.mxu0 0.0
    %1886 = vmatprep.subr.mxu0 0.0
    %1887 = vmatpush1.msra.mxu0 0.0
    %1888 = vmatprep.subr.mxu0 0.0
    %1889 = vmatpush1.msra.mxu0 0.0
    %1890 = vmatprep.subr.mxu0 0.0
    %1891 = vmatpush1.msra.mxu0 0.0
    %1892 = vmatprep.subr.mxu0 0.0
    %1893 = vmatpush1.msra.mxu0 0.0
    %1894 = vmatprep.subr.mxu0 0.0
    %1895 = vmatpush1.msra.mxu0 0.0
    %1896 = vmatprep.subr.mxu0 0.0
    %1897 = vmatpush1.msra.mxu0 0.0
    %1898 = vmatprep.subr.mxu0 0.0
    %1899 = vmatpush1.msra.mxu0 0.0
    %1900 = vmatprep.subr.mxu0 0.0
    %1901 = vmatpush1.msra.mxu0 0.0
    %1902 = vmatprep.subr.mxu0 0.0
    %1903 = vmatpush1.msra.mxu0 0.0
    %1904 = vmatprep.mubr.f32.mxu0 0.0
    %1905 = vmatmul.mubr.f32.gmra.mrb[0].mxu0 %v1838
    %v1906 = vpop.f32.mrb[0].mxu0
    %v1907 = vadd.f32 %v729, %v1906
    %v1908 = vpop.f32.mrb[0].mxu0
    %1909 = vdwg.mxu0
    %vm1910 = vcmp.gt.f32.partialorder %v1907, %v1821
    %v1911 = vsel %vm1910, 1.0, 0.0
    %s1912 = scalar_lea.vmem %s11, 96
    %v1913 = vld [vmem:[%s1912] sm:$0x7f]
    %s1914 = scalar_lea.vmem %s12, 96
    %v1915 = vld [vmem:[%s1914] sm:$0x7f]
    %1917 = vset.pattern.permute.xlu0 0
    %1918 = vperm.xlu0 %1917, %v1911
    %v1919 = vpop.permute.xlu0 %1918
    %v1921 = vmul.f32 %v1919, %v785
    %1922 = vset.pattern.permute.xlu0 1
    %1923 = vperm.xlu0 %1922, %v1911
    %v1924 = vpop.permute.xlu0 %1923
    %v1926 = vmul.f32 %v1924, %v794
    %v1927 = vadd.f32 %v1921, %v1926
    %v1928 = vadd.f32 %v1927, %v642
    %vm1929 = vcmp.gt.f32.partialorder %v1928, %v1913
    %v1930 = vsel %vm1929, 1.0, 0.0
    %v1932 = vsel %vm88, %v1930, 0
    %1934 = vmatprep.subr.mxu0 0.0
    %1935 = vmatpush1.msra.mxu0 %v767
    %1936 = vmatprep.subr.mxu0 0.0
    %1937 = vmatpush1.msra.mxu0 %v768
    %1938 = vmatprep.subr.mxu0 0.0
    %1939 = vmatpush1.msra.mxu0 %v769
    %1940 = vmatprep.subr.mxu0 0.0
    %1941 = vmatpush1.msra.mxu0 %v770
    %1942 = vmatprep.subr.mxu0 0.0
    %1943 = vmatpush1.msra.mxu0 %v771
    %1944 = vmatprep.subr.mxu0 0.0
    %1945 = vmatpush1.msra.mxu0 %v772
    %1946 = vmatprep.subr.mxu0 0.0
    %1947 = vmatpush1.msra.mxu0 %v804
    %1948 = vmatprep.subr.mxu0 0.0
    %1949 = vmatpush1.msra.mxu0 0.0
    %1950 = vmatprep.subr.mxu0 0.0
    %1951 = vmatpush1.msra.mxu0 0.0
    %1952 = vmatprep.subr.mxu0 0.0
    %1953 = vmatpush1.msra.mxu0 0.0
    %1954 = vmatprep.subr.mxu0 0.0
    %1955 = vmatpush1.msra.mxu0 0.0
    %1956 = vmatprep.subr.mxu0 0.0
    %1957 = vmatpush1.msra.mxu0 0.0
    %1958 = vmatprep.subr.mxu0 0.0
    %1959 = vmatpush1.msra.mxu0 0.0
    %1960 = vmatprep.subr.mxu0 0.0
    %1961 = vmatpush1.msra.mxu0 0.0
    %1962 = vmatprep.subr.mxu0 0.0
    %1963 = vmatpush1.msra.mxu0 0.0
    %1964 = vmatprep.subr.mxu0 0.0
    %1965 = vmatpush1.msra.mxu0 0.0
    %1966 = vmatprep.subr.mxu0 0.0
    %1967 = vmatpush1.msra.mxu0 0.0
    %1968 = vmatprep.subr.mxu0 0.0
    %1969 = vmatpush1.msra.mxu0 0.0
    %1970 = vmatprep.subr.mxu0 0.0
    %1971 = vmatpush1.msra.mxu0 0.0
    %1972 = vmatprep.subr.mxu0 0.0
    %1973 = vmatpush1.msra.mxu0 0.0
    %1974 = vmatprep.subr.mxu0 0.0
    %1975 = vmatpush1.msra.mxu0 0.0
    %1976 = vmatprep.subr.mxu0 0.0
    %1977 = vmatpush1.msra.mxu0 0.0
    %1978 = vmatprep.subr.mxu0 0.0
    %1979 = vmatpush1.msra.mxu0 0.0
    %1980 = vmatprep.subr.mxu0 0.0
    %1981 = vmatpush1.msra.mxu0 0.0
    %1982 = vmatprep.subr.mxu0 0.0
    %1983 = vmatpush1.msra.mxu0 0.0
    %1984 = vmatprep.subr.mxu0 0.0
    %1985 = vmatpush1.msra.mxu0 0.0
    %1986 = vmatprep.subr.mxu0 0.0
    %1987 = vmatpush1.msra.mxu0 0.0
    %1988 = vmatprep.subr.mxu0 0.0
    %1989 = vmatpush1.msra.mxu0 0.0
    %1990 = vmatprep.subr.mxu0 0.0
    %1991 = vmatpush1.msra.mxu0 0.0
    %1992 = vmatprep.subr.mxu0 0.0
    %1993 = vmatpush1.msra.mxu0 0.0
    %1994 = vmatprep.subr.mxu0 0.0
    %1995 = vmatpush1.msra.mxu0 0.0
    %1996 = vmatprep.subr.mxu0 0.0
    %1997 = vmatpush1.msra.mxu0 0.0
    %1998 = vmatprep.mubr.f32.mxu0 0.0
    %1999 = vmatmul.mubr.f32.gmra.mrb[0].mxu0 %v1932
    %v2000 = vpop.f32.mrb[0].mxu0
    %v2001 = vadd.f32 %v729, %v2000
    %v2002 = vpop.f32.mrb[0].mxu0
    %2003 = vdwg.mxu0
    %vm2004 = vcmp.gt.f32.partialorder %v2001, %v1915
    %v2005 = vsel %vm2004, 1.0, 0.0
    %s2006 = scalar_lea.vmem %s11, 104
    %v2007 = vld [vmem:[%s2006] sm:$0x7f]
    %s2008 = scalar_lea.vmem %s12, 104
    %v2009 = vld [vmem:[%s2008] sm:$0x7f]
    %2011 = vset.pattern.permute.xlu0 0
    %2012 = vperm.xlu0 %2011, %v2005
    %v2013 = vpop.permute.xlu0 %2012
    %v2015 = vmul.f32 %v2013, %v785
    %2016 = vset.pattern.permute.xlu0 1
    %2017 = vperm.xlu0 %2016, %v2005
    %v2018 = vpop.permute.xlu0 %2017
    %v2020 = vmul.f32 %v2018, %v794
    %v2021 = vadd.f32 %v2015, %v2020
    %v2022 = vadd.f32 %v2021, %v642
    %vm2023 = vcmp.gt.f32.partialorder %v2022, %v2007
    %v2024 = vsel %vm2023, 1.0, 0.0
    %v2026 = vsel %vm88, %v2024, 0
    %2028 = vmatprep.subr.mxu0 0.0
    %2029 = vmatpush1.msra.mxu0 %v767
    %2030 = vmatprep.subr.mxu0 0.0
    %2031 = vmatpush1.msra.mxu0 %v768
    %2032 = vmatprep.subr.mxu0 0.0
    %2033 = vmatpush1.msra.mxu0 %v769
    %2034 = vmatprep.subr.mxu0 0.0
    %2035 = vmatpush1.msra.mxu0 %v770
    %2036 = vmatprep.subr.mxu0 0.0
    %2037 = vmatpush1.msra.mxu0 %v771
    %2038 = vmatprep.subr.mxu0 0.0
    %2039 = vmatpush1.msra.mxu0 %v772
    %2040 = vmatprep.subr.mxu0 0.0
    %2041 = vmatpush1.msra.mxu0 %v804
    %2042 = vmatprep.subr.mxu0 0.0
    %2043 = vmatpush1.msra.mxu0 0.0
    %2044 = vmatprep.subr.mxu0 0.0
    %2045 = vmatpush1.msra.mxu0 0.0
    %2046 = vmatprep.subr.mxu0 0.0
    %2047 = vmatpush1.msra.mxu0 0.0
    %2048 = vmatprep.subr.mxu0 0.0
    %2049 = vmatpush1.msra.mxu0 0.0
    %2050 = vmatprep.subr.mxu0 0.0
    %2051 = vmatpush1.msra.mxu0 0.0
    %2052 = vmatprep.subr.mxu0 0.0
    %2053 = vmatpush1.msra.mxu0 0.0
    %2054 = vmatprep.subr.mxu0 0.0
    %2055 = vmatpush1.msra.mxu0 0.0
    %2056 = vmatprep.subr.mxu0 0.0
    %2057 = vmatpush1.msra.mxu0 0.0
    %2058 = vmatprep.subr.mxu0 0.0
    %2059 = vmatpush1.msra.mxu0 0.0
    %2060 = vmatprep.subr.mxu0 0.0
    %2061 = vmatpush1.msra.mxu0 0.0
    %2062 = vmatprep.subr.mxu0 0.0
    %2063 = vmatpush1.msra.mxu0 0.0
    %2064 = vmatprep.subr.mxu0 0.0
    %2065 = vmatpush1.msra.mxu0 0.0
    %2066 = vmatprep.subr.mxu0 0.0
    %2067 = vmatpush1.msra.mxu0 0.0
    %2068 = vmatprep.subr.mxu0 0.0
    %2069 = vmatpush1.msra.mxu0 0.0
    %2070 = vmatprep.subr.mxu0 0.0
    %2071 = vmatpush1.msra.mxu0 0.0
    %2072 = vmatprep.subr.mxu0 0.0
    %2073 = vmatpush1.msra.mxu0 0.0
    %2074 = vmatprep.subr.mxu0 0.0
    %2075 = vmatpush1.msra.mxu0 0.0
    %2076 = vmatprep.subr.mxu0 0.0
    %2077 = vmatpush1.msra.mxu0 0.0
    %2078 = vmatprep.subr.mxu0 0.0
    %2079 = vmatpush1.msra.mxu0 0.0
    %2080 = vmatprep.subr.mxu0 0.0
    %2081 = vmatpush1.msra.mxu0 0.0
    %2082 = vmatprep.subr.mxu0 0.0
    %2083 = vmatpush1.msra.mxu0 0.0
    %2084 = vmatprep.subr.mxu0 0.0
    %2085 = vmatpush1.msra.mxu0 0.0
    %2086 = vmatprep.subr.mxu0 0.0
    %2087 = vmatpush1.msra.mxu0 0.0
    %2088 = vmatprep.subr.mxu0 0.0
    %2089 = vmatpush1.msra.mxu0 0.0
    %2090 = vmatprep.subr.mxu0 0.0
    %2091 = vmatpush1.msra.mxu0 0.0
    %2092 = vmatprep.mubr.f32.mxu0 0.0
    %2093 = vmatmul.mubr.f32.gmra.mrb[0].mxu0 %v2026
    %v2094 = vpop.f32.mrb[0].mxu0
    %v2095 = vadd.f32 %v729, %v2094
    %v2096 = vpop.f32.mrb[0].mxu0
    %2097 = vdwg.mxu0
    %vm2098 = vcmp.gt.f32.partialorder %v2095, %v2009
    %v2099 = vsel %vm2098, 1.0, 0.0
    %s2100 = scalar_lea.vmem %s11, 112
    %v2101 = vld [vmem:[%s2100] sm:$0x7f]
    %s2102 = scalar_lea.vmem %s12, 112
    %v2103 = vld [vmem:[%s2102] sm:$0x7f]
    %2105 = vset.pattern.permute.xlu0 0
    %2106 = vperm.xlu0 %2105, %v2099
    %v2107 = vpop.permute.xlu0 %2106
    %v2109 = vmul.f32 %v2107, %v785
    %2110 = vset.pattern.permute.xlu0 1
    %2111 = vperm.xlu0 %2110, %v2099
    %v2112 = vpop.permute.xlu0 %2111
    %v2114 = vmul.f32 %v2112, %v794
    %v2115 = vadd.f32 %v2109, %v2114
    %v2116 = vadd.f32 %v2115, %v642
    %vm2117 = vcmp.gt.f32.partialorder %v2116, %v2101
    %v2118 = vsel %vm2117, 1.0, 0.0
    %v2120 = vsel %vm88, %v2118, 0
    %2122 = vmatprep.subr.mxu0 0.0
    %2123 = vmatpush1.msra.mxu0 %v767
    %2124 = vmatprep.subr.mxu0 0.0
    %2125 = vmatpush1.msra.mxu0 %v768
    %2126 = vmatprep.subr.mxu0 0.0
    %2127 = vmatpush1.msra.mxu0 %v769
    %2128 = vmatprep.subr.mxu0 0.0
    %2129 = vmatpush1.msra.mxu0 %v770
    %2130 = vmatprep.subr.mxu0 0.0
    %2131 = vmatpush1.msra.mxu0 %v771
    %2132 = vmatprep.subr.mxu0 0.0
    %2133 = vmatpush1.msra.mxu0 %v772
    %2134 = vmatprep.subr.mxu0 0.0
    %2135 = vmatpush1.msra.mxu0 %v804
    %2136 = vmatprep.subr.mxu0 0.0
    %2137 = vmatpush1.msra.mxu0 0.0
    %2138 = vmatprep.subr.mxu0 0.0
    %2139 = vmatpush1.msra.mxu0 0.0
    %2140 = vmatprep.subr.mxu0 0.0
    %2141 = vmatpush1.msra.mxu0 0.0
    %2142 = vmatprep.subr.mxu0 0.0
    %2143 = vmatpush1.msra.mxu0 0.0
    %2144 = vmatprep.subr.mxu0 0.0
    %2145 = vmatpush1.msra.mxu0 0.0
    %2146 = vmatprep.subr.mxu0 0.0
    %2147 = vmatpush1.msra.mxu0 0.0
    %2148 = vmatprep.subr.mxu0 0.0
    %2149 = vmatpush1.msra.mxu0 0.0
    %2150 = vmatprep.subr.mxu0 0.0
    %2151 = vmatpush1.msra.mxu0 0.0
    %2152 = vmatprep.subr.mxu0 0.0
    %2153 = vmatpush1.msra.mxu0 0.0
    %2154 = vmatprep.subr.mxu0 0.0
    %2155 = vmatpush1.msra.mxu0 0.0
    %2156 = vmatprep.subr.mxu0 0.0
    %2157 = vmatpush1.msra.mxu0 0.0
    %2158 = vmatprep.subr.mxu0 0.0
    %2159 = vmatpush1.msra.mxu0 0.0
    %2160 = vmatprep.subr.mxu0 0.0
    %2161 = vmatpush1.msra.mxu0 0.0
    %2162 = vmatprep.subr.mxu0 0.0
    %2163 = vmatpush1.msra.mxu0 0.0
    %2164 = vmatprep.subr.mxu0 0.0
    %2165 = vmatpush1.msra.mxu0 0.0
    %2166 = vmatprep.subr.mxu0 0.0
    %2167 = vmatpush1.msra.mxu0 0.0
    %2168 = vmatprep.subr.mxu0 0.0
    %2169 = vmatpush1.msra.mxu0 0.0
    %2170 = vmatprep.subr.mxu0 0.0
    %2171 = vmatpush1.msra.mxu0 0.0
    %2172 = vmatprep.subr.mxu0 0.0
    %2173 = vmatpush1.msra.mxu0 0.0
    %2174 = vmatprep.subr.mxu0 0.0
    %2175 = vmatpush1.msra.mxu0 0.0
    %2176 = vmatprep.subr.mxu0 0.0
    %2177 = vmatpush1.msra.mxu0 0.0
    %2178 = vmatprep.subr.mxu0 0.0
    %2179 = vmatpush1.msra.mxu0 0.0
    %2180 = vmatprep.subr.mxu0 0.0
    %2181 = vmatpush1.msra.mxu0 0.0
    %2182 = vmatprep.subr.mxu0 0.0
    %2183 = vmatpush1.msra.mxu0 0.0
    %2184 = vmatprep.subr.mxu0 0.0
    %2185 = vmatpush1.msra.mxu0 0.0
    %2186 = vmatprep.mubr.f32.mxu0 0.0
    %2187 = vmatmul.mubr.f32.gmra.mrb[0].mxu0 %v2120
    %v2188 = vpop.f32.mrb[0].mxu0
    %v2189 = vadd.f32 %v729, %v2188
    %v2190 = vpop.f32.mrb[0].mxu0
    %2191 = vdwg.mxu0
    %vm2192 = vcmp.gt.f32.partialorder %v2189, %v2103
    %v2193 = vsel %vm2192, 1.0, 0.0
    %s2194 = scalar_lea.vmem %s11, 120
    %v2195 = vld [vmem:[%s2194] sm:$0x7f]
    %s2196 = scalar_lea.vmem %s12, 120
    %v2197 = vld [vmem:[%s2196] sm:$0x7f]
    %2199 = vset.pattern.permute.xlu0 0
    %2200 = vperm.xlu0 %2199, %v2193
    %v2201 = vpop.permute.xlu0 %2200
    %v2203 = vmul.f32 %v2201, %v785
    %2204 = vset.pattern.permute.xlu0 1
    %2205 = vperm.xlu0 %2204, %v2193
    %v2206 = vpop.permute.xlu0 %2205
    %v2208 = vmul.f32 %v2206, %v794
    %v2209 = vadd.f32 %v2203, %v2208
    %v2210 = vadd.f32 %v2209, %v642
    %vm2211 = vcmp.gt.f32.partialorder %v2210, %v2195
    %v2212 = vsel %vm2211, 1.0, 0.0
    %v2214 = vsel %vm88, %v2212, 0
    %2216 = vmatprep.subr.mxu0 0.0
    %2217 = vmatpush1.msra.mxu0 %v767
    %2218 = vmatprep.subr.mxu0 0.0
    %2219 = vmatpush1.msra.mxu0 %v768
    %2220 = vmatprep.subr.mxu0 0.0
    %2221 = vmatpush1.msra.mxu0 %v769
    %2222 = vmatprep.subr.mxu0 0.0
    %2223 = vmatpush1.msra.mxu0 %v770
    %2224 = vmatprep.subr.mxu0 0.0
    %2225 = vmatpush1.msra.mxu0 %v771
    %2226 = vmatprep.subr.mxu0 0.0
    %2227 = vmatpush1.msra.mxu0 %v772
    %2228 = vmatprep.subr.mxu0 0.0
    %2229 = vmatpush1.msra.mxu0 %v804
    %2230 = vmatprep.subr.mxu0 0.0
    %2231 = vmatpush1.msra.mxu0 0.0
    %2232 = vmatprep.subr.mxu0 0.0
    %2233 = vmatpush1.msra.mxu0 0.0
    %2234 = vmatprep.subr.mxu0 0.0
    %2235 = vmatpush1.msra.mxu0 0.0
    %2236 = vmatprep.subr.mxu0 0.0
    %2237 = vmatpush1.msra.mxu0 0.0
    %2238 = vmatprep.subr.mxu0 0.0
    %2239 = vmatpush1.msra.mxu0 0.0
    %2240 = vmatprep.subr.mxu0 0.0
    %2241 = vmatpush1.msra.mxu0 0.0
    %2242 = vmatprep.subr.mxu0 0.0
    %2243 = vmatpush1.msra.mxu0 0.0
    %2244 = vmatprep.subr.mxu0 0.0
    %2245 = vmatpush1.msra.mxu0 0.0
    %2246 = vmatprep.subr.mxu0 0.0
    %2247 = vmatpush1.msra.mxu0 0.0
    %2248 = vmatprep.subr.mxu0 0.0
    %2249 = vmatpush1.msra.mxu0 0.0
    %2250 = vmatprep.subr.mxu0 0.0
    %2251 = vmatpush1.msra.mxu0 0.0
    %2252 = vmatprep.subr.mxu0 0.0
    %2253 = vmatpush1.msra.mxu0 0.0
    %2254 = vmatprep.subr.mxu0 0.0
    %2255 = vmatpush1.msra.mxu0 0.0
    %2256 = vmatprep.subr.mxu0 0.0
    %2257 = vmatpush1.msra.mxu0 0.0
    %2258 = vmatprep.subr.mxu0 0.0
    %2259 = vmatpush1.msra.mxu0 0.0
    %2260 = vmatprep.subr.mxu0 0.0
    %2261 = vmatpush1.msra.mxu0 0.0
    %2262 = vmatprep.subr.mxu0 0.0
    %2263 = vmatpush1.msra.mxu0 0.0
    %2264 = vmatprep.subr.mxu0 0.0
    %2265 = vmatpush1.msra.mxu0 0.0
    %2266 = vmatprep.subr.mxu0 0.0
    %2267 = vmatpush1.msra.mxu0 0.0
    %2268 = vmatprep.subr.mxu0 0.0
    %2269 = vmatpush1.msra.mxu0 0.0
    %2270 = vmatprep.subr.mxu0 0.0
    %2271 = vmatpush1.msra.mxu0 0.0
    %2272 = vmatprep.subr.mxu0 0.0
    %2273 = vmatpush1.msra.mxu0 0.0
    %2274 = vmatprep.subr.mxu0 0.0
    %2275 = vmatpush1.msra.mxu0 0.0
    %2276 = vmatprep.subr.mxu0 0.0
    %2277 = vmatpush1.msra.mxu0 0.0
    %2278 = vmatprep.subr.mxu0 0.0
    %2279 = vmatpush1.msra.mxu0 0.0
    %2280 = vmatprep.mubr.f32.mxu0 0.0
    %2281 = vmatmul.mubr.f32.gmra.mrb[0].mxu0 %v2214
    %v2282 = vpop.f32.mrb[0].mxu0
    %v2283 = vadd.f32 %v729, %v2282
    %v2284 = vpop.f32.mrb[0].mxu0
    %2285 = vdwg.mxu0
    %vm2286 = vcmp.gt.f32.partialorder %v2283, %v2197
    %v2287 = vsel %vm2286, 1.0, 0.0
    %s2288 = scalar_lea.vmem %s11, 128
    %v2289 = vld [vmem:[%s2288] sm:$0x7f]
    %s2290 = scalar_lea.vmem %s12, 128
    %v2291 = vld [vmem:[%s2290] sm:$0x7f]
    %2293 = vset.pattern.permute.xlu0 0
    %2294 = vperm.xlu0 %2293, %v2287
    %v2295 = vpop.permute.xlu0 %2294
    %v2297 = vmul.f32 %v2295, %v785
    %2298 = vset.pattern.permute.xlu0 1
    %2299 = vperm.xlu0 %2298, %v2287
    %v2300 = vpop.permute.xlu0 %2299
    %v2302 = vmul.f32 %v2300, %v794
    %v2303 = vadd.f32 %v2297, %v2302
    %v2304 = vadd.f32 %v2303, %v642
    %vm2305 = vcmp.gt.f32.partialorder %v2304, %v2289
    %v2306 = vsel %vm2305, 1.0, 0.0
    %v2308 = vsel %vm88, %v2306, 0
    %2310 = vmatprep.subr.mxu0 0.0
    %2311 = vmatpush1.msra.mxu0 %v767
    %2312 = vmatprep.subr.mxu0 0.0
    %2313 = vmatpush1.msra.mxu0 %v768
    %2314 = vmatprep.subr.mxu0 0.0
    %2315 = vmatpush1.msra.mxu0 %v769
    %2316 = vmatprep.subr.mxu0 0.0
    %2317 = vmatpush1.msra.mxu0 %v770
    %2318 = vmatprep.subr.mxu0 0.0
    %2319 = vmatpush1.msra.mxu0 %v771
    %2320 = vmatprep.subr.mxu0 0.0
    %2321 = vmatpush1.msra.mxu0 %v772
    %2322 = vmatprep.subr.mxu0 0.0
    %2323 = vmatpush1.msra.mxu0 %v804
    %2324 = vmatprep.subr.mxu0 0.0
    %2325 = vmatpush1.msra.mxu0 0.0
    %2326 = vmatprep.subr.mxu0 0.0
    %2327 = vmatpush1.msra.mxu0 0.0
    %2328 = vmatprep.subr.mxu0 0.0
    %2329 = vmatpush1.msra.mxu0 0.0
    %2330 = vmatprep.subr.mxu0 0.0
    %2331 = vmatpush1.msra.mxu0 0.0
    %2332 = vmatprep.subr.mxu0 0.0
    %2333 = vmatpush1.msra.mxu0 0.0
    %2334 = vmatprep.subr.mxu0 0.0
    %2335 = vmatpush1.msra.mxu0 0.0
    %2336 = vmatprep.subr.mxu0 0.0
    %2337 = vmatpush1.msra.mxu0 0.0
    %2338 = vmatprep.subr.mxu0 0.0
    %2339 = vmatpush1.msra.mxu0 0.0
    %2340 = vmatprep.subr.mxu0 0.0
    %2341 = vmatpush1.msra.mxu0 0.0
    %2342 = vmatprep.subr.mxu0 0.0
    %2343 = vmatpush1.msra.mxu0 0.0
    %2344 = vmatprep.subr.mxu0 0.0
    %2345 = vmatpush1.msra.mxu0 0.0
    %2346 = vmatprep.subr.mxu0 0.0
    %2347 = vmatpush1.msra.mxu0 0.0
    %2348 = vmatprep.subr.mxu0 0.0
    %2349 = vmatpush1.msra.mxu0 0.0
    %2350 = vmatprep.subr.mxu0 0.0
    %2351 = vmatpush1.msra.mxu0 0.0
    %2352 = vmatprep.subr.mxu0 0.0
    %2353 = vmatpush1.msra.mxu0 0.0
    %2354 = vmatprep.subr.mxu0 0.0
    %2355 = vmatpush1.msra.mxu0 0.0
    %2356 = vmatprep.subr.mxu0 0.0
    %2357 = vmatpush1.msra.mxu0 0.0
    %2358 = vmatprep.subr.mxu0 0.0
    %2359 = vmatpush1.msra.mxu0 0.0
    %2360 = vmatprep.subr.mxu0 0.0
    %2361 = vmatpush1.msra.mxu0 0.0
    %2362 = vmatprep.subr.mxu0 0.0
    %2363 = vmatpush1.msra.mxu0 0.0
    %2364 = vmatprep.subr.mxu0 0.0
    %2365 = vmatpush1.msra.mxu0 0.0
    %2366 = vmatprep.subr.mxu0 0.0
    %2367 = vmatpush1.msra.mxu0 0.0
    %2368 = vmatprep.subr.mxu0 0.0
    %2369 = vmatpush1.msra.mxu0 0.0
    %2370 = vmatprep.subr.mxu0 0.0
    %2371 = vmatpush1.msra.mxu0 0.0
    %2372 = vmatprep.subr.mxu0 0.0
    %2373 = vmatpush1.msra.mxu0 0.0
    %2374 = vmatprep.mubr.f32.mxu0 0.0
    %2375 = vmatmul.mubr.f32.gmra.mrb[0].mxu0 %v2308
    %v2376 = vpop.f32.mrb[0].mxu0
    %v2377 = vadd.f32 %v729, %v2376
    %v2378 = vpop.f32.mrb[0].mxu0
    %2379 = vdwg.mxu0
    %vm2380 = vcmp.gt.f32.partialorder %v2377, %v2291
    %v2381 = vsel %vm2380, 1.0, 0.0
    %s2382 = scalar_lea.vmem %s11, 136
    %v2383 = vld [vmem:[%s2382] sm:$0x7f]
    %s2384 = scalar_lea.vmem %s12, 136
    %v2385 = vld [vmem:[%s2384] sm:$0x7f]
    %2387 = vset.pattern.permute.xlu0 0
    %2388 = vperm.xlu0 %2387, %v2381
    %v2389 = vpop.permute.xlu0 %2388
    %v2391 = vmul.f32 %v2389, %v785
    %2392 = vset.pattern.permute.xlu0 1
    %2393 = vperm.xlu0 %2392, %v2381
    %v2394 = vpop.permute.xlu0 %2393
    %v2396 = vmul.f32 %v2394, %v794
    %v2397 = vadd.f32 %v2391, %v2396
    %v2398 = vadd.f32 %v2397, %v642
    %vm2399 = vcmp.gt.f32.partialorder %v2398, %v2383
    %v2400 = vsel %vm2399, 1.0, 0.0
    %v2402 = vsel %vm88, %v2400, 0
    %2404 = vmatprep.subr.mxu0 0.0
    %2405 = vmatpush1.msra.mxu0 %v767
    %2406 = vmatprep.subr.mxu0 0.0
    %2407 = vmatpush1.msra.mxu0 %v768
    %2408 = vmatprep.subr.mxu0 0.0
    %2409 = vmatpush1.msra.mxu0 %v769
    %2410 = vmatprep.subr.mxu0 0.0
    %2411 = vmatpush1.msra.mxu0 %v770
    %2412 = vmatprep.subr.mxu0 0.0
    %2413 = vmatpush1.msra.mxu0 %v771
    %2414 = vmatprep.subr.mxu0 0.0
    %2415 = vmatpush1.msra.mxu0 %v772
    %2416 = vmatprep.subr.mxu0 0.0
    %2417 = vmatpush1.msra.mxu0 %v804
    %2418 = vmatprep.subr.mxu0 0.0
    %2419 = vmatpush1.msra.mxu0 0.0
    %2420 = vmatprep.subr.mxu0 0.0
    %2421 = vmatpush1.msra.mxu0 0.0
    %2422 = vmatprep.subr.mxu0 0.0
    %2423 = vmatpush1.msra.mxu0 0.0
    %2424 = vmatprep.subr.mxu0 0.0
    %2425 = vmatpush1.msra.mxu0 0.0
    %2426 = vmatprep.subr.mxu0 0.0
    %2427 = vmatpush1.msra.mxu0 0.0
    %2428 = vmatprep.subr.mxu0 0.0
    %2429 = vmatpush1.msra.mxu0 0.0
    %2430 = vmatprep.subr.mxu0 0.0
    %2431 = vmatpush1.msra.mxu0 0.0
    %2432 = vmatprep.subr.mxu0 0.0
    %2433 = vmatpush1.msra.mxu0 0.0
    %2434 = vmatprep.subr.mxu0 0.0
    %2435 = vmatpush1.msra.mxu0 0.0
    %2436 = vmatprep.subr.mxu0 0.0
    %2437 = vmatpush1.msra.mxu0 0.0
    %2438 = vmatprep.subr.mxu0 0.0
    %2439 = vmatpush1.msra.mxu0 0.0
    %2440 = vmatprep.subr.mxu0 0.0
    %2441 = vmatpush1.msra.mxu0 0.0
    %2442 = vmatprep.subr.mxu0 0.0
    %2443 = vmatpush1.msra.mxu0 0.0
    %2444 = vmatprep.subr.mxu0 0.0
    %2445 = vmatpush1.msra.mxu0 0.0
    %2446 = vmatprep.subr.mxu0 0.0
    %2447 = vmatpush1.msra.mxu0 0.0
    %2448 = vmatprep.subr.mxu0 0.0
    %2449 = vmatpush1.msra.mxu0 0.0
    %2450 = vmatprep.subr.mxu0 0.0
    %2451 = vmatpush1.msra.mxu0 0.0
    %2452 = vmatprep.subr.mxu0 0.0
    %2453 = vmatpush1.msra.mxu0 0.0
    %2454 = vmatprep.subr.mxu0 0.0
    %2455 = vmatpush1.msra.mxu0 0.0
    %2456 = vmatprep.subr.mxu0 0.0
    %2457 = vmatpush1.msra.mxu0 0.0
    %2458 = vmatprep.subr.mxu0 0.0
    %2459 = vmatpush1.msra.mxu0 0.0
    %2460 = vmatprep.subr.mxu0 0.0
    %2461 = vmatpush1.msra.mxu0 0.0
    %2462 = vmatprep.subr.mxu0 0.0
    %2463 = vmatpush1.msra.mxu0 0.0
    %2464 = vmatprep.subr.mxu0 0.0
    %2465 = vmatpush1.msra.mxu0 0.0
    %2466 = vmatprep.subr.mxu0 0.0
    %2467 = vmatpush1.msra.mxu0 0.0
    %2468 = vmatprep.mubr.f32.mxu0 0.0
    %2469 = vmatmul.mubr.f32.gmra.mrb[0].mxu0 %v2402
    %v2470 = vpop.f32.mrb[0].mxu0
    %v2471 = vadd.f32 %v729, %v2470
    %v2472 = vpop.f32.mrb[0].mxu0
    %2473 = vdwg.mxu0
    %vm2474 = vcmp.gt.f32.partialorder %v2471, %v2385
    %v2475 = vsel %vm2474, 1.0, 0.0
    %s2476 = scalar_lea.vmem %s11, 144
    %v2477 = vld [vmem:[%s2476] sm:$0x7f]
    %s2478 = scalar_lea.vmem %s12, 144
    %v2479 = vld [vmem:[%s2478] sm:$0x7f]
    %2481 = vset.pattern.permute.xlu0 0
    %2482 = vperm.xlu0 %2481, %v2475
    %v2483 = vpop.permute.xlu0 %2482
    %v2485 = vmul.f32 %v2483, %v785
    %2486 = vset.pattern.permute.xlu0 1
    %2487 = vperm.xlu0 %2486, %v2475
    %v2488 = vpop.permute.xlu0 %2487
    %v2490 = vmul.f32 %v2488, %v794
    %v2491 = vadd.f32 %v2485, %v2490
    %v2492 = vadd.f32 %v2491, %v642
    %vm2493 = vcmp.gt.f32.partialorder %v2492, %v2477
    %v2494 = vsel %vm2493, 1.0, 0.0
    %v2496 = vsel %vm88, %v2494, 0
    %2498 = vmatprep.subr.mxu0 0.0
    %2499 = vmatpush1.msra.mxu0 %v767
    %2500 = vmatprep.subr.mxu0 0.0
    %2501 = vmatpush1.msra.mxu0 %v768
    %2502 = vmatprep.subr.mxu0 0.0
    %2503 = vmatpush1.msra.mxu0 %v769
    %2504 = vmatprep.subr.mxu0 0.0
    %2505 = vmatpush1.msra.mxu0 %v770
    %2506 = vmatprep.subr.mxu0 0.0
    %2507 = vmatpush1.msra.mxu0 %v771
    %2508 = vmatprep.subr.mxu0 0.0
    %2509 = vmatpush1.msra.mxu0 %v772
    %2510 = vmatprep.subr.mxu0 0.0
    %2511 = vmatpush1.msra.mxu0 %v804
    %2512 = vmatprep.subr.mxu0 0.0
    %2513 = vmatpush1.msra.mxu0 0.0
    %2514 = vmatprep.subr.mxu0 0.0
    %2515 = vmatpush1.msra.mxu0 0.0
    %2516 = vmatprep.subr.mxu0 0.0
    %2517 = vmatpush1.msra.mxu0 0.0
    %2518 = vmatprep.subr.mxu0 0.0
    %2519 = vmatpush1.msra.mxu0 0.0
    %2520 = vmatprep.subr.mxu0 0.0
    %2521 = vmatpush1.msra.mxu0 0.0
    %2522 = vmatprep.subr.mxu0 0.0
    %2523 = vmatpush1.msra.mxu0 0.0
    %2524 = vmatprep.subr.mxu0 0.0
    %2525 = vmatpush1.msra.mxu0 0.0
    %2526 = vmatprep.subr.mxu0 0.0
    %2527 = vmatpush1.msra.mxu0 0.0
    %2528 = vmatprep.subr.mxu0 0.0
    %2529 = vmatpush1.msra.mxu0 0.0
    %2530 = vmatprep.subr.mxu0 0.0
    %2531 = vmatpush1.msra.mxu0 0.0
    %2532 = vmatprep.subr.mxu0 0.0
    %2533 = vmatpush1.msra.mxu0 0.0
    %2534 = vmatprep.subr.mxu0 0.0
    %2535 = vmatpush1.msra.mxu0 0.0
    %2536 = vmatprep.subr.mxu0 0.0
    %2537 = vmatpush1.msra.mxu0 0.0
    %2538 = vmatprep.subr.mxu0 0.0
    %2539 = vmatpush1.msra.mxu0 0.0
    %2540 = vmatprep.subr.mxu0 0.0
    %2541 = vmatpush1.msra.mxu0 0.0
    %2542 = vmatprep.subr.mxu0 0.0
    %2543 = vmatpush1.msra.mxu0 0.0
    %2544 = vmatprep.subr.mxu0 0.0
    %2545 = vmatpush1.msra.mxu0 0.0
    %2546 = vmatprep.subr.mxu0 0.0
    %2547 = vmatpush1.msra.mxu0 0.0
    %2548 = vmatprep.subr.mxu0 0.0
    %2549 = vmatpush1.msra.mxu0 0.0
    %2550 = vmatprep.subr.mxu0 0.0
    %2551 = vmatpush1.msra.mxu0 0.0
    %2552 = vmatprep.subr.mxu0 0.0
    %2553 = vmatpush1.msra.mxu0 0.0
    %2554 = vmatprep.subr.mxu0 0.0
    %2555 = vmatpush1.msra.mxu0 0.0
    %2556 = vmatprep.subr.mxu0 0.0
    %2557 = vmatpush1.msra.mxu0 0.0
    %2558 = vmatprep.subr.mxu0 0.0
    %2559 = vmatpush1.msra.mxu0 0.0
    %2560 = vmatprep.subr.mxu0 0.0
    %2561 = vmatpush1.msra.mxu0 0.0
    %2562 = vmatprep.mubr.f32.mxu0 0.0
    %2563 = vmatmul.mubr.f32.gmra.mrb[0].mxu0 %v2496
    %v2564 = vpop.f32.mrb[0].mxu0
    %v2565 = vadd.f32 %v729, %v2564
    %v2566 = vpop.f32.mrb[0].mxu0
    %2567 = vdwg.mxu0
    %vm2568 = vcmp.gt.f32.partialorder %v2565, %v2479
    %v2569 = vsel %vm2568, 1.0, 0.0
    %s2570 = scalar_lea.vmem %s11, 152
    %v2571 = vld [vmem:[%s2570] sm:$0x7f]
    %s2572 = scalar_lea.vmem %s12, 152
    %v2573 = vld [vmem:[%s2572] sm:$0x7f]
    %2575 = vset.pattern.permute.xlu0 0
    %2576 = vperm.xlu0 %2575, %v2569
    %v2577 = vpop.permute.xlu0 %2576
    %v2579 = vmul.f32 %v2577, %v785
    %2580 = vset.pattern.permute.xlu0 1
    %2581 = vperm.xlu0 %2580, %v2569
    %v2582 = vpop.permute.xlu0 %2581
    %v2584 = vmul.f32 %v2582, %v794
    %v2585 = vadd.f32 %v2579, %v2584
    %v2586 = vadd.f32 %v2585, %v642
    %vm2587 = vcmp.gt.f32.partialorder %v2586, %v2571
    %v2588 = vsel %vm2587, 1.0, 0.0
    %v2590 = vsel %vm88, %v2588, 0
    %2592 = vmatprep.subr.mxu0 0.0
    %2593 = vmatpush1.msra.mxu0 %v767
    %2594 = vmatprep.subr.mxu0 0.0
    %2595 = vmatpush1.msra.mxu0 %v768
    %2596 = vmatprep.subr.mxu0 0.0
    %2597 = vmatpush1.msra.mxu0 %v769
    %2598 = vmatprep.subr.mxu0 0.0
    %2599 = vmatpush1.msra.mxu0 %v770
    %2600 = vmatprep.subr.mxu0 0.0
    %2601 = vmatpush1.msra.mxu0 %v771
    %2602 = vmatprep.subr.mxu0 0.0
    %2603 = vmatpush1.msra.mxu0 %v772
    %2604 = vmatprep.subr.mxu0 0.0
    %2605 = vmatpush1.msra.mxu0 %v804
    %2606 = vmatprep.subr.mxu0 0.0
    %2607 = vmatpush1.msra.mxu0 0.0
    %2608 = vmatprep.subr.mxu0 0.0
    %2609 = vmatpush1.msra.mxu0 0.0
    %2610 = vmatprep.subr.mxu0 0.0
    %2611 = vmatpush1.msra.mxu0 0.0
    %2612 = vmatprep.subr.mxu0 0.0
    %2613 = vmatpush1.msra.mxu0 0.0
    %2614 = vmatprep.subr.mxu0 0.0
    %2615 = vmatpush1.msra.mxu0 0.0
    %2616 = vmatprep.subr.mxu0 0.0
    %2617 = vmatpush1.msra.mxu0 0.0
    %2618 = vmatprep.subr.mxu0 0.0
    %2619 = vmatpush1.msra.mxu0 0.0
    %2620 = vmatprep.subr.mxu0 0.0
    %2621 = vmatpush1.msra.mxu0 0.0
    %2622 = vmatprep.subr.mxu0 0.0
    %2623 = vmatpush1.msra.mxu0 0.0
    %2624 = vmatprep.subr.mxu0 0.0
    %2625 = vmatpush1.msra.mxu0 0.0
    %2626 = vmatprep.subr.mxu0 0.0
    %2627 = vmatpush1.msra.mxu0 0.0
    %2628 = vmatprep.subr.mxu0 0.0
    %2629 = vmatpush1.msra.mxu0 0.0
    %2630 = vmatprep.subr.mxu0 0.0
    %2631 = vmatpush1.msra.mxu0 0.0
    %2632 = vmatprep.subr.mxu0 0.0
    %2633 = vmatpush1.msra.mxu0 0.0
    %2634 = vmatprep.subr.mxu0 0.0
    %2635 = vmatpush1.msra.mxu0 0.0
    %2636 = vmatprep.subr.mxu0 0.0
    %2637 = vmatpush1.msra.mxu0 0.0
    %2638 = vmatprep.subr.mxu0 0.0
    %2639 = vmatpush1.msra.mxu0 0.0
    %2640 = vmatprep.subr.mxu0 0.0
    %2641 = vmatpush1.msra.mxu0 0.0
    %2642 = vmatprep.subr.mxu0 0.0
    %2643 = vmatpush1.msra.mxu0 0.0
    %2644 = vmatprep.subr.mxu0 0.0
    %2645 = vmatpush1.msra.mxu0 0.0
    %2646 = vmatprep.subr.mxu0 0.0
    %2647 = vmatpush1.msra.mxu0 0.0
    %2648 = vmatprep.subr.mxu0 0.0
    %2649 = vmatpush1.msra.mxu0 0.0
    %2650 = vmatprep.subr.mxu0 0.0
    %2651 = vmatpush1.msra.mxu0 0.0
    %2652 = vmatprep.subr.mxu0 0.0
    %2653 = vmatpush1.msra.mxu0 0.0
    %2654 = vmatprep.subr.mxu0 0.0
    %2655 = vmatpush1.msra.mxu0 0.0
    %2656 = vmatprep.mubr.f32.mxu0 0.0
    %2657 = vmatmul.mubr.f32.gmra.mrb[0].mxu0 %v2590
    %v2658 = vpop.f32.mrb[0].mxu0
    %v2659 = vadd.f32 %v729, %v2658
    %v2660 = vpop.f32.mrb[0].mxu0
    %2661 = vdwg.mxu0
    %vm2662 = vcmp.gt.f32.partialorder %v2659, %v2573
    %v2663 = vsel %vm2662, 1.0, 0.0
    %v2664 = vsub.f32 %v732, %v2663
    %v2665 = vand.u32 2147483647, %v2664
    %v2666 = vsel %vm750, %v2665, 0.0
    %2667 = vadd.xlane.f32.xlu0 %v2666
    %v2668 = vpop.xlane.xlu0 %2667
    %v2669 = vmul.f32 %v2668, 0.5
    %vm2670 = vcmask 6144
    %2671 = vst.msk [vmem:[%s14] sm:$0x7f] %vm2670, %v2669
    // Predicated region
    $region54: #{tpu_custom_call.1} parent=1 // pred_check
      _
    $region55: #{tpu_custom_call.1} parent=1 // pred_check_branch
      %2673 = sbr.rel (0) target = $region57
    $region56: #{tpu_custom_call.1} parent=1 // pred_region
      %s2675 = ssub.s32 16, 16
      %2676 = vsyncadd [#allocation4], %s2675
      %s2678 = sshll.u32 [#allocation3], 4
      %s2679 = int_to_ptr.vmem [resolvable:$true] %s2678
      %2681 = dma.vmem_to_hbm [thread:$0]  %s2679, 16, %s13, [#allocation4]
    $region57: #{tpu_custom_call.1} parent=1 // pred_fallthru
      _
    // Predicated region
    $region58: #{tpu_custom_call.1} parent=1 // pred_check
      _
    $region59: #{tpu_custom_call.1} parent=1 // pred_check_branch
      %2683 = sbr.rel (0) target = $region61
    $region60: #{tpu_custom_call.1} parent=1 // pred_region
      _
    $region61: #{tpu_custom_call.1} parent=1 // pred_fallthru
      _
    // Predicated region
    $region62: #{tpu_custom_call.1} parent=1 // pred_check
      _
    $region63: #{tpu_custom_call.1} parent=1 // pred_check_branch
      %2685 = sbr.rel (0) target = $region65
    $region64: #{tpu_custom_call.1} parent=1 // pred_region
      %2686 = dma.done [#allocation4], 16
    $region65: #{tpu_custom_call.1} parent=1 // pred_fallthru
      _
    // Predicated region
    $region66: #{tpu_custom_call.1} parent=1 // pred_check
      _
    $region67: #{tpu_custom_call.1} parent=1 // pred_check_branch
      %2688 = sbr.rel (0) target = $region69
    $region68: #{tpu_custom_call.1} parent=1 // pred_region
      _
    $region69: #{tpu_custom_call.1} parent=1 // pred_fallthru
      _
    %2689 = vsyncpa [#allocation4], 1

</llo_original>
